<compile_context>
chip_gen: v6e
topology: v6e:2x2x1
jax: 0.10.0
libtpu: 0.0.40
codegen_flags: <defaults>
</compile_context>

<pallas_src>
import jax
import jax.numpy as jnp
from jax import lax
from jax.experimental import pallas as pl
from jax.experimental.pallas import tpu as pltpu

BLOCK_LENGTH = 64  # `block_length` in the PyTorch module (sequence length L)


def _shift_len(h, d):
    """g[:, l, :] = h[:, l + d, :], zero where l + d is outside [0, L).

    This is exactly the 'same'-padding tap at offset d, built from static
    slices plus explicit zero blocks (no roll, no MXU)."""
    if d == 0:
        return h
    tb, length, c = h.shape
    zeros = jnp.zeros((tb, abs(d), c), h.dtype)
    if d > 0:
        return jnp.concatenate([h[:, d:, :], zeros], axis=1)
    return jnp.concatenate([zeros, h[:, : length + d, :]], axis=1)


def _conv_fused(h, w_packed, b, k_taps):
    """'same' conv as a single MXU matmul: im2col(h) @ w_packed + b.

    h: (TB, L, Cin), w_packed: (K*Cin, Cout) tap-major, b: (1, Cout).
    Returns (TB, L, Cout) float32 (accumulation stays f32)."""
    tb, length, cin = h.shape
    cout = w_packed.shape[-1]
    pad = k_taps // 2
    # Lane-axis concat of the K shifted copies; Cin is a multiple of 128 for
    # the layers routed here, so the concat is lane-tile aligned.
    im2col = jnp.concatenate(
        [_shift_len(h, k - pad) for k in range(k_taps)], axis=-1)
    out = jnp.dot(im2col.reshape(tb * length, k_taps * cin), w_packed,
                  preferred_element_type=jnp.float32)
    return (out + b).reshape(tb, length, cout)


def _conv_taps(h, w, b):
    """'same' conv as K per-tap matmuls (used for the tiny Cout=2 last layer so
    all lane-axis concats in the kernel stay 128-aligned).

    h: (TB, L, Cin), w: (K, Cin, Cout), b: (1, Cout). Returns (TB,L,Cout) f32."""
    tb, length, cin = h.shape
    k_taps, _, cout = w.shape
    pad = k_taps // 2
    acc = jnp.zeros((tb * length, cout), jnp.float32) + b
    for k in range(k_taps):
        tap = _shift_len(h, k - pad).reshape(tb * length, cin)
        acc = acc + jnp.dot(tap, w[k], preferred_element_type=jnp.float32)
    return acc.reshape(tb, length, cout)


def encoding_kernel(x_ref,
                    w1_ref, b1_ref, w2_ref, b2_ref,
                    w3_ref, b3_ref, w4_ref, b4_ref,
                    o_ref):
    mxu_dtype = w2_ref.dtype                       # matmul-operand precision
    x = x_ref[...].astype(jnp.float32)             # (TB, L, 1)

    # ---- layer 1: Cin=1, K=5.  Degenerate contraction -> keep it off the MXU:
    #      five broadcast FMAs on the VPU, all in f32 (v5e-safe). ----
    w1 = w1_ref[...]                               # (5, 256) f32
    acc = _shift_len(x, -2) * w1[0:1, :]
    for k in range(1, 5):
        acc = acc + _shift_len(x, k - 2) * w1[k:k + 1, :]
    h = jnp.maximum(acc + b1_ref[...], 0.0).astype(mxu_dtype)   # (TB, L, 256)

    # ---- layers 2 & 3: one fused im2col matmul each (f32 accumulation). ----
    h = jnp.maximum(_conv_fused(h, w2_ref[...], b2_ref[...], 3),
                    0.0).astype(mxu_dtype)                      # (TB, L, 128)
    h = jnp.maximum(_conv_fused(h, w3_ref[...], b3_ref[...], 3),
                    0.0).astype(mxu_dtype)                      # (TB, L, 64)

    # ---- layer 4 (Cout=2): three tiny per-tap matmuls. ----
    y = _conv_taps(h, w4_ref[...], b4_ref[...])                 # (TB, L, 2) f32

    # sqrt(block_length/2) * F.normalize(y, dim=channel):
    #   y / max(||y||, 1e-12)  ==  y * rsqrt(max(||y||^2, 1e-24))   (EUP rsqrt)
    sumsq = jnp.sum(y * y, axis=-1, keepdims=True)
    inv_norm = lax.rsqrt(jnp.maximum(sumsq, jnp.float32(1e-24)))
    scale = (BLOCK_LENGTH / 2.0) ** 0.5
    # TODO(synk): the last-dim-2 output store is lane-sparse; a lane-dense
    # (TB, L*2) out block would shave the store tail but needs a minor-dim
    # reshape inside the kernel.
    o_ref[...] = (scale * inv_norm * y).astype(o_ref.dtype)


def encoding_forward(x, params, *, batch_tile=None, mxu_dtype=jnp.float32):
    """Fused forward pass.

    batch_tile: batch rows packed per grid step (4 fills the v6e/v7x 256-wide
    MXU; use 2 on v5e).  mxu_dtype=jnp.bfloat16 halves matmul-operand traffic
    on v6e/v7x; accumulation stays float32."""
    B, L, _ = x.shape
    w1, b1, w2, b2, w3, b3, w4, b4 = params
    if batch_tile is None:
        batch_tile = next(t for t in (4, 2, 1) if B % t == 0)
    assert B % batch_tile == 0, (B, batch_tile)
    tb = batch_tile

    # Host-side weight packing: (K, Cin, Cout) -> (K*Cin, Cout), tap-major, so
    # each conv is a single matmul against the im2col'd activations.
    w1p = w1[:, 0, :].astype(jnp.float32)                   # (5, 256) VPU layer
    w2p = w2.reshape(-1, w2.shape[-1]).astype(mxu_dtype)    # (768, 128)
    w3p = w3.reshape(-1, w3.shape[-1]).astype(mxu_dtype)    # (384, 64)
    w4p = w4.astype(mxu_dtype)                              # (3, 64, 2) per-tap
    b1f = b1.astype(jnp.float32)
    b2f = b2.astype(jnp.float32)
    b3f = b3.astype(jnp.float32)
    b4f = b4.astype(jnp.float32)

    def full(a):  # whole-array (unblocked) spec, constant index map
        return pl.BlockSpec(a.shape, lambda i, n=a.ndim: (0,) * n)

    return pl.pallas_call(
        encoding_kernel,
        out_shape=jax.ShapeDtypeStruct((B, L, 2), jnp.float32),
        grid=(B // tb,),
        in_specs=[pl.BlockSpec((tb, L, 1), lambda i: (i, 0, 0)),
                  full(w1p), full(b1f), full(w2p), full(b2f),
                  full(w3p), full(b3f), full(w4p), full(b4f)],
        out_specs=pl.BlockSpec((tb, L, 2), lambda i: (i, 0, 0)),
        compiler_params=pltpu.CompilerParams(
            dimension_semantics=("parallel",)),
    )(x, w1p, b1f, w2p, b2f, w3p, b3f, w4p, b4f)


def init_params(key):
    # Deterministic synthetic weights; shapes follow the PyTorch Conv1d layers
    # (stored channels-last as (K, Cin, Cout) = torch weight (Cout, Cin, K).T).
    specs = [(5, 1, 256), (3, 256, 128), (3, 128, 64), (3, 64, 2)]
    params = []
    for K, cin, cout in specs:
        kw, kb, key = jax.random.split(key, 3)
        params.append(0.1 * jax.random.normal(kw, (K, cin, cout), jnp.float32))
        params.append(0.1 * jax.random.normal(kb, (1, cout), jnp.float32))
    return params


def encoding_ref(x, params):
    """Pure-JAX reference (same semantics as the PyTorch forward)."""
    w1, b1, w2, b2, w3, b3, w4, b4 = params

    def conv(h, w, b):
        K = w.shape[0]
        pad = K // 2
        L = h.shape[1]
        hp = jnp.pad(h, ((0, 0), (pad, pad), (0, 0)))
        out = jnp.zeros(h.shape[:2] + (w.shape[2],), jnp.float32) + b
        for k in range(K):
            out = out + jnp.einsum("blc,cd->bld", hp[:, k:k + L, :], w[k])
        return out

    h = jax.nn.relu(conv(x, w1, b1))
    h = jax.nn.relu(conv(h, w2, b2))
    h = jax.nn.relu(conv(h, w3, b3))
    y = conv(h, w4, b4)
    norm = jnp.sqrt(jnp.sum(y * y, axis=-1, keepdims=True))
    return jnp.sqrt(BLOCK_LENGTH / 2.0) * y / jnp.maximum(norm, 1e-12)


if __name__ == "__main__":
    key = jax.random.PRNGKey(0)
    kx, kp = jax.random.split(key)
    B, L = 8, BLOCK_LENGTH          # 2 grid steps of 4 packed batch rows
    x = jax.random.normal(kx, (B, L, 1), jnp.float32)
    params = init_params(kp)

    # f32 MXU operands: faithful to the PyTorch module's float32 math.
    out = jax.block_until_ready(encoding_forward(x, params))
    ref = encoding_ref(x, params)
    assert out.shape == (B, L, 2), out.shape
    max_err = float(jnp.max(jnp.abs(out - ref)))
    assert max_err < 1e-4, f"mismatch vs reference: {max_err}"

    # bf16 MXU operands (f32 accumulation): the v6e/v7x fast path. Verified via
    # the precision-robust invariant ||out||_channel == sqrt(block_length / 2).
    out_bf16 = jax.block_until_ready(
        encoding_forward(x, params, mxu_dtype=jnp.bfloat16))
    assert out_bf16.shape == (B, L, 2), out_bf16.shape
    norms = jnp.sqrt(jnp.sum(out_bf16 * out_bf16, axis=-1))
    norm_err = float(jnp.max(jnp.abs(norms - (BLOCK_LENGTH / 2.0) ** 0.5)))
    assert norm_err < 1e-2, f"bf16 path norm mismatch: {norm_err}"

    print("KERNEL_OK")
</pallas_src>

<mosaic_0001>
module attributes {stable_mosaic.version = 11 : i64} {
  func.func @encoding_kernel(%arg0: i32, %arg1: memref<4x64x1xf32, #tpu.memory_space<vmem>>, %arg2: memref<5x256xf32, #tpu.memory_space<vmem>>, %arg3: memref<1x256xf32, #tpu.memory_space<vmem>>, %arg4: memref<768x128xf32, #tpu.memory_space<vmem>>, %arg5: memref<1x128xf32, #tpu.memory_space<vmem>>, %arg6: memref<384x64xf32, #tpu.memory_space<vmem>>, %arg7: memref<1x64xf32, #tpu.memory_space<vmem>>, %arg8: memref<3x64x2xf32, #tpu.memory_space<vmem>>, %arg9: memref<1x2xf32, #tpu.memory_space<vmem>>, %arg10: memref<4x64x2xf32, #tpu.memory_space<vmem>>) attributes {dimension_semantics = [#tpu.dimension_semantics<parallel>], iteration_bounds = array<i64: 2>, scalar_prefetch = 0 : i64, scratch_operands = 0 : i64, tpu.core_type = #tpu.core_type<tc>, window_params = [{transform_indices = @transform_0, window_bounds = array<i64: 4, 64, 1>}, {pipeline_mode = #tpu.pipeline_mode<synchronous>, transform_indices = @transform_1, window_bounds = array<i64: 5, 256>}, {pipeline_mode = #tpu.pipeline_mode<synchronous>, transform_indices = @transform_2, window_bounds = array<i64: 1, 256>}, {pipeline_mode = #tpu.pipeline_mode<synchronous>, transform_indices = @transform_3, window_bounds = array<i64: 768, 128>}, {pipeline_mode = #tpu.pipeline_mode<synchronous>, transform_indices = @transform_4, window_bounds = array<i64: 1, 128>}, {pipeline_mode = #tpu.pipeline_mode<synchronous>, transform_indices = @transform_5, window_bounds = array<i64: 384, 64>}, {pipeline_mode = #tpu.pipeline_mode<synchronous>, transform_indices = @transform_6, window_bounds = array<i64: 1, 64>}, {pipeline_mode = #tpu.pipeline_mode<synchronous>, transform_indices = @transform_7, window_bounds = array<i64: 3, 64, 2>}, {pipeline_mode = #tpu.pipeline_mode<synchronous>, transform_indices = @transform_8, window_bounds = array<i64: 1, 2>}, {transform_indices = @transform_9, window_bounds = array<i64: 4, 64, 2>}]} {
    %c0 = arith.constant 0 : index
    %c0_0 = arith.constant 0 : index
    %c0_1 = arith.constant 0 : index
    %0 = vector.load %arg1[%c0, %c0_0, %c0_1] : memref<4x64x1xf32, #tpu.memory_space<vmem>>, vector<4x64x1xf32>
    %c0_2 = arith.constant 0 : index
    %c0_3 = arith.constant 0 : index
    %1 = vector.load %arg2[%c0_2, %c0_3] : memref<5x256xf32, #tpu.memory_space<vmem>>, vector<5x256xf32>
    %cst = arith.constant 0.000000e+00 : f32
    %2 = vector.broadcast %cst : f32 to vector<4x2x1xf32>
    %3 = vector.extract_strided_slice %0 {offsets = [0, 0, 0], sizes = [4, 62, 1], strides = [1, 1, 1]} : vector<4x64x1xf32> to vector<4x62x1xf32>
    %4 = tpu.concatenate %2, %3 in 1 : vector<4x2x1xf32>, vector<4x62x1xf32> -> vector<4x64x1xf32>
    %5 = vector.extract_strided_slice %1 {offsets = [0, 0], sizes = [1, 256], strides = [1, 1]} : vector<5x256xf32> to vector<1x256xf32>
    %6 = vector.shape_cast %5 : vector<1x256xf32> to vector<1x1x256xf32>
    %7 = vector.broadcast %4 : vector<4x64x1xf32> to vector<4x64x256xf32>
    %8 = vector.broadcast %6 : vector<1x1x256xf32> to vector<4x64x256xf32>
    %9 = arith.mulf %7, %8 : vector<4x64x256xf32>
    %cst_4 = arith.constant 0.000000e+00 : f32
    %10 = vector.broadcast %cst_4 : f32 to vector<4x1x1xf32>
    %11 = vector.extract_strided_slice %0 {offsets = [0, 0, 0], sizes = [4, 63, 1], strides = [1, 1, 1]} : vector<4x64x1xf32> to vector<4x63x1xf32>
    %12 = tpu.concatenate %10, %11 in 1 : vector<4x1x1xf32>, vector<4x63x1xf32> -> vector<4x64x1xf32>
    %13 = vector.extract_strided_slice %1 {offsets = [1, 0], sizes = [1, 256], strides = [1, 1]} : vector<5x256xf32> to vector<1x256xf32>
    %14 = vector.shape_cast %13 : vector<1x256xf32> to vector<1x1x256xf32>
    %15 = vector.broadcast %12 : vector<4x64x1xf32> to vector<4x64x256xf32>
    %16 = vector.broadcast %14 : vector<1x1x256xf32> to vector<4x64x256xf32>
    %17 = arith.mulf %15, %16 : vector<4x64x256xf32>
    %18 = arith.addf %9, %17 : vector<4x64x256xf32>
    %19 = vector.extract_strided_slice %1 {offsets = [2, 0], sizes = [1, 256], strides = [1, 1]} : vector<5x256xf32> to vector<1x256xf32>
    %20 = vector.shape_cast %19 : vector<1x256xf32> to vector<1x1x256xf32>
    %21 = vector.broadcast %0 : vector<4x64x1xf32> to vector<4x64x256xf32>
    %22 = vector.broadcast %20 : vector<1x1x256xf32> to vector<4x64x256xf32>
    %23 = arith.mulf %21, %22 : vector<4x64x256xf32>
    %24 = arith.addf %18, %23 : vector<4x64x256xf32>
    %cst_5 = arith.constant 0.000000e+00 : f32
    %25 = vector.broadcast %cst_5 : f32 to vector<4x1x1xf32>
    %26 = vector.extract_strided_slice %0 {offsets = [0, 1, 0], sizes = [4, 63, 1], strides = [1, 1, 1]} : vector<4x64x1xf32> to vector<4x63x1xf32>
    %27 = tpu.concatenate %26, %25 in 1 : vector<4x63x1xf32>, vector<4x1x1xf32> -> vector<4x64x1xf32>
    %28 = vector.extract_strided_slice %1 {offsets = [3, 0], sizes = [1, 256], strides = [1, 1]} : vector<5x256xf32> to vector<1x256xf32>
    %29 = vector.shape_cast %28 : vector<1x256xf32> to vector<1x1x256xf32>
    %30 = vector.broadcast %27 : vector<4x64x1xf32> to vector<4x64x256xf32>
    %31 = vector.broadcast %29 : vector<1x1x256xf32> to vector<4x64x256xf32>
    %32 = arith.mulf %30, %31 : vector<4x64x256xf32>
    %33 = arith.addf %24, %32 : vector<4x64x256xf32>
    %cst_6 = arith.constant 0.000000e+00 : f32
    %34 = vector.broadcast %cst_6 : f32 to vector<4x2x1xf32>
    %35 = vector.extract_strided_slice %0 {offsets = [0, 2, 0], sizes = [4, 62, 1], strides = [1, 1, 1]} : vector<4x64x1xf32> to vector<4x62x1xf32>
    %36 = tpu.concatenate %35, %34 in 1 : vector<4x62x1xf32>, vector<4x2x1xf32> -> vector<4x64x1xf32>
    %37 = vector.extract_strided_slice %1 {offsets = [4, 0], sizes = [1, 256], strides = [1, 1]} : vector<5x256xf32> to vector<1x256xf32>
    %38 = vector.shape_cast %37 : vector<1x256xf32> to vector<1x1x256xf32>
    %39 = vector.broadcast %36 : vector<4x64x1xf32> to vector<4x64x256xf32>
    %40 = vector.broadcast %38 : vector<1x1x256xf32> to vector<4x64x256xf32>
    %41 = arith.mulf %39, %40 : vector<4x64x256xf32>
    %42 = arith.addf %33, %41 : vector<4x64x256xf32>
    %c0_7 = arith.constant 0 : index
    %c0_8 = arith.constant 0 : index
    %43 = vector.load %arg3[%c0_7, %c0_8] : memref<1x256xf32, #tpu.memory_space<vmem>>, vector<1x256xf32>
    %44 = vector.shape_cast %43 : vector<1x256xf32> to vector<1x1x256xf32>
    %45 = vector.broadcast %44 : vector<1x1x256xf32> to vector<4x64x256xf32>
    %46 = arith.addf %42, %45 : vector<4x64x256xf32>
    %cst_9 = arith.constant 0.000000e+00 : f32
    %47 = vector.broadcast %cst_9 : f32 to vector<4x64x256xf32>
    %48 = arith.maximumf %46, %47 : vector<4x64x256xf32>
    %c0_10 = arith.constant 0 : index
    %c0_11 = arith.constant 0 : index
    %49 = vector.load %arg4[%c0_10, %c0_11] : memref<768x128xf32, #tpu.memory_space<vmem>>, vector<768x128xf32>
    %c0_12 = arith.constant 0 : index
    %c0_13 = arith.constant 0 : index
    %50 = vector.load %arg5[%c0_12, %c0_13] : memref<1x128xf32, #tpu.memory_space<vmem>>, vector<1x128xf32>
    %cst_14 = arith.constant 0.000000e+00 : f32
    %51 = vector.broadcast %cst_14 : f32 to vector<4x1x256xf32>
    %52 = vector.extract_strided_slice %48 {offsets = [0, 0, 0], sizes = [4, 63, 256], strides = [1, 1, 1]} : vector<4x64x256xf32> to vector<4x63x256xf32>
    %53 = tpu.concatenate %51, %52 in 1 : vector<4x1x256xf32>, vector<4x63x256xf32> -> vector<4x64x256xf32>
    %cst_15 = arith.constant 0.000000e+00 : f32
    %54 = vector.broadcast %cst_15 : f32 to vector<4x1x256xf32>
    %55 = vector.extract_strided_slice %48 {offsets = [0, 1, 0], sizes = [4, 63, 256], strides = [1, 1, 1]} : vector<4x64x256xf32> to vector<4x63x256xf32>
    %56 = tpu.concatenate %55, %54 in 1 : vector<4x63x256xf32>, vector<4x1x256xf32> -> vector<4x64x256xf32>
    %57 = tpu.concatenate %53, %48, %56 in 2 : vector<4x64x256xf32>, vector<4x64x256xf32>, vector<4x64x256xf32> -> vector<4x64x768xf32>
    %58 = vector.shape_cast %57 : vector<4x64x768xf32> to vector<256x768xf32>
    %cst_16 = arith.constant dense<0.000000e+00> : vector<256x128xf32>
    %59 = tpu.matmul %58, %49, %cst_16 {dimension_numbers = #tpu.dot_dimension_numbers<[1], [0], [0], [1], [0, 0, 1, 1], [], []>} : vector<256x768xf32>, vector<768x128xf32>, vector<256x128xf32> -> vector<256x128xf32>
    %60 = vector.broadcast %50 : vector<1x128xf32> to vector<256x128xf32>
    %61 = arith.addf %59, %60 : vector<256x128xf32>
    %62 = vector.shape_cast %61 : vector<256x128xf32> to vector<4x64x128xf32>
    %cst_17 = arith.constant 0.000000e+00 : f32
    %63 = vector.broadcast %cst_17 : f32 to vector<4x64x128xf32>
    %64 = arith.maximumf %62, %63 : vector<4x64x128xf32>
    %c0_18 = arith.constant 0 : index
    %c0_19 = arith.constant 0 : index
    %65 = vector.load %arg6[%c0_18, %c0_19] : memref<384x64xf32, #tpu.memory_space<vmem>>, vector<384x64xf32>
    %c0_20 = arith.constant 0 : index
    %c0_21 = arith.constant 0 : index
    %66 = vector.load %arg7[%c0_20, %c0_21] : memref<1x64xf32, #tpu.memory_space<vmem>>, vector<1x64xf32>
    %cst_22 = arith.constant 0.000000e+00 : f32
    %67 = vector.broadcast %cst_22 : f32 to vector<4x1x128xf32>
    %68 = vector.extract_strided_slice %64 {offsets = [0, 0, 0], sizes = [4, 63, 128], strides = [1, 1, 1]} : vector<4x64x128xf32> to vector<4x63x128xf32>
    %69 = tpu.concatenate %67, %68 in 1 : vector<4x1x128xf32>, vector<4x63x128xf32> -> vector<4x64x128xf32>
    %cst_23 = arith.constant 0.000000e+00 : f32
    %70 = vector.broadcast %cst_23 : f32 to vector<4x1x128xf32>
    %71 = vector.extract_strided_slice %64 {offsets = [0, 1, 0], sizes = [4, 63, 128], strides = [1, 1, 1]} : vector<4x64x128xf32> to vector<4x63x128xf32>
    %72 = tpu.concatenate %71, %70 in 1 : vector<4x63x128xf32>, vector<4x1x128xf32> -> vector<4x64x128xf32>
    %73 = tpu.concatenate %69, %64, %72 in 2 : vector<4x64x128xf32>, vector<4x64x128xf32>, vector<4x64x128xf32> -> vector<4x64x384xf32>
    %74 = vector.shape_cast %73 : vector<4x64x384xf32> to vector<256x384xf32>
    %cst_24 = arith.constant dense<0.000000e+00> : vector<256x64xf32>
    %75 = tpu.matmul %74, %65, %cst_24 {dimension_numbers = #tpu.dot_dimension_numbers<[1], [0], [0], [1], [0, 0, 1, 1], [], []>} : vector<256x384xf32>, vector<384x64xf32>, vector<256x64xf32> -> vector<256x64xf32>
    %76 = vector.broadcast %66 : vector<1x64xf32> to vector<256x64xf32>
    %77 = arith.addf %75, %76 : vector<256x64xf32>
    %78 = vector.shape_cast %77 : vector<256x64xf32> to vector<4x64x64xf32>
    %cst_25 = arith.constant 0.000000e+00 : f32
    %79 = vector.broadcast %cst_25 : f32 to vector<4x64x64xf32>
    %80 = arith.maximumf %78, %79 : vector<4x64x64xf32>
    %c0_26 = arith.constant 0 : index
    %c0_27 = arith.constant 0 : index
    %c0_28 = arith.constant 0 : index
    %81 = vector.load %arg8[%c0_26, %c0_27, %c0_28] : memref<3x64x2xf32, #tpu.memory_space<vmem>>, vector<3x64x2xf32>
    %c0_29 = arith.constant 0 : index
    %c0_30 = arith.constant 0 : index
    %82 = vector.load %arg9[%c0_29, %c0_30] : memref<1x2xf32, #tpu.memory_space<vmem>>, vector<1x2xf32>
    %cst_31 = arith.constant 0.000000e+00 : f32
    %83 = vector.broadcast %cst_31 : f32 to vector<256x2xf32>
    %84 = vector.broadcast %82 : vector<1x2xf32> to vector<256x2xf32>
    %85 = arith.addf %83, %84 : vector<256x2xf32>
    %cst_32 = arith.constant 0.000000e+00 : f32
    %86 = vector.broadcast %cst_32 : f32 to vector<4x1x64xf32>
    %87 = vector.extract_strided_slice %80 {offsets = [0, 0, 0], sizes = [4, 63, 64], strides = [1, 1, 1]} : vector<4x64x64xf32> to vector<4x63x64xf32>
    %88 = tpu.concatenate %86, %87 in 1 : vector<4x1x64xf32>, vector<4x63x64xf32> -> vector<4x64x64xf32>
    %89 = vector.shape_cast %88 : vector<4x64x64xf32> to vector<256x64xf32>
    %90 = vector.extract_strided_slice %81 {offsets = [0, 0, 0], sizes = [1, 64, 2], strides = [1, 1, 1]} : vector<3x64x2xf32> to vector<1x64x2xf32>
    %91 = vector.shape_cast %90 : vector<1x64x2xf32> to vector<64x2xf32>
    %cst_33 = arith.constant dense<0.000000e+00> : vector<256x2xf32>
    %92 = tpu.matmul %89, %91, %cst_33 {dimension_numbers = #tpu.dot_dimension_numbers<[1], [0], [0], [1], [0, 0, 1, 1], [], []>} : vector<256x64xf32>, vector<64x2xf32>, vector<256x2xf32> -> vector<256x2xf32>
    %93 = arith.addf %85, %92 : vector<256x2xf32>
    %94 = vector.shape_cast %80 : vector<4x64x64xf32> to vector<256x64xf32>
    %95 = vector.extract_strided_slice %81 {offsets = [1, 0, 0], sizes = [1, 64, 2], strides = [1, 1, 1]} : vector<3x64x2xf32> to vector<1x64x2xf32>
    %96 = vector.shape_cast %95 : vector<1x64x2xf32> to vector<64x2xf32>
    %cst_34 = arith.constant dense<0.000000e+00> : vector<256x2xf32>
    %97 = tpu.matmul %94, %96, %cst_34 {dimension_numbers = #tpu.dot_dimension_numbers<[1], [0], [0], [1], [0, 0, 1, 1], [], []>} : vector<256x64xf32>, vector<64x2xf32>, vector<256x2xf32> -> vector<256x2xf32>
    %98 = arith.addf %93, %97 : vector<256x2xf32>
    %cst_35 = arith.constant 0.000000e+00 : f32
    %99 = vector.broadcast %cst_35 : f32 to vector<4x1x64xf32>
    %100 = vector.extract_strided_slice %80 {offsets = [0, 1, 0], sizes = [4, 63, 64], strides = [1, 1, 1]} : vector<4x64x64xf32> to vector<4x63x64xf32>
    %101 = tpu.concatenate %100, %99 in 1 : vector<4x63x64xf32>, vector<4x1x64xf32> -> vector<4x64x64xf32>
    %102 = vector.shape_cast %101 : vector<4x64x64xf32> to vector<256x64xf32>
    %103 = vector.extract_strided_slice %81 {offsets = [2, 0, 0], sizes = [1, 64, 2], strides = [1, 1, 1]} : vector<3x64x2xf32> to vector<1x64x2xf32>
    %104 = vector.shape_cast %103 : vector<1x64x2xf32> to vector<64x2xf32>
    %cst_36 = arith.constant dense<0.000000e+00> : vector<256x2xf32>
    %105 = tpu.matmul %102, %104, %cst_36 {dimension_numbers = #tpu.dot_dimension_numbers<[1], [0], [0], [1], [0, 0, 1, 1], [], []>} : vector<256x64xf32>, vector<64x2xf32>, vector<256x2xf32> -> vector<256x2xf32>
    %106 = arith.addf %98, %105 : vector<256x2xf32>
    %107 = vector.shape_cast %106 : vector<256x2xf32> to vector<4x64x2xf32>
    %108 = arith.mulf %107, %107 : vector<4x64x2xf32>
    %cst_37 = arith.constant dense<0.000000e+00> : vector<4x64xf32>
    %109 = vector.multi_reduction <add>, %108, %cst_37 [2] : vector<4x64x2xf32> to vector<4x64xf32>
    %110 = vector.shape_cast %109 : vector<4x64xf32> to vector<4x64x1xf32>
    %cst_38 = arith.constant 1.000000e-24 : f32
    %111 = vector.broadcast %cst_38 : f32 to vector<4x64x1xf32>
    %112 = arith.maximumf %110, %111 : vector<4x64x1xf32>
    %113 = math.rsqrt %112 : vector<4x64x1xf32>
    %cst_39 = arith.constant 5.65685415 : f32
    %114 = vector.broadcast %cst_39 : f32 to vector<4x64x1xf32>
    %115 = arith.mulf %114, %113 : vector<4x64x1xf32>
    %116 = vector.broadcast %115 : vector<4x64x1xf32> to vector<4x64x2xf32>
    %117 = arith.mulf %116, %107 : vector<4x64x2xf32>
    %c0_40 = arith.constant 0 : index
    %c0_41 = arith.constant 0 : index
    %c0_42 = arith.constant 0 : index
    %118 = vector.load %arg10[%c0_40, %c0_41, %c0_42] : memref<4x64x2xf32, #tpu.memory_space<vmem>>, vector<4x64x2xf32>
    tpu.vector_store %arg10[%c0_40, %c0_41, %c0_42], %117 {strides = array<i32>} : memref<4x64x2xf32, #tpu.memory_space<vmem>>, vector<4x64x2xf32>,
    return
  }
  func.func @transform_0(%arg0: i32) -> (i32, i32, i32) {
    %c0_i32 = arith.constant 0 : i32
    %c0_i32_0 = arith.constant 0 : i32
    %c0_i32_1 = arith.constant 0 : i32
    return %arg0, %c0_i32, %c0_i32_0 : i32, i32, i32
  }
  func.func @transform_1(%arg0: i32) -> (i32, i32) {
    %c0_i32 = arith.constant 0 : i32
    %c0_i32_0 = arith.constant 0 : i32
    %c0_i32_1 = arith.constant 0 : i32
    return %c0_i32, %c0_i32_0 : i32, i32
  }
  func.func @transform_2(%arg0: i32) -> (i32, i32) {
    %c0_i32 = arith.constant 0 : i32
    %c0_i32_0 = arith.constant 0 : i32
    %c0_i32_1 = arith.constant 0 : i32
    return %c0_i32, %c0_i32_0 : i32, i32
  }
  func.func @transform_3(%arg0: i32) -> (i32, i32) {
    %c0_i32 = arith.constant 0 : i32
    %c0_i32_0 = arith.constant 0 : i32
    %c0_i32_1 = arith.constant 0 : i32
    return %c0_i32, %c0_i32_0 : i32, i32
  }
  func.func @transform_4(%arg0: i32) -> (i32, i32) {
    %c0_i32 = arith.constant 0 : i32
    %c0_i32_0 = arith.constant 0 : i32
    %c0_i32_1 = arith.constant 0 : i32
    return %c0_i32, %c0_i32_0 : i32, i32
  }
  func.func @transform_5(%arg0: i32) -> (i32, i32) {
    %c0_i32 = arith.constant 0 : i32
    %c0_i32_0 = arith.constant 0 : i32
    %c0_i32_1 = arith.constant 0 : i32
    return %c0_i32, %c0_i32_0 : i32, i32
  }
  func.func @transform_6(%arg0: i32) -> (i32, i32) {
    %c0_i32 = arith.constant 0 : i32
    %c0_i32_0 = arith.constant 0 : i32
    %c0_i32_1 = arith.constant 0 : i32
    return %c0_i32, %c0_i32_0 : i32, i32
  }
  func.func @transform_7(%arg0: i32) -> (i32, i32, i32) {
    %c0_i32 = arith.constant 0 : i32
    %c0_i32_0 = arith.constant 0 : i32
    %c0_i32_1 = arith.constant 0 : i32
    %c0_i32_2 = arith.constant 0 : i32
    return %c0_i32, %c0_i32_0, %c0_i32_1 : i32, i32, i32
  }
  func.func @transform_8(%arg0: i32) -> (i32, i32) {
    %c0_i32 = arith.constant 0 : i32
    %c0_i32_0 = arith.constant 0 : i32
    %c0_i32_1 = arith.constant 0 : i32
    return %c0_i32, %c0_i32_0 : i32, i32
  }
  func.func @transform_9(%arg0: i32) -> (i32, i32, i32) {
    %c0_i32 = arith.constant 0 : i32
    %c0_i32_0 = arith.constant 0 : i32
    %c0_i32_1 = arith.constant 0 : i32
    return %arg0, %c0_i32, %c0_i32_0 : i32, i32, i32
  }
}

</mosaic_0001>

<llo_original>
// kernel: tpu_custom_call.1
$region0: #{tpu_custom_call.1}
  #allocation0 [shape = 'u32[]', space=smem, size = 0x4, offset = 0x4, fixed_abs, tag = 'smem constant byte address 0x4 - core index']
  #allocation1 [shape = 'u32[144,128]{1,0:T(1,128)}', space=vmem, size = 0x12000, scoped, tag = 'internal scratch']
  %s0 = inlined_call_operand.vmem [shape: f32[8,64,1], index: 0, kind: input, shape index: {}]
  %s1 = inlined_call_operand.vmem [shape: f32[5,256], index: 1, kind: input, shape index: {}]
  %s2 = inlined_call_operand.vmem [shape: f32[1,256], index: 2, kind: input, shape index: {}]
  %s3 = inlined_call_operand.vmem [shape: f32[768,128], index: 3, kind: input, shape index: {}]
  %s4 = inlined_call_operand.vmem [shape: f32[1,128], index: 4, kind: input, shape index: {}]
  %s5 = inlined_call_operand.vmem [shape: f32[384,64], index: 5, kind: input, shape index: {}]
  %s6 = inlined_call_operand.vmem [shape: f32[1,64], index: 6, kind: input, shape index: {}]
  %s7 = inlined_call_operand.vmem [shape: f32[3,64,2], index: 7, kind: input, shape index: {}]
  %s8 = inlined_call_operand.vmem [shape: f32[1,2], index: 8, kind: input, shape index: {}]
  %s9 = inlined_call_operand.vmem [shape: f32[8,64,2], index: 9, kind: output, shape index: {}]
  %s10 = sld [smem:[#allocation0]]
  $region69: #{tpu_custom_call.1} parent=0
    _
  %s12 = ssub.s32 1, %s10
  %s13 = scalar_select 0, %s12, %s10
  loop: start=0, step=1, limit=4
  $region2: #{tpu_custom_call.1} parent=0 // loop_pre_header
    _
  $region3: #{tpu_custom_call.1} parent=0 // loop_header
    %s15 = sphi 0, %s19
    %p16 = scmp.ge.s32.totalorder %s15, 4
    %s25 = sphi 0, %s27
    %s28 = sphi 0, %s25
    %s29 = sphi 0, %s28
    %s45 = sphi 0, %s29
    %s49 = sphi 0, %s49
    %s51 = sphi 0, %s49
    %s52 = sphi 0, %s51
    %s66 = sphi 0, %s52
    %s70 = sphi 0, %s70
    %s72 = sphi 0, %s70
    %s73 = sphi 0, %s72
    %s87 = sphi 0, %s73
    %s91 = sphi 0, %s91
    %s93 = sphi 0, %s91
    %s94 = sphi 0, %s93
    %s108 = sphi 0, %s94
    %s112 = sphi 0, %s112
    %s114 = sphi 0, %s112
    %s115 = sphi 0, %s114
    %s129 = sphi 0, %s115
    %s133 = sphi 0, %s133
    %s135 = sphi 0, %s133
    %s136 = sphi 0, %s135
    %s150 = sphi 0, %s136
    %s154 = sphi 0, %s154
    %s156 = sphi 0, %s154
    %s157 = sphi 0, %s156
    %s171 = sphi 0, %s157
    %s175 = sphi 0, %s175
    %s177 = sphi 0, %s175
    %s178 = sphi 0, %s177
    %s192 = sphi 0, %s178
    %s196 = sphi 0, %s196
    %s198 = sphi 0, %s196
    %s199 = sphi 0, %s198
    %s213 = sphi 0, %s199
    %s219 = sphi 0, %s221
    %s222 = sphi 0, %s219
    %s223 = sphi 0, %s222
    %s239 = sphi 0, %s223
  $region4: #{tpu_custom_call.1} parent=0 // loop_header_branch
    %18 = sbr.rel (%p16) target = $region8
  $region5: #{tpu_custom_call.1} parent=0 // loop_body
    %s20 = ssub.s32 %s15, 1
    %s21 = ssub.s32 %s15, 2
    %s22 = sadd.s32 %s15, 1
    %s23 = ssub.s32 %s15, %s22
    %p24 = scmp.eq.s32.totalorder %s23, 0
    %s26 = sadd.s32 %s25, 1
    %s27 = scalar_select %p24, %s25, %s26
    %p30 = pneg %p24
    %p31 = scmp.eq.s32.totalorder %s15, 1
    %p32 = por %p30, %p31
    %p33 = scmp.ne.s32.totalorder %s25, %s28
    %p34 = scmp.eq.s32.totalorder %s15, 0
    %p35 = por %p33, %p34
    %p36 = scmp.ne.s32.totalorder %s25, %s28
    %p37 = scmp.eq.s32.totalorder %s20, 1
    %p38 = por %p36, %p37
    %p39 = scmp.ne.s32.totalorder %s28, %s29
    %p40 = scmp.eq.s32.totalorder %s20, 0
    %p41 = por %p39, %p40
    %p42 = scmp.ne.s32.totalorder %s28, %s29
    %p43 = scmp.eq.s32.totalorder %s21, 1
    %p44 = por %p42, %p43
    %p46 = scmp.ne.s32.totalorder %s29, %s45
    %p47 = scmp.eq.s32.totalorder %s21, 0
    %p48 = por %p46, %p47
    %s50 = sadd.s32 %s49, 1
    %p53 = scmp.eq.s32.totalorder %s15, 1
    %p54 = scmp.ne.s32.totalorder %s49, %s51
    %p55 = scmp.eq.s32.totalorder %s15, 0
    %p56 = por %p54, %p55
    %p57 = scmp.ne.s32.totalorder %s49, %s51
    %p58 = scmp.eq.s32.totalorder %s20, 1
    %p59 = por %p57, %p58
    %p60 = scmp.ne.s32.totalorder %s51, %s52
    %p61 = scmp.eq.s32.totalorder %s20, 0
    %p62 = por %p60, %p61
    %p63 = scmp.ne.s32.totalorder %s51, %s52
    %p64 = scmp.eq.s32.totalorder %s21, 1
    %p65 = por %p63, %p64
    %p67 = scmp.ne.s32.totalorder %s52, %s66
    %p68 = scmp.eq.s32.totalorder %s21, 0
    %p69 = por %p67, %p68
    %s71 = sadd.s32 %s70, 1
    %p74 = scmp.eq.s32.totalorder %s15, 1
    %p75 = scmp.ne.s32.totalorder %s70, %s72
    %p76 = scmp.eq.s32.totalorder %s15, 0
    %p77 = por %p75, %p76
    %p78 = scmp.ne.s32.totalorder %s70, %s72
    %p79 = scmp.eq.s32.totalorder %s20, 1
    %p80 = por %p78, %p79
    %p81 = scmp.ne.s32.totalorder %s72, %s73
    %p82 = scmp.eq.s32.totalorder %s20, 0
    %p83 = por %p81, %p82
    %p84 = scmp.ne.s32.totalorder %s72, %s73
    %p85 = scmp.eq.s32.totalorder %s21, 1
    %p86 = por %p84, %p85
    %p88 = scmp.ne.s32.totalorder %s73, %s87
    %p89 = scmp.eq.s32.totalorder %s21, 0
    %p90 = por %p88, %p89
    %s92 = sadd.s32 %s91, 1
    %p95 = scmp.eq.s32.totalorder %s15, 1
    %p96 = scmp.ne.s32.totalorder %s91, %s93
    %p97 = scmp.eq.s32.totalorder %s15, 0
    %p98 = por %p96, %p97
    %p99 = scmp.ne.s32.totalorder %s91, %s93
    %p100 = scmp.eq.s32.totalorder %s20, 1
    %p101 = por %p99, %p100
    %p102 = scmp.ne.s32.totalorder %s93, %s94
    %p103 = scmp.eq.s32.totalorder %s20, 0
    %p104 = por %p102, %p103
    %p105 = scmp.ne.s32.totalorder %s93, %s94
    %p106 = scmp.eq.s32.totalorder %s21, 1
    %p107 = por %p105, %p106
    %p109 = scmp.ne.s32.totalorder %s94, %s108
    %p110 = scmp.eq.s32.totalorder %s21, 0
    %p111 = por %p109, %p110
    %s113 = sadd.s32 %s112, 1
    %p116 = scmp.eq.s32.totalorder %s15, 1
    %p117 = scmp.ne.s32.totalorder %s112, %s114
    %p118 = scmp.eq.s32.totalorder %s15, 0
    %p119 = por %p117, %p118
    %p120 = scmp.ne.s32.totalorder %s112, %s114
    %p121 = scmp.eq.s32.totalorder %s20, 1
    %p122 = por %p120, %p121
    %p123 = scmp.ne.s32.totalorder %s114, %s115
    %p124 = scmp.eq.s32.totalorder %s20, 0
    %p125 = por %p123, %p124
    %p126 = scmp.ne.s32.totalorder %s114, %s115
    %p127 = scmp.eq.s32.totalorder %s21, 1
    %p128 = por %p126, %p127
    %p130 = scmp.ne.s32.totalorder %s115, %s129
    %p131 = scmp.eq.s32.totalorder %s21, 0
    %p132 = por %p130, %p131
    %s134 = sadd.s32 %s133, 1
    %p137 = scmp.eq.s32.totalorder %s15, 1
    %p138 = scmp.ne.s32.totalorder %s133, %s135
    %p139 = scmp.eq.s32.totalorder %s15, 0
    %p140 = por %p138, %p139
    %p141 = scmp.ne.s32.totalorder %s133, %s135
    %p142 = scmp.eq.s32.totalorder %s20, 1
    %p143 = por %p141, %p142
    %p144 = scmp.ne.s32.totalorder %s135, %s136
    %p145 = scmp.eq.s32.totalorder %s20, 0
    %p146 = por %p144, %p145
    %p147 = scmp.ne.s32.totalorder %s135, %s136
    %p148 = scmp.eq.s32.totalorder %s21, 1
    %p149 = por %p147, %p148
    %p151 = scmp.ne.s32.totalorder %s136, %s150
    %p152 = scmp.eq.s32.totalorder %s21, 0
    %p153 = por %p151, %p152
    %s155 = sadd.s32 %s154, 1
    %p158 = scmp.eq.s32.totalorder %s15, 1
    %p159 = scmp.ne.s32.totalorder %s154, %s156
    %p160 = scmp.eq.s32.totalorder %s15, 0
    %p161 = por %p159, %p160
    %p162 = scmp.ne.s32.totalorder %s154, %s156
    %p163 = scmp.eq.s32.totalorder %s20, 1
    %p164 = por %p162, %p163
    %p165 = scmp.ne.s32.totalorder %s156, %s157
    %p166 = scmp.eq.s32.totalorder %s20, 0
    %p167 = por %p165, %p166
    %p168 = scmp.ne.s32.totalorder %s156, %s157
    %p169 = scmp.eq.s32.totalorder %s21, 1
    %p170 = por %p168, %p169
    %p172 = scmp.ne.s32.totalorder %s157, %s171
    %p173 = scmp.eq.s32.totalorder %s21, 0
    %p174 = por %p172, %p173
    %s176 = sadd.s32 %s175, 1
    %p179 = scmp.eq.s32.totalorder %s15, 1
    %p180 = scmp.ne.s32.totalorder %s175, %s177
    %p181 = scmp.eq.s32.totalorder %s15, 0
    %p182 = por %p180, %p181
    %p183 = scmp.ne.s32.totalorder %s175, %s177
    %p184 = scmp.eq.s32.totalorder %s20, 1
    %p185 = por %p183, %p184
    %p186 = scmp.ne.s32.totalorder %s177, %s178
    %p187 = scmp.eq.s32.totalorder %s20, 0
    %p188 = por %p186, %p187
    %p189 = scmp.ne.s32.totalorder %s177, %s178
    %p190 = scmp.eq.s32.totalorder %s21, 1
    %p191 = por %p189, %p190
    %p193 = scmp.ne.s32.totalorder %s178, %s192
    %p194 = scmp.eq.s32.totalorder %s21, 0
    %p195 = por %p193, %p194
    %s197 = sadd.s32 %s196, 1
    %p200 = scmp.eq.s32.totalorder %s15, 1
    %p201 = scmp.ne.s32.totalorder %s196, %s198
    %p202 = scmp.eq.s32.totalorder %s15, 0
    %p203 = por %p201, %p202
    %p204 = scmp.ne.s32.totalorder %s196, %s198
    %p205 = scmp.eq.s32.totalorder %s20, 1
    %p206 = por %p204, %p205
    %p207 = scmp.ne.s32.totalorder %s198, %s199
    %p208 = scmp.eq.s32.totalorder %s20, 0
    %p209 = por %p207, %p208
    %p210 = scmp.ne.s32.totalorder %s198, %s199
    %p211 = scmp.eq.s32.totalorder %s21, 1
    %p212 = por %p210, %p211
    %p214 = scmp.ne.s32.totalorder %s199, %s213
    %p215 = scmp.eq.s32.totalorder %s21, 0
    %p216 = por %p214, %p215
    %s217 = ssub.s32 %s15, %s22
    %p218 = scmp.eq.s32.totalorder %s217, 0
    %s220 = sadd.s32 %s219, 1
    %s221 = scalar_select %p218, %s219, %s220
    %p224 = pneg %p218
    %p225 = scmp.eq.s32.totalorder %s15, 1
    %p226 = por %p224, %p225
    %p227 = scmp.ne.s32.totalorder %s219, %s222
    %p228 = scmp.eq.s32.totalorder %s15, 0
    %p229 = por %p227, %p228
    %p230 = scmp.ne.s32.totalorder %s219, %s222
    %p231 = scmp.eq.s32.totalorder %s20, 1
    %p232 = por %p230, %p231
    %p233 = scmp.ne.s32.totalorder %s222, %s223
    %p234 = scmp.eq.s32.totalorder %s20, 0
    %p235 = por %p233, %p234
    %p236 = scmp.ne.s32.totalorder %s222, %s223
    %p237 = scmp.eq.s32.totalorder %s21, 1
    %p238 = por %p236, %p237
    %p240 = scmp.ne.s32.totalorder %s223, %s239
    %p241 = scmp.eq.s32.totalorder %s21, 0
    %p242 = por %p240, %p241
    %p243 = scmp.le.s32.totalorder 1, %s15
    %p244 = scmp.lt.s32.totalorder %s15, 3
    %p245 = pnand %p243, %p244
    %p246 = pneg %p245
    // Predicated region
    $region9: #{tpu_custom_call.1} parent=5 // pred_check
      _
    $region10: #{tpu_custom_call.1} parent=5 // pred_check_branch
      %248 = sbr.rel (%p245) target = $region12
    $region11: #{tpu_custom_call.1} parent=5 // pred_region
      %s249 = ssub.s32 %s15, 1
      // Predicated region
      $region13: #{tpu_custom_call.1} parent=11 // pred_check
        %p250 = pneg %p62
      $region14: #{tpu_custom_call.1} parent=11 // pred_check_branch
        %252 = sbr.rel (%p250) target = $region16
      $region15: #{tpu_custom_call.1} parent=11 // pred_region
        _
      $region16: #{tpu_custom_call.1} parent=11 // pred_fallthru
        _
      // Predicated region
      $region17: #{tpu_custom_call.1} parent=11 // pred_check
        %p253 = pneg %p83
      $region18: #{tpu_custom_call.1} parent=11 // pred_check_branch
        %255 = sbr.rel (%p253) target = $region20
      $region19: #{tpu_custom_call.1} parent=11 // pred_region
        _
      $region20: #{tpu_custom_call.1} parent=11 // pred_fallthru
        _
      // Predicated region
      $region21: #{tpu_custom_call.1} parent=11 // pred_check
        %p256 = pneg %p104
      $region22: #{tpu_custom_call.1} parent=11 // pred_check_branch
        %258 = sbr.rel (%p256) target = $region24
      $region23: #{tpu_custom_call.1} parent=11 // pred_region
        _
      $region24: #{tpu_custom_call.1} parent=11 // pred_fallthru
        _
      // Predicated region
      $region25: #{tpu_custom_call.1} parent=11 // pred_check
        %p259 = pneg %p125
      $region26: #{tpu_custom_call.1} parent=11 // pred_check_branch
        %261 = sbr.rel (%p259) target = $region28
      $region27: #{tpu_custom_call.1} parent=11 // pred_region
        _
      $region28: #{tpu_custom_call.1} parent=11 // pred_fallthru
        _
      // Predicated region
      $region29: #{tpu_custom_call.1} parent=11 // pred_check
        %p262 = pneg %p146
      $region30: #{tpu_custom_call.1} parent=11 // pred_check_branch
        %264 = sbr.rel (%p262) target = $region32
      $region31: #{tpu_custom_call.1} parent=11 // pred_region
        _
      $region32: #{tpu_custom_call.1} parent=11 // pred_fallthru
        _
      // Predicated region
      $region33: #{tpu_custom_call.1} parent=11 // pred_check
        %p265 = pneg %p167
      $region34: #{tpu_custom_call.1} parent=11 // pred_check_branch
        %267 = sbr.rel (%p265) target = $region36
      $region35: #{tpu_custom_call.1} parent=11 // pred_region
        _
      $region36: #{tpu_custom_call.1} parent=11 // pred_fallthru
        _
      // Predicated region
      $region37: #{tpu_custom_call.1} parent=11 // pred_check
        %p268 = pneg %p188
      $region38: #{tpu_custom_call.1} parent=11 // pred_check_branch
        %270 = sbr.rel (%p268) target = $region40
      $region39: #{tpu_custom_call.1} parent=11 // pred_region
        _
      $region40: #{tpu_custom_call.1} parent=11 // pred_fallthru
        _
      // Predicated region
      $region41: #{tpu_custom_call.1} parent=11 // pred_check
        %p271 = pneg %p209
      $region42: #{tpu_custom_call.1} parent=11 // pred_check_branch
        %273 = sbr.rel (%p271) target = $region44
      $region43: #{tpu_custom_call.1} parent=11 // pred_region
        _
      $region44: #{tpu_custom_call.1} parent=11 // pred_fallthru
        _
    $region12: #{tpu_custom_call.1} parent=5 // pred_fallthru
      _
    %p274 = scmp.lt.s32.totalorder %s15, 2
    // Predicated region
    $region45: #{tpu_custom_call.1} parent=5 // pred_check
      %p275 = pneg %p274
    $region46: #{tpu_custom_call.1} parent=5 // pred_check_branch
      %277 = sbr.rel (%p275) target = $region48
    $region47: #{tpu_custom_call.1} parent=5 // pred_region
      // Predicated region
      $region49: #{tpu_custom_call.1} parent=47 // pred_check
        %p278 = pneg %p35
      $region50: #{tpu_custom_call.1} parent=47 // pred_check_branch
        %280 = sbr.rel (%p278) target = $region52
      $region51: #{tpu_custom_call.1} parent=47 // pred_region
        %s281 = smul.u32 4, %s15
        %p282 = scmp.lt.s32.totalorder %s281, 7
        %s283 = scalar_select %p282, %s281, 7
        %s284 = smul.addr %s283, 8
        %s285 = smul.addr %s284, 8
        %s286 = scalar_lea.vmem %s0, %s285
        %s287 = smul.u32 4, %s15
      $region52: #{tpu_custom_call.1} parent=47 // pred_fallthru
        _
    $region48: #{tpu_custom_call.1} parent=5 // pred_fallthru
      _
    %p288 = scmp.le.s32.totalorder 1, %s15
    %p289 = scmp.lt.s32.totalorder %s15, 3
    %p290 = pnand %p288, %p289
    %p291 = pneg %p290
    // Predicated region
    $region53: #{tpu_custom_call.1} parent=5 // pred_check
      _
    $region54: #{tpu_custom_call.1} parent=5 // pred_check_branch
      %293 = sbr.rel (%p290) target = $region56
    $region55: #{tpu_custom_call.1} parent=5 // pred_region
      %s294 = ssub.s32 %s15, 1
      %s295 = smul.u32 4, %s20
      %p296 = scmp.lt.s32.totalorder %s295, 7
      %s297 = scalar_select %p296, %s295, 7
      %s298 = smul.addr %s297, 8
      %s299 = smul.addr %s298, 8
      %s300 = scalar_lea.vmem %s0, %s299
      %p301 = pneg %p41
      %p302 = pneg %p38
      %p303 = pneg %p62
      %p304 = pneg %p59
      %p305 = pneg %p83
      %p306 = pneg %p80
      %p307 = pneg %p104
      %p308 = pneg %p101
      %p309 = pneg %p125
      %p310 = pneg %p122
      %p311 = pneg %p146
      %p312 = pneg %p143
      %p313 = pneg %p167
      %p314 = pneg %p164
      %p315 = pneg %p188
      %p316 = pneg %p185
      %p317 = pneg %p209
      %p318 = pneg %p206
      %p319 = pneg %p235
      %p320 = pneg %p232
      %s321 = smul.u32 4, %s20
      %p322 = scmp.lt.s32.totalorder %s321, 7
      %s323 = scalar_select %p322, %s321, 7
      %s324 = smul.addr %s323, 8
      %s325 = smul.addr %s324, 8
      %s326 = scalar_lea.vmem %s9, %s325
      %s327 = smul.u32 4, %s20
      %p328 = scmp.lt.s32.totalorder %s327, 7
      %s329 = scalar_select %p328, %s327, 7
      %s330 = smul.addr %s329, 8
      %s331 = smul.addr %s330, 8
      %s332 = scalar_lea.vmem %s0, %s331
      %s333 = smul.u32 4, %s20
      %s334 = smul.u32 4, %s20
      %p335 = scmp.lt.s32.totalorder %s334, 7
      %s336 = scalar_select %p335, %s334, 7
      %s337 = smul.addr %s336, 8
      %s338 = smul.addr %s337, 8
      %s339 = scalar_lea.vmem %s9, %s338
      %s340 = smul.u32 4, %s20
      %v341 = vld [vmem:[%s332] sm:$0xff]
      %v342 = vld [vmem:[%s332 + $0x8] sm:$0xff]
      %v343 = vld [vmem:[%s332 + $0x10] sm:$0xff]
      %v344 = vld [vmem:[%s332 + $0x18] sm:$0xff]
      %v345 = vld [vmem:[%s332 + $0x20] sm:$0xff]
      %v346 = vld [vmem:[%s332 + $0x28] sm:$0xff]
      %v347 = vld [vmem:[%s332 + $0x30] sm:$0xff]
      %v348 = vld [vmem:[%s332 + $0x38] sm:$0xff]
      %v349 = vld [vmem:[%s332 + $0x40] sm:$0xff]
      %v350 = vld [vmem:[%s332 + $0x48] sm:$0xff]
      %v351 = vld [vmem:[%s332 + $0x50] sm:$0xff]
      %v352 = vld [vmem:[%s332 + $0x58] sm:$0xff]
      %v353 = vld [vmem:[%s332 + $0x60] sm:$0xff]
      %v354 = vld [vmem:[%s332 + $0x68] sm:$0xff]
      %v355 = vld [vmem:[%s332 + $0x70] sm:$0xff]
      %v356 = vld [vmem:[%s332 + $0x78] sm:$0xff]
      %v357 = vld [vmem:[%s332 + $0x80] sm:$0xff]
      %v358 = vld [vmem:[%s332 + $0x88] sm:$0xff]
      %v359 = vld [vmem:[%s332 + $0x90] sm:$0xff]
      %v360 = vld [vmem:[%s332 + $0x98] sm:$0xff]
      %v361 = vld [vmem:[%s332 + $0xa0] sm:$0xff]
      %v362 = vld [vmem:[%s332 + $0xa8] sm:$0xff]
      %v363 = vld [vmem:[%s332 + $0xb0] sm:$0xff]
      %v364 = vld [vmem:[%s332 + $0xb8] sm:$0xff]
      %v365 = vld [vmem:[%s332 + $0xc0] sm:$0xff]
      %v366 = vld [vmem:[%s332 + $0xc8] sm:$0xff]
      %v367 = vld [vmem:[%s332 + $0xd0] sm:$0xff]
      %v368 = vld [vmem:[%s332 + $0xd8] sm:$0xff]
      %v369 = vld [vmem:[%s332 + $0xe0] sm:$0xff]
      %v370 = vld [vmem:[%s332 + $0xe8] sm:$0xff]
      %v371 = vld [vmem:[%s332 + $0xf0] sm:$0xff]
      %v372 = vld [vmem:[%s332 + $0xf8] sm:$0xff]
      %v373 = vld [vmem:[%s1] sm:$0x1f]
      %v374 = vld [vmem:[%s1 + $0x8] sm:$0x1f]
      %vm407 = vcmask 1041408
      %v408 = vrot.slane %v341, 6
      %v409 = vrot.slane %v342, 6
      %v410 = vsel %vm407, %v408, %v409
      %v411 = vrot.slane %v343, 6
      %v412 = vsel %vm407, %v409, %v411
      %v413 = vrot.slane %v344, 6
      %v414 = vsel %vm407, %v411, %v413
      %v415 = vrot.slane %v345, 6
      %v416 = vsel %vm407, %v413, %v415
      %v417 = vrot.slane %v346, 6
      %v418 = vsel %vm407, %v415, %v417
      %v419 = vrot.slane %v347, 6
      %v420 = vsel %vm407, %v417, %v419
      %v421 = vrot.slane %v348, 6
      %v422 = vsel %vm407, %v419, %v421
      %v423 = vrot.slane %v349, 6
      %v424 = vrot.slane %v350, 6
      %v425 = vsel %vm407, %v423, %v424
      %v426 = vrot.slane %v351, 6
      %v427 = vsel %vm407, %v424, %v426
      %v428 = vrot.slane %v352, 6
      %v429 = vsel %vm407, %v426, %v428
      %v430 = vrot.slane %v353, 6
      %v431 = vsel %vm407, %v428, %v430
      %v432 = vrot.slane %v354, 6
      %v433 = vsel %vm407, %v430, %v432
      %v434 = vrot.slane %v355, 6
      %v435 = vsel %vm407, %v432, %v434
      %v436 = vrot.slane %v356, 6
      %v437 = vsel %vm407, %v434, %v436
      %v438 = vrot.slane %v357, 6
      %v439 = vrot.slane %v358, 6
      %v440 = vsel %vm407, %v438, %v439
      %v441 = vrot.slane %v359, 6
      %v442 = vsel %vm407, %v439, %v441
      %v443 = vrot.slane %v360, 6
      %v444 = vsel %vm407, %v441, %v443
      %v445 = vrot.slane %v361, 6
      %v446 = vsel %vm407, %v443, %v445
      %v447 = vrot.slane %v362, 6
      %v448 = vsel %vm407, %v445, %v447
      %v449 = vrot.slane %v363, 6
      %v450 = vsel %vm407, %v447, %v449
      %v451 = vrot.slane %v364, 6
      %v452 = vsel %vm407, %v449, %v451
      %v453 = vrot.slane %v365, 6
      %v454 = vrot.slane %v366, 6
      %v455 = vsel %vm407, %v453, %v454
      %v456 = vrot.slane %v367, 6
      %v457 = vsel %vm407, %v454, %v456
      %v458 = vrot.slane %v368, 6
      %v459 = vsel %vm407, %v456, %v458
      %v460 = vrot.slane %v369, 6
      %v461 = vsel %vm407, %v458, %v460
      %v462 = vrot.slane %v370, 6
      %v463 = vsel %vm407, %v460, %v462
      %v464 = vrot.slane %v371, 6
      %v465 = vsel %vm407, %v462, %v464
      %v466 = vrot.slane %v372, 6
      %v467 = vsel %vm407, %v464, %v466
      %v472 = vsel %vm407, 0.0, %v408
      %v473 = vsel %vm407, 0.0, %v423
      %v474 = vsel %vm407, 0.0, %v438
      %v475 = vsel %vm407, 0.0, %v453
      %477 = vset.pattern.permute.xlu0 0
      %478 = vperm.xlu0 %477, %v472
      %v479 = vpop.permute.xlu0 %478
      %481 = vset.pattern.permute.xlu0 0
      %482 = vperm.xlu0 %481, %v410
      %v483 = vpop.permute.xlu0 %482
      %485 = vset.pattern.permute.xlu0 0
      %486 = vperm.xlu0 %485, %v412
      %v487 = vpop.permute.xlu0 %486
      %489 = vset.pattern.permute.xlu0 0
      %490 = vperm.xlu0 %489, %v414
      %v491 = vpop.permute.xlu0 %490
      %493 = vset.pattern.permute.xlu0 0
      %494 = vperm.xlu0 %493, %v416
      %v495 = vpop.permute.xlu0 %494
      %497 = vset.pattern.permute.xlu0 0
      %498 = vperm.xlu0 %497, %v418
      %v499 = vpop.permute.xlu0 %498
      %501 = vset.pattern.permute.xlu0 0
      %502 = vperm.xlu0 %501, %v420
      %v503 = vpop.permute.xlu0 %502
      %505 = vset.pattern.permute.xlu0 0
      %506 = vperm.xlu0 %505, %v422
      %v507 = vpop.permute.xlu0 %506
      %510 = vset.pattern.permute.xlu0 0
      %511 = vperm.xlu0 %510, %v473
      %v512 = vpop.permute.xlu0 %511
      %514 = vset.pattern.permute.xlu0 0
      %515 = vperm.xlu0 %514, %v425
      %v516 = vpop.permute.xlu0 %515
      %518 = vset.pattern.permute.xlu0 0
      %519 = vperm.xlu0 %518, %v427
      %v520 = vpop.permute.xlu0 %519
      %522 = vset.pattern.permute.xlu0 0
      %523 = vperm.xlu0 %522, %v429
      %v524 = vpop.permute.xlu0 %523
      %526 = vset.pattern.permute.xlu0 0
      %527 = vperm.xlu0 %526, %v431
      %v528 = vpop.permute.xlu0 %527
      %530 = vset.pattern.permute.xlu0 0
      %531 = vperm.xlu0 %530, %v433
      %v532 = vpop.permute.xlu0 %531
      %534 = vset.pattern.permute.xlu0 0
      %535 = vperm.xlu0 %534, %v435
      %v536 = vpop.permute.xlu0 %535
      %538 = vset.pattern.permute.xlu0 0
      %539 = vperm.xlu0 %538, %v437
      %v540 = vpop.permute.xlu0 %539
      %543 = vset.pattern.permute.xlu0 0
      %544 = vperm.xlu0 %543, %v474
      %v545 = vpop.permute.xlu0 %544
      %547 = vset.pattern.permute.xlu0 0
      %548 = vperm.xlu0 %547, %v440
      %v549 = vpop.permute.xlu0 %548
      %551 = vset.pattern.permute.xlu0 0
      %552 = vperm.xlu0 %551, %v442
      %v553 = vpop.permute.xlu0 %552
      %555 = vset.pattern.permute.xlu0 0
      %556 = vperm.xlu0 %555, %v444
      %v557 = vpop.permute.xlu0 %556
      %559 = vset.pattern.permute.xlu0 0
      %560 = vperm.xlu0 %559, %v446
      %v561 = vpop.permute.xlu0 %560
      %563 = vset.pattern.permute.xlu0 0
      %564 = vperm.xlu0 %563, %v448
      %v565 = vpop.permute.xlu0 %564
      %567 = vset.pattern.permute.xlu0 0
      %568 = vperm.xlu0 %567, %v450
      %v569 = vpop.permute.xlu0 %568
      %571 = vset.pattern.permute.xlu0 0
      %572 = vperm.xlu0 %571, %v452
      %v573 = vpop.permute.xlu0 %572
      %576 = vset.pattern.permute.xlu0 0
      %577 = vperm.xlu0 %576, %v475
      %v578 = vpop.permute.xlu0 %577
      %580 = vset.pattern.permute.xlu0 0
      %581 = vperm.xlu0 %580, %v455
      %v582 = vpop.permute.xlu0 %581
      %584 = vset.pattern.permute.xlu0 0
      %585 = vperm.xlu0 %584, %v457
      %v586 = vpop.permute.xlu0 %585
      %588 = vset.pattern.permute.xlu0 0
      %589 = vperm.xlu0 %588, %v459
      %v590 = vpop.permute.xlu0 %589
      %592 = vset.pattern.permute.xlu0 0
      %593 = vperm.xlu0 %592, %v461
      %v594 = vpop.permute.xlu0 %593
      %596 = vset.pattern.permute.xlu0 0
      %597 = vperm.xlu0 %596, %v463
      %v598 = vpop.permute.xlu0 %597
      %600 = vset.pattern.permute.xlu0 0
      %601 = vperm.xlu0 %600, %v465
      %v602 = vpop.permute.xlu0 %601
      %604 = vset.pattern.permute.xlu0 0
      %605 = vperm.xlu0 %604, %v467
      %v606 = vpop.permute.xlu0 %605
      %v608 = vlaneseq
      %v609 = vshrl.u32 %v608, 7
      %v610 = vsub.s32 0, %v609
      %v611 = vrot.slane %v373, %v610
      %v612 = vlaneseq
      %v613 = vshrl.u32 %v612, 7
      %v614 = vsub.s32 0, %v613
      %v615 = vrot.slane %v374, %v614
      %v616 = vmul.f32 %v479, %v611
      %v617 = vmul.f32 %v479, %v615
      %v618 = vmul.f32 %v483, %v611
      %v619 = vmul.f32 %v483, %v615
      %v620 = vmul.f32 %v487, %v611
      %v621 = vmul.f32 %v487, %v615
      %v622 = vmul.f32 %v491, %v611
      %v623 = vmul.f32 %v491, %v615
      %v624 = vmul.f32 %v495, %v611
      %v625 = vmul.f32 %v495, %v615
      %v626 = vmul.f32 %v499, %v611
      %v627 = vmul.f32 %v499, %v615
      %v628 = vmul.f32 %v503, %v611
      %v629 = vmul.f32 %v503, %v615
      %v630 = vmul.f32 %v507, %v611
      %v631 = vmul.f32 %v507, %v615
      %v632 = vmul.f32 %v512, %v611
      %v633 = vmul.f32 %v512, %v615
      %v634 = vmul.f32 %v516, %v611
      %v635 = vmul.f32 %v516, %v615
      %v636 = vmul.f32 %v520, %v611
      %v637 = vmul.f32 %v520, %v615
      %v638 = vmul.f32 %v524, %v611
      %v639 = vmul.f32 %v524, %v615
      %v640 = vmul.f32 %v528, %v611
      %v641 = vmul.f32 %v528, %v615
      %v642 = vmul.f32 %v532, %v611
      %v643 = vmul.f32 %v532, %v615
      %v644 = vmul.f32 %v536, %v611
      %v645 = vmul.f32 %v536, %v615
      %v646 = vmul.f32 %v540, %v611
      %v647 = vmul.f32 %v540, %v615
      %v648 = vmul.f32 %v545, %v611
      %v649 = vmul.f32 %v545, %v615
      %v650 = vmul.f32 %v549, %v611
      %v651 = vmul.f32 %v549, %v615
      %v652 = vmul.f32 %v553, %v611
      %v653 = vmul.f32 %v553, %v615
      %v654 = vmul.f32 %v557, %v611
      %v655 = vmul.f32 %v557, %v615
      %v656 = vmul.f32 %v561, %v611
      %v657 = vmul.f32 %v561, %v615
      %v658 = vmul.f32 %v565, %v611
      %v659 = vmul.f32 %v565, %v615
      %v660 = vmul.f32 %v569, %v611
      %v661 = vmul.f32 %v569, %v615
      %v662 = vmul.f32 %v573, %v611
      %v663 = vmul.f32 %v573, %v615
      %v664 = vmul.f32 %v578, %v611
      %v665 = vmul.f32 %v578, %v615
      %v666 = vmul.f32 %v582, %v611
      %v667 = vmul.f32 %v582, %v615
      %v668 = vmul.f32 %v586, %v611
      %v669 = vmul.f32 %v586, %v615
      %v670 = vmul.f32 %v590, %v611
      %v671 = vmul.f32 %v590, %v615
      %v672 = vmul.f32 %v594, %v611
      %v673 = vmul.f32 %v594, %v615
      %v674 = vmul.f32 %v598, %v611
      %v675 = vmul.f32 %v598, %v615
      %v676 = vmul.f32 %v602, %v611
      %v677 = vmul.f32 %v602, %v615
      %v678 = vmul.f32 %v606, %v611
      %v679 = vmul.f32 %v606, %v615
      %vm680 = vcmask 1040384
      %v681 = vrot.slane %v341, 7
      %v682 = vrot.slane %v342, 7
      %v683 = vsel %vm680, %v681, %v682
      %v684 = vrot.slane %v343, 7
      %v685 = vsel %vm680, %v682, %v684
      %v686 = vrot.slane %v344, 7
      %v687 = vsel %vm680, %v684, %v686
      %v688 = vrot.slane %v345, 7
      %v689 = vsel %vm680, %v686, %v688
      %v690 = vrot.slane %v346, 7
      %v691 = vsel %vm680, %v688, %v690
      %v692 = vrot.slane %v347, 7
      %v693 = vsel %vm680, %v690, %v692
      %v694 = vrot.slane %v348, 7
      %v695 = vsel %vm680, %v692, %v694
      %v696 = vrot.slane %v349, 7
      %v697 = vrot.slane %v350, 7
      %v698 = vsel %vm680, %v696, %v697
      %v699 = vrot.slane %v351, 7
      %v700 = vsel %vm680, %v697, %v699
      %v701 = vrot.slane %v352, 7
      %v702 = vsel %vm680, %v699, %v701
      %v703 = vrot.slane %v353, 7
      %v704 = vsel %vm680, %v701, %v703
      %v705 = vrot.slane %v354, 7
      %v706 = vsel %vm680, %v703, %v705
      %v707 = vrot.slane %v355, 7
      %v708 = vsel %vm680, %v705, %v707
      %v709 = vrot.slane %v356, 7
      %v710 = vsel %vm680, %v707, %v709
      %v711 = vrot.slane %v357, 7
      %v712 = vrot.slane %v358, 7
      %v713 = vsel %vm680, %v711, %v712
      %v714 = vrot.slane %v359, 7
      %v715 = vsel %vm680, %v712, %v714
      %v716 = vrot.slane %v360, 7
      %v717 = vsel %vm680, %v714, %v716
      %v718 = vrot.slane %v361, 7
      %v719 = vsel %vm680, %v716, %v718
      %v720 = vrot.slane %v362, 7
      %v721 = vsel %vm680, %v718, %v720
      %v722 = vrot.slane %v363, 7
      %v723 = vsel %vm680, %v720, %v722
      %v724 = vrot.slane %v364, 7
      %v725 = vsel %vm680, %v722, %v724
      %v726 = vrot.slane %v365, 7
      %v727 = vrot.slane %v366, 7
      %v728 = vsel %vm680, %v726, %v727
      %v729 = vrot.slane %v367, 7
      %v730 = vsel %vm680, %v727, %v729
      %v731 = vrot.slane %v368, 7
      %v732 = vsel %vm680, %v729, %v731
      %v733 = vrot.slane %v369, 7
      %v734 = vsel %vm680, %v731, %v733
      %v735 = vrot.slane %v370, 7
      %v736 = vsel %vm680, %v733, %v735
      %v737 = vrot.slane %v371, 7
      %v738 = vsel %vm680, %v735, %v737
      %v739 = vrot.slane %v372, 7
      %v740 = vsel %vm680, %v737, %v739
      %v745 = vsel %vm680, 0.0, %v681
      %v746 = vsel %vm680, 0.0, %v696
      %v747 = vsel %vm680, 0.0, %v711
      %v748 = vsel %vm680, 0.0, %v726
      %750 = vset.pattern.permute.xlu0 0
      %751 = vperm.xlu0 %750, %v745
      %v752 = vpop.permute.xlu0 %751
      %754 = vset.pattern.permute.xlu0 0
      %755 = vperm.xlu0 %754, %v683
      %v756 = vpop.permute.xlu0 %755
      %758 = vset.pattern.permute.xlu0 0
      %759 = vperm.xlu0 %758, %v685
      %v760 = vpop.permute.xlu0 %759
      %762 = vset.pattern.permute.xlu0 0
      %763 = vperm.xlu0 %762, %v687
      %v764 = vpop.permute.xlu0 %763
      %766 = vset.pattern.permute.xlu0 0
      %767 = vperm.xlu0 %766, %v689
      %v768 = vpop.permute.xlu0 %767
      %770 = vset.pattern.permute.xlu0 0
      %771 = vperm.xlu0 %770, %v691
      %v772 = vpop.permute.xlu0 %771
      %774 = vset.pattern.permute.xlu0 0
      %775 = vperm.xlu0 %774, %v693
      %v776 = vpop.permute.xlu0 %775
      %778 = vset.pattern.permute.xlu0 0
      %779 = vperm.xlu0 %778, %v695
      %v780 = vpop.permute.xlu0 %779
      %783 = vset.pattern.permute.xlu0 0
      %784 = vperm.xlu0 %783, %v746
      %v785 = vpop.permute.xlu0 %784
      %787 = vset.pattern.permute.xlu0 0
      %788 = vperm.xlu0 %787, %v698
      %v789 = vpop.permute.xlu0 %788
      %791 = vset.pattern.permute.xlu0 0
      %792 = vperm.xlu0 %791, %v700
      %v793 = vpop.permute.xlu0 %792
      %795 = vset.pattern.permute.xlu0 0
      %796 = vperm.xlu0 %795, %v702
      %v797 = vpop.permute.xlu0 %796
      %799 = vset.pattern.permute.xlu0 0
      %800 = vperm.xlu0 %799, %v704
      %v801 = vpop.permute.xlu0 %800
      %803 = vset.pattern.permute.xlu0 0
      %804 = vperm.xlu0 %803, %v706
      %v805 = vpop.permute.xlu0 %804
      %807 = vset.pattern.permute.xlu0 0
      %808 = vperm.xlu0 %807, %v708
      %v809 = vpop.permute.xlu0 %808
      %811 = vset.pattern.permute.xlu0 0
      %812 = vperm.xlu0 %811, %v710
      %v813 = vpop.permute.xlu0 %812
      %816 = vset.pattern.permute.xlu0 0
      %817 = vperm.xlu0 %816, %v747
      %v818 = vpop.permute.xlu0 %817
      %820 = vset.pattern.permute.xlu0 0
      %821 = vperm.xlu0 %820, %v713
      %v822 = vpop.permute.xlu0 %821
      %824 = vset.pattern.permute.xlu0 0
      %825 = vperm.xlu0 %824, %v715
      %v826 = vpop.permute.xlu0 %825
      %828 = vset.pattern.permute.xlu0 0
      %829 = vperm.xlu0 %828, %v717
      %v830 = vpop.permute.xlu0 %829
      %832 = vset.pattern.permute.xlu0 0
      %833 = vperm.xlu0 %832, %v719
      %v834 = vpop.permute.xlu0 %833
      %836 = vset.pattern.permute.xlu0 0
      %837 = vperm.xlu0 %836, %v721
      %v838 = vpop.permute.xlu0 %837
      %840 = vset.pattern.permute.xlu0 0
      %841 = vperm.xlu0 %840, %v723
      %v842 = vpop.permute.xlu0 %841
      %844 = vset.pattern.permute.xlu0 0
      %845 = vperm.xlu0 %844, %v725
      %v846 = vpop.permute.xlu0 %845
      %849 = vset.pattern.permute.xlu0 0
      %850 = vperm.xlu0 %849, %v748
      %v851 = vpop.permute.xlu0 %850
      %853 = vset.pattern.permute.xlu0 0
      %854 = vperm.xlu0 %853, %v728
      %v855 = vpop.permute.xlu0 %854
      %857 = vset.pattern.permute.xlu0 0
      %858 = vperm.xlu0 %857, %v730
      %v859 = vpop.permute.xlu0 %858
      %861 = vset.pattern.permute.xlu0 0
      %862 = vperm.xlu0 %861, %v732
      %v863 = vpop.permute.xlu0 %862
      %865 = vset.pattern.permute.xlu0 0
      %866 = vperm.xlu0 %865, %v734
      %v867 = vpop.permute.xlu0 %866
      %869 = vset.pattern.permute.xlu0 0
      %870 = vperm.xlu0 %869, %v736
      %v871 = vpop.permute.xlu0 %870
      %873 = vset.pattern.permute.xlu0 0
      %874 = vperm.xlu0 %873, %v738
      %v875 = vpop.permute.xlu0 %874
      %877 = vset.pattern.permute.xlu0 0
      %878 = vperm.xlu0 %877, %v740
      %v879 = vpop.permute.xlu0 %878
      %v881 = vlaneseq
      %v882 = vshrl.u32 %v881, 7
      %v883 = vsub.s32 1, %v882
      %v884 = vrot.slane %v373, %v883
      %v885 = vlaneseq
      %v886 = vshrl.u32 %v885, 7
      %v887 = vsub.s32 1, %v886
      %v888 = vrot.slane %v374, %v887
      %v889 = vmul.f32 %v752, %v884
      %v890 = vmul.f32 %v752, %v888
      %v891 = vmul.f32 %v756, %v884
      %v892 = vmul.f32 %v756, %v888
      %v893 = vmul.f32 %v760, %v884
      %v894 = vmul.f32 %v760, %v888
      %v895 = vmul.f32 %v764, %v884
      %v896 = vmul.f32 %v764, %v888
      %v897 = vmul.f32 %v768, %v884
      %v898 = vmul.f32 %v768, %v888
      %v899 = vmul.f32 %v772, %v884
      %v900 = vmul.f32 %v772, %v888
      %v901 = vmul.f32 %v776, %v884
      %v902 = vmul.f32 %v776, %v888
      %v903 = vmul.f32 %v780, %v884
      %v904 = vmul.f32 %v780, %v888
      %v905 = vmul.f32 %v785, %v884
      %v906 = vmul.f32 %v785, %v888
      %v907 = vmul.f32 %v789, %v884
      %v908 = vmul.f32 %v789, %v888
      %v909 = vmul.f32 %v793, %v884
      %v910 = vmul.f32 %v793, %v888
      %v911 = vmul.f32 %v797, %v884
      %v912 = vmul.f32 %v797, %v888
      %v913 = vmul.f32 %v801, %v884
      %v914 = vmul.f32 %v801, %v888
      %v915 = vmul.f32 %v805, %v884
      %v916 = vmul.f32 %v805, %v888
      %v917 = vmul.f32 %v809, %v884
      %v918 = vmul.f32 %v809, %v888
      %v919 = vmul.f32 %v813, %v884
      %v920 = vmul.f32 %v813, %v888
      %v921 = vmul.f32 %v818, %v884
      %v922 = vmul.f32 %v818, %v888
      %v923 = vmul.f32 %v822, %v884
      %v924 = vmul.f32 %v822, %v888
      %v925 = vmul.f32 %v826, %v884
      %v926 = vmul.f32 %v826, %v888
      %v927 = vmul.f32 %v830, %v884
      %v928 = vmul.f32 %v830, %v888
      %v929 = vmul.f32 %v834, %v884
      %v930 = vmul.f32 %v834, %v888
      %v931 = vmul.f32 %v838, %v884
      %v932 = vmul.f32 %v838, %v888
      %v933 = vmul.f32 %v842, %v884
      %v934 = vmul.f32 %v842, %v888
      %v935 = vmul.f32 %v846, %v884
      %v936 = vmul.f32 %v846, %v888
      %v937 = vmul.f32 %v851, %v884
      %v938 = vmul.f32 %v851, %v888
      %v939 = vmul.f32 %v855, %v884
      %v940 = vmul.f32 %v855, %v888
      %v941 = vmul.f32 %v859, %v884
      %v942 = vmul.f32 %v859, %v888
      %v943 = vmul.f32 %v863, %v884
      %v944 = vmul.f32 %v863, %v888
      %v945 = vmul.f32 %v867, %v884
      %v946 = vmul.f32 %v867, %v888
      %v947 = vmul.f32 %v871, %v884
      %v948 = vmul.f32 %v871, %v888
      %v949 = vmul.f32 %v875, %v884
      %v950 = vmul.f32 %v875, %v888
      %v951 = vmul.f32 %v879, %v884
      %v952 = vmul.f32 %v879, %v888
      %v953 = vadd.f32 %v616, %v889
      %v954 = vadd.f32 %v617, %v890
      %v955 = vadd.f32 %v618, %v891
      %v956 = vadd.f32 %v619, %v892
      %v957 = vadd.f32 %v620, %v893
      %v958 = vadd.f32 %v621, %v894
      %v959 = vadd.f32 %v622, %v895
      %v960 = vadd.f32 %v623, %v896
      %v961 = vadd.f32 %v624, %v897
      %v962 = vadd.f32 %v625, %v898
      %v963 = vadd.f32 %v626, %v899
      %v964 = vadd.f32 %v627, %v900
      %v965 = vadd.f32 %v628, %v901
      %v966 = vadd.f32 %v629, %v902
      %v967 = vadd.f32 %v630, %v903
      %v968 = vadd.f32 %v631, %v904
      %v969 = vadd.f32 %v632, %v905
      %v970 = vadd.f32 %v633, %v906
      %v971 = vadd.f32 %v634, %v907
      %v972 = vadd.f32 %v635, %v908
      %v973 = vadd.f32 %v636, %v909
      %v974 = vadd.f32 %v637, %v910
      %v975 = vadd.f32 %v638, %v911
      %v976 = vadd.f32 %v639, %v912
      %v977 = vadd.f32 %v640, %v913
      %v978 = vadd.f32 %v641, %v914
      %v979 = vadd.f32 %v642, %v915
      %v980 = vadd.f32 %v643, %v916
      %v981 = vadd.f32 %v644, %v917
      %v982 = vadd.f32 %v645, %v918
      %v983 = vadd.f32 %v646, %v919
      %v984 = vadd.f32 %v647, %v920
      %v985 = vadd.f32 %v648, %v921
      %v986 = vadd.f32 %v649, %v922
      %v987 = vadd.f32 %v650, %v923
      %v988 = vadd.f32 %v651, %v924
      %v989 = vadd.f32 %v652, %v925
      %v990 = vadd.f32 %v653, %v926
      %v991 = vadd.f32 %v654, %v927
      %v992 = vadd.f32 %v655, %v928
      %v993 = vadd.f32 %v656, %v929
      %v994 = vadd.f32 %v657, %v930
      %v995 = vadd.f32 %v658, %v931
      %v996 = vadd.f32 %v659, %v932
      %v997 = vadd.f32 %v660, %v933
      %v998 = vadd.f32 %v661, %v934
      %v999 = vadd.f32 %v662, %v935
      %v1000 = vadd.f32 %v663, %v936
      %v1001 = vadd.f32 %v664, %v937
      %v1002 = vadd.f32 %v665, %v938
      %v1003 = vadd.f32 %v666, %v939
      %v1004 = vadd.f32 %v667, %v940
      %v1005 = vadd.f32 %v668, %v941
      %v1006 = vadd.f32 %v669, %v942
      %v1007 = vadd.f32 %v670, %v943
      %v1008 = vadd.f32 %v671, %v944
      %v1009 = vadd.f32 %v672, %v945
      %v1010 = vadd.f32 %v673, %v946
      %v1011 = vadd.f32 %v674, %v947
      %v1012 = vadd.f32 %v675, %v948
      %v1013 = vadd.f32 %v676, %v949
      %v1014 = vadd.f32 %v677, %v950
      %v1015 = vadd.f32 %v678, %v951
      %v1016 = vadd.f32 %v679, %v952
      %1017 = vset.pattern.permute.xlu0 0
      %1018 = vperm.xlu0 %1017, %v341
      %v1019 = vpop.permute.xlu0 %1018
      %1021 = vset.pattern.permute.xlu0 0
      %1022 = vperm.xlu0 %1021, %v342
      %v1023 = vpop.permute.xlu0 %1022
      %1025 = vset.pattern.permute.xlu0 0
      %1026 = vperm.xlu0 %1025, %v343
      %v1027 = vpop.permute.xlu0 %1026
      %1029 = vset.pattern.permute.xlu0 0
      %1030 = vperm.xlu0 %1029, %v344
      %v1031 = vpop.permute.xlu0 %1030
      %1033 = vset.pattern.permute.xlu0 0
      %1034 = vperm.xlu0 %1033, %v345
      %v1035 = vpop.permute.xlu0 %1034
      %1037 = vset.pattern.permute.xlu0 0
      %1038 = vperm.xlu0 %1037, %v346
      %v1039 = vpop.permute.xlu0 %1038
      %1041 = vset.pattern.permute.xlu0 0
      %1042 = vperm.xlu0 %1041, %v347
      %v1043 = vpop.permute.xlu0 %1042
      %1045 = vset.pattern.permute.xlu0 0
      %1046 = vperm.xlu0 %1045, %v348
      %v1047 = vpop.permute.xlu0 %1046
      %1049 = vset.pattern.permute.xlu0 0
      %1050 = vperm.xlu0 %1049, %v349
      %v1051 = vpop.permute.xlu0 %1050
      %1053 = vset.pattern.permute.xlu0 0
      %1054 = vperm.xlu0 %1053, %v350
      %v1055 = vpop.permute.xlu0 %1054
      %1057 = vset.pattern.permute.xlu0 0
      %1058 = vperm.xlu0 %1057, %v351
      %v1059 = vpop.permute.xlu0 %1058
      %1061 = vset.pattern.permute.xlu0 0
      %1062 = vperm.xlu0 %1061, %v352
      %v1063 = vpop.permute.xlu0 %1062
      %1065 = vset.pattern.permute.xlu0 0
      %1066 = vperm.xlu0 %1065, %v353
      %v1067 = vpop.permute.xlu0 %1066
      %1069 = vset.pattern.permute.xlu0 0
      %1070 = vperm.xlu0 %1069, %v354
      %v1071 = vpop.permute.xlu0 %1070
      %1073 = vset.pattern.permute.xlu0 0
      %1074 = vperm.xlu0 %1073, %v355
      %v1075 = vpop.permute.xlu0 %1074
      %1077 = vset.pattern.permute.xlu0 0
      %1078 = vperm.xlu0 %1077, %v356
      %v1079 = vpop.permute.xlu0 %1078
      %1081 = vset.pattern.permute.xlu0 0
      %1082 = vperm.xlu0 %1081, %v357
      %v1083 = vpop.permute.xlu0 %1082
      %1085 = vset.pattern.permute.xlu0 0
      %1086 = vperm.xlu0 %1085, %v358
      %v1087 = vpop.permute.xlu0 %1086
      %1089 = vset.pattern.permute.xlu0 0
      %1090 = vperm.xlu0 %1089, %v359
      %v1091 = vpop.permute.xlu0 %1090
      %1093 = vset.pattern.permute.xlu0 0
      %1094 = vperm.xlu0 %1093, %v360
      %v1095 = vpop.permute.xlu0 %1094
      %1097 = vset.pattern.permute.xlu0 0
      %1098 = vperm.xlu0 %1097, %v361
      %v1099 = vpop.permute.xlu0 %1098
      %1101 = vset.pattern.permute.xlu0 0
      %1102 = vperm.xlu0 %1101, %v362
      %v1103 = vpop.permute.xlu0 %1102
      %1105 = vset.pattern.permute.xlu0 0
      %1106 = vperm.xlu0 %1105, %v363
      %v1107 = vpop.permute.xlu0 %1106
      %1109 = vset.pattern.permute.xlu0 0
      %1110 = vperm.xlu0 %1109, %v364
      %v1111 = vpop.permute.xlu0 %1110
      %1113 = vset.pattern.permute.xlu0 0
      %1114 = vperm.xlu0 %1113, %v365
      %v1115 = vpop.permute.xlu0 %1114
      %1117 = vset.pattern.permute.xlu0 0
      %1118 = vperm.xlu0 %1117, %v366
      %v1119 = vpop.permute.xlu0 %1118
      %1121 = vset.pattern.permute.xlu0 0
      %1122 = vperm.xlu0 %1121, %v367
      %v1123 = vpop.permute.xlu0 %1122
      %1125 = vset.pattern.permute.xlu0 0
      %1126 = vperm.xlu0 %1125, %v368
      %v1127 = vpop.permute.xlu0 %1126
      %1129 = vset.pattern.permute.xlu0 0
      %1130 = vperm.xlu0 %1129, %v369
      %v1131 = vpop.permute.xlu0 %1130
      %1133 = vset.pattern.permute.xlu0 0
      %1134 = vperm.xlu0 %1133, %v370
      %v1135 = vpop.permute.xlu0 %1134
      %1137 = vset.pattern.permute.xlu0 0
      %1138 = vperm.xlu0 %1137, %v371
      %v1139 = vpop.permute.xlu0 %1138
      %1141 = vset.pattern.permute.xlu0 0
      %1142 = vperm.xlu0 %1141, %v372
      %v1143 = vpop.permute.xlu0 %1142
      %v1145 = vlaneseq
      %v1146 = vshrl.u32 %v1145, 7
      %v1147 = vsub.s32 2, %v1146
      %v1148 = vrot.slane %v373, %v1147
      %v1149 = vlaneseq
      %v1150 = vshrl.u32 %v1149, 7
      %v1151 = vsub.s32 2, %v1150
      %v1152 = vrot.slane %v374, %v1151
      %v1153 = vmul.f32 %v1019, %v1148
      %v1154 = vmul.f32 %v1019, %v1152
      %v1155 = vmul.f32 %v1023, %v1148
      %v1156 = vmul.f32 %v1023, %v1152
      %v1157 = vmul.f32 %v1027, %v1148
      %v1158 = vmul.f32 %v1027, %v1152
      %v1159 = vmul.f32 %v1031, %v1148
      %v1160 = vmul.f32 %v1031, %v1152
      %v1161 = vmul.f32 %v1035, %v1148
      %v1162 = vmul.f32 %v1035, %v1152
      %v1163 = vmul.f32 %v1039, %v1148
      %v1164 = vmul.f32 %v1039, %v1152
      %v1165 = vmul.f32 %v1043, %v1148
      %v1166 = vmul.f32 %v1043, %v1152
      %v1167 = vmul.f32 %v1047, %v1148
      %v1168 = vmul.f32 %v1047, %v1152
      %v1169 = vmul.f32 %v1051, %v1148
      %v1170 = vmul.f32 %v1051, %v1152
      %v1171 = vmul.f32 %v1055, %v1148
      %v1172 = vmul.f32 %v1055, %v1152
      %v1173 = vmul.f32 %v1059, %v1148
      %v1174 = vmul.f32 %v1059, %v1152
      %v1175 = vmul.f32 %v1063, %v1148
      %v1176 = vmul.f32 %v1063, %v1152
      %v1177 = vmul.f32 %v1067, %v1148
      %v1178 = vmul.f32 %v1067, %v1152
      %v1179 = vmul.f32 %v1071, %v1148
      %v1180 = vmul.f32 %v1071, %v1152
      %v1181 = vmul.f32 %v1075, %v1148
      %v1182 = vmul.f32 %v1075, %v1152
      %v1183 = vmul.f32 %v1079, %v1148
      %v1184 = vmul.f32 %v1079, %v1152
      %v1185 = vmul.f32 %v1083, %v1148
      %v1186 = vmul.f32 %v1083, %v1152
      %v1187 = vmul.f32 %v1087, %v1148
      %v1188 = vmul.f32 %v1087, %v1152
      %v1189 = vmul.f32 %v1091, %v1148
      %v1190 = vmul.f32 %v1091, %v1152
      %v1191 = vmul.f32 %v1095, %v1148
      %v1192 = vmul.f32 %v1095, %v1152
      %v1193 = vmul.f32 %v1099, %v1148
      %v1194 = vmul.f32 %v1099, %v1152
      %v1195 = vmul.f32 %v1103, %v1148
      %v1196 = vmul.f32 %v1103, %v1152
      %v1197 = vmul.f32 %v1107, %v1148
      %v1198 = vmul.f32 %v1107, %v1152
      %v1199 = vmul.f32 %v1111, %v1148
      %v1200 = vmul.f32 %v1111, %v1152
      %v1201 = vmul.f32 %v1115, %v1148
      %v1202 = vmul.f32 %v1115, %v1152
      %v1203 = vmul.f32 %v1119, %v1148
      %v1204 = vmul.f32 %v1119, %v1152
      %v1205 = vmul.f32 %v1123, %v1148
      %v1206 = vmul.f32 %v1123, %v1152
      %v1207 = vmul.f32 %v1127, %v1148
      %v1208 = vmul.f32 %v1127, %v1152
      %v1209 = vmul.f32 %v1131, %v1148
      %v1210 = vmul.f32 %v1131, %v1152
      %v1211 = vmul.f32 %v1135, %v1148
      %v1212 = vmul.f32 %v1135, %v1152
      %v1213 = vmul.f32 %v1139, %v1148
      %v1214 = vmul.f32 %v1139, %v1152
      %v1215 = vmul.f32 %v1143, %v1148
      %v1216 = vmul.f32 %v1143, %v1152
      %v1217 = vadd.f32 %v953, %v1153
      %v1218 = vadd.f32 %v954, %v1154
      %v1219 = vadd.f32 %v955, %v1155
      %v1220 = vadd.f32 %v956, %v1156
      %v1221 = vadd.f32 %v957, %v1157
      %v1222 = vadd.f32 %v958, %v1158
      %v1223 = vadd.f32 %v959, %v1159
      %v1224 = vadd.f32 %v960, %v1160
      %v1225 = vadd.f32 %v961, %v1161
      %v1226 = vadd.f32 %v962, %v1162
      %v1227 = vadd.f32 %v963, %v1163
      %v1228 = vadd.f32 %v964, %v1164
      %v1229 = vadd.f32 %v965, %v1165
      %v1230 = vadd.f32 %v966, %v1166
      %v1231 = vadd.f32 %v967, %v1167
      %v1232 = vadd.f32 %v968, %v1168
      %v1233 = vadd.f32 %v969, %v1169
      %v1234 = vadd.f32 %v970, %v1170
      %v1235 = vadd.f32 %v971, %v1171
      %v1236 = vadd.f32 %v972, %v1172
      %v1237 = vadd.f32 %v973, %v1173
      %v1238 = vadd.f32 %v974, %v1174
      %v1239 = vadd.f32 %v975, %v1175
      %v1240 = vadd.f32 %v976, %v1176
      %v1241 = vadd.f32 %v977, %v1177
      %v1242 = vadd.f32 %v978, %v1178
      %v1243 = vadd.f32 %v979, %v1179
      %v1244 = vadd.f32 %v980, %v1180
      %v1245 = vadd.f32 %v981, %v1181
      %v1246 = vadd.f32 %v982, %v1182
      %v1247 = vadd.f32 %v983, %v1183
      %v1248 = vadd.f32 %v984, %v1184
      %v1249 = vadd.f32 %v985, %v1185
      %v1250 = vadd.f32 %v986, %v1186
      %v1251 = vadd.f32 %v987, %v1187
      %v1252 = vadd.f32 %v988, %v1188
      %v1253 = vadd.f32 %v989, %v1189
      %v1254 = vadd.f32 %v990, %v1190
      %v1255 = vadd.f32 %v991, %v1191
      %v1256 = vadd.f32 %v992, %v1192
      %v1257 = vadd.f32 %v993, %v1193
      %v1258 = vadd.f32 %v994, %v1194
      %v1259 = vadd.f32 %v995, %v1195
      %v1260 = vadd.f32 %v996, %v1196
      %v1261 = vadd.f32 %v997, %v1197
      %v1262 = vadd.f32 %v998, %v1198
      %v1263 = vadd.f32 %v999, %v1199
      %v1264 = vadd.f32 %v1000, %v1200
      %v1265 = vadd.f32 %v1001, %v1201
      %v1266 = vadd.f32 %v1002, %v1202
      %v1267 = vadd.f32 %v1003, %v1203
      %v1268 = vadd.f32 %v1004, %v1204
      %v1269 = vadd.f32 %v1005, %v1205
      %v1270 = vadd.f32 %v1006, %v1206
      %v1271 = vadd.f32 %v1007, %v1207
      %v1272 = vadd.f32 %v1008, %v1208
      %v1273 = vadd.f32 %v1009, %v1209
      %v1274 = vadd.f32 %v1010, %v1210
      %v1275 = vadd.f32 %v1011, %v1211
      %v1276 = vadd.f32 %v1012, %v1212
      %v1277 = vadd.f32 %v1013, %v1213
      %v1278 = vadd.f32 %v1014, %v1214
      %v1279 = vadd.f32 %v1015, %v1215
      %v1280 = vadd.f32 %v1016, %v1216
      %vm1281 = vcmask 1046528
      %v1282 = vrot.slane %v341, 1
      %v1283 = vrot.slane %v342, 1
      %v1284 = vsel %vm1281, %v1282, %v1283
      %v1285 = vrot.slane %v343, 1
      %v1286 = vsel %vm1281, %v1283, %v1285
      %v1287 = vrot.slane %v344, 1
      %v1288 = vsel %vm1281, %v1285, %v1287
      %v1289 = vrot.slane %v345, 1
      %v1290 = vsel %vm1281, %v1287, %v1289
      %v1291 = vrot.slane %v346, 1
      %v1292 = vsel %vm1281, %v1289, %v1291
      %v1293 = vrot.slane %v347, 1
      %v1294 = vsel %vm1281, %v1291, %v1293
      %v1295 = vrot.slane %v348, 1
      %v1296 = vsel %vm1281, %v1293, %v1295
      %v1297 = vrot.slane %v349, 1
      %v1298 = vrot.slane %v350, 1
      %v1299 = vsel %vm1281, %v1297, %v1298
      %v1300 = vrot.slane %v351, 1
      %v1301 = vsel %vm1281, %v1298, %v1300
      %v1302 = vrot.slane %v352, 1
      %v1303 = vsel %vm1281, %v1300, %v1302
      %v1304 = vrot.slane %v353, 1
      %v1305 = vsel %vm1281, %v1302, %v1304
      %v1306 = vrot.slane %v354, 1
      %v1307 = vsel %vm1281, %v1304, %v1306
      %v1308 = vrot.slane %v355, 1
      %v1309 = vsel %vm1281, %v1306, %v1308
      %v1310 = vrot.slane %v356, 1
      %v1311 = vsel %vm1281, %v1308, %v1310
      %v1312 = vrot.slane %v357, 1
      %v1313 = vrot.slane %v358, 1
      %v1314 = vsel %vm1281, %v1312, %v1313
      %v1315 = vrot.slane %v359, 1
      %v1316 = vsel %vm1281, %v1313, %v1315
      %v1317 = vrot.slane %v360, 1
      %v1318 = vsel %vm1281, %v1315, %v1317
      %v1319 = vrot.slane %v361, 1
      %v1320 = vsel %vm1281, %v1317, %v1319
      %v1321 = vrot.slane %v362, 1
      %v1322 = vsel %vm1281, %v1319, %v1321
      %v1323 = vrot.slane %v363, 1
      %v1324 = vsel %vm1281, %v1321, %v1323
      %v1325 = vrot.slane %v364, 1
      %v1326 = vsel %vm1281, %v1323, %v1325
      %v1327 = vrot.slane %v365, 1
      %v1328 = vrot.slane %v366, 1
      %v1329 = vsel %vm1281, %v1327, %v1328
      %v1330 = vrot.slane %v367, 1
      %v1331 = vsel %vm1281, %v1328, %v1330
      %v1332 = vrot.slane %v368, 1
      %v1333 = vsel %vm1281, %v1330, %v1332
      %v1334 = vrot.slane %v369, 1
      %v1335 = vsel %vm1281, %v1332, %v1334
      %v1336 = vrot.slane %v370, 1
      %v1337 = vsel %vm1281, %v1334, %v1336
      %v1338 = vrot.slane %v371, 1
      %v1339 = vsel %vm1281, %v1336, %v1338
      %v1340 = vrot.slane %v372, 1
      %v1341 = vsel %vm1281, %v1338, %v1340
      %v1346 = vsel %vm1281, %v1295, 0.0
      %v1347 = vsel %vm1281, %v1310, 0.0
      %v1348 = vsel %vm1281, %v1325, 0.0
      %v1349 = vsel %vm1281, %v1340, 0.0
      %1350 = vset.pattern.permute.xlu0 0
      %1351 = vperm.xlu0 %1350, %v1284
      %v1352 = vpop.permute.xlu0 %1351
      %1354 = vset.pattern.permute.xlu0 0
      %1355 = vperm.xlu0 %1354, %v1286
      %v1356 = vpop.permute.xlu0 %1355
      %1358 = vset.pattern.permute.xlu0 0
      %1359 = vperm.xlu0 %1358, %v1288
      %v1360 = vpop.permute.xlu0 %1359
      %1362 = vset.pattern.permute.xlu0 0
      %1363 = vperm.xlu0 %1362, %v1290
      %v1364 = vpop.permute.xlu0 %1363
      %1366 = vset.pattern.permute.xlu0 0
      %1367 = vperm.xlu0 %1366, %v1292
      %v1368 = vpop.permute.xlu0 %1367
      %1370 = vset.pattern.permute.xlu0 0
      %1371 = vperm.xlu0 %1370, %v1294
      %v1372 = vpop.permute.xlu0 %1371
      %1374 = vset.pattern.permute.xlu0 0
      %1375 = vperm.xlu0 %1374, %v1296
      %v1376 = vpop.permute.xlu0 %1375
      %1379 = vset.pattern.permute.xlu0 0
      %1380 = vperm.xlu0 %1379, %v1346
      %v1381 = vpop.permute.xlu0 %1380
      %1383 = vset.pattern.permute.xlu0 0
      %1384 = vperm.xlu0 %1383, %v1299
      %v1385 = vpop.permute.xlu0 %1384
      %1387 = vset.pattern.permute.xlu0 0
      %1388 = vperm.xlu0 %1387, %v1301
      %v1389 = vpop.permute.xlu0 %1388
      %1391 = vset.pattern.permute.xlu0 0
      %1392 = vperm.xlu0 %1391, %v1303
      %v1393 = vpop.permute.xlu0 %1392
      %1395 = vset.pattern.permute.xlu0 0
      %1396 = vperm.xlu0 %1395, %v1305
      %v1397 = vpop.permute.xlu0 %1396
      %1399 = vset.pattern.permute.xlu0 0
      %1400 = vperm.xlu0 %1399, %v1307
      %v1401 = vpop.permute.xlu0 %1400
      %1403 = vset.pattern.permute.xlu0 0
      %1404 = vperm.xlu0 %1403, %v1309
      %v1405 = vpop.permute.xlu0 %1404
      %1407 = vset.pattern.permute.xlu0 0
      %1408 = vperm.xlu0 %1407, %v1311
      %v1409 = vpop.permute.xlu0 %1408
      %1412 = vset.pattern.permute.xlu0 0
      %1413 = vperm.xlu0 %1412, %v1347
      %v1414 = vpop.permute.xlu0 %1413
      %1416 = vset.pattern.permute.xlu0 0
      %1417 = vperm.xlu0 %1416, %v1314
      %v1418 = vpop.permute.xlu0 %1417
      %1420 = vset.pattern.permute.xlu0 0
      %1421 = vperm.xlu0 %1420, %v1316
      %v1422 = vpop.permute.xlu0 %1421
      %1424 = vset.pattern.permute.xlu0 0
      %1425 = vperm.xlu0 %1424, %v1318
      %v1426 = vpop.permute.xlu0 %1425
      %1428 = vset.pattern.permute.xlu0 0
      %1429 = vperm.xlu0 %1428, %v1320
      %v1430 = vpop.permute.xlu0 %1429
      %1432 = vset.pattern.permute.xlu0 0
      %1433 = vperm.xlu0 %1432, %v1322
      %v1434 = vpop.permute.xlu0 %1433
      %1436 = vset.pattern.permute.xlu0 0
      %1437 = vperm.xlu0 %1436, %v1324
      %v1438 = vpop.permute.xlu0 %1437
      %1440 = vset.pattern.permute.xlu0 0
      %1441 = vperm.xlu0 %1440, %v1326
      %v1442 = vpop.permute.xlu0 %1441
      %1445 = vset.pattern.permute.xlu0 0
      %1446 = vperm.xlu0 %1445, %v1348
      %v1447 = vpop.permute.xlu0 %1446
      %1449 = vset.pattern.permute.xlu0 0
      %1450 = vperm.xlu0 %1449, %v1329
      %v1451 = vpop.permute.xlu0 %1450
      %1453 = vset.pattern.permute.xlu0 0
      %1454 = vperm.xlu0 %1453, %v1331
      %v1455 = vpop.permute.xlu0 %1454
      %1457 = vset.pattern.permute.xlu0 0
      %1458 = vperm.xlu0 %1457, %v1333
      %v1459 = vpop.permute.xlu0 %1458
      %1461 = vset.pattern.permute.xlu0 0
      %1462 = vperm.xlu0 %1461, %v1335
      %v1463 = vpop.permute.xlu0 %1462
      %1465 = vset.pattern.permute.xlu0 0
      %1466 = vperm.xlu0 %1465, %v1337
      %v1467 = vpop.permute.xlu0 %1466
      %1469 = vset.pattern.permute.xlu0 0
      %1470 = vperm.xlu0 %1469, %v1339
      %v1471 = vpop.permute.xlu0 %1470
      %1473 = vset.pattern.permute.xlu0 0
      %1474 = vperm.xlu0 %1473, %v1341
      %v1475 = vpop.permute.xlu0 %1474
      %1478 = vset.pattern.permute.xlu0 0
      %1479 = vperm.xlu0 %1478, %v1349
      %v1480 = vpop.permute.xlu0 %1479
      %v1482 = vlaneseq
      %v1483 = vshrl.u32 %v1482, 7
      %v1484 = vsub.s32 3, %v1483
      %v1485 = vrot.slane %v373, %v1484
      %v1486 = vlaneseq
      %v1487 = vshrl.u32 %v1486, 7
      %v1488 = vsub.s32 3, %v1487
      %v1489 = vrot.slane %v374, %v1488
      %v1490 = vmul.f32 %v1352, %v1485
      %v1491 = vmul.f32 %v1352, %v1489
      %v1492 = vmul.f32 %v1356, %v1485
      %v1493 = vmul.f32 %v1356, %v1489
      %v1494 = vmul.f32 %v1360, %v1485
      %v1495 = vmul.f32 %v1360, %v1489
      %v1496 = vmul.f32 %v1364, %v1485
      %v1497 = vmul.f32 %v1364, %v1489
      %v1498 = vmul.f32 %v1368, %v1485
      %v1499 = vmul.f32 %v1368, %v1489
      %v1500 = vmul.f32 %v1372, %v1485
      %v1501 = vmul.f32 %v1372, %v1489
      %v1502 = vmul.f32 %v1376, %v1485
      %v1503 = vmul.f32 %v1376, %v1489
      %v1504 = vmul.f32 %v1381, %v1485
      %v1505 = vmul.f32 %v1381, %v1489
      %v1506 = vmul.f32 %v1385, %v1485
      %v1507 = vmul.f32 %v1385, %v1489
      %v1508 = vmul.f32 %v1389, %v1485
      %v1509 = vmul.f32 %v1389, %v1489
      %v1510 = vmul.f32 %v1393, %v1485
      %v1511 = vmul.f32 %v1393, %v1489
      %v1512 = vmul.f32 %v1397, %v1485
      %v1513 = vmul.f32 %v1397, %v1489
      %v1514 = vmul.f32 %v1401, %v1485
      %v1515 = vmul.f32 %v1401, %v1489
      %v1516 = vmul.f32 %v1405, %v1485
      %v1517 = vmul.f32 %v1405, %v1489
      %v1518 = vmul.f32 %v1409, %v1485
      %v1519 = vmul.f32 %v1409, %v1489
      %v1520 = vmul.f32 %v1414, %v1485
      %v1521 = vmul.f32 %v1414, %v1489
      %v1522 = vmul.f32 %v1418, %v1485
      %v1523 = vmul.f32 %v1418, %v1489
      %v1524 = vmul.f32 %v1422, %v1485
      %v1525 = vmul.f32 %v1422, %v1489
      %v1526 = vmul.f32 %v1426, %v1485
      %v1527 = vmul.f32 %v1426, %v1489
      %v1528 = vmul.f32 %v1430, %v1485
      %v1529 = vmul.f32 %v1430, %v1489
      %v1530 = vmul.f32 %v1434, %v1485
      %v1531 = vmul.f32 %v1434, %v1489
      %v1532 = vmul.f32 %v1438, %v1485
      %v1533 = vmul.f32 %v1438, %v1489
      %v1534 = vmul.f32 %v1442, %v1485
      %v1535 = vmul.f32 %v1442, %v1489
      %v1536 = vmul.f32 %v1447, %v1485
      %v1537 = vmul.f32 %v1447, %v1489
      %v1538 = vmul.f32 %v1451, %v1485
      %v1539 = vmul.f32 %v1451, %v1489
      %v1540 = vmul.f32 %v1455, %v1485
      %v1541 = vmul.f32 %v1455, %v1489
      %v1542 = vmul.f32 %v1459, %v1485
      %v1543 = vmul.f32 %v1459, %v1489
      %v1544 = vmul.f32 %v1463, %v1485
      %v1545 = vmul.f32 %v1463, %v1489
      %v1546 = vmul.f32 %v1467, %v1485
      %v1547 = vmul.f32 %v1467, %v1489
      %v1548 = vmul.f32 %v1471, %v1485
      %v1549 = vmul.f32 %v1471, %v1489
      %v1550 = vmul.f32 %v1475, %v1485
      %v1551 = vmul.f32 %v1475, %v1489
      %v1552 = vmul.f32 %v1480, %v1485
      %v1553 = vmul.f32 %v1480, %v1489
      %v1554 = vadd.f32 %v1217, %v1490
      %v1555 = vadd.f32 %v1218, %v1491
      %v1556 = vadd.f32 %v1219, %v1492
      %v1557 = vadd.f32 %v1220, %v1493
      %v1558 = vadd.f32 %v1221, %v1494
      %v1559 = vadd.f32 %v1222, %v1495
      %v1560 = vadd.f32 %v1223, %v1496
      %v1561 = vadd.f32 %v1224, %v1497
      %v1562 = vadd.f32 %v1225, %v1498
      %v1563 = vadd.f32 %v1226, %v1499
      %v1564 = vadd.f32 %v1227, %v1500
      %v1565 = vadd.f32 %v1228, %v1501
      %v1566 = vadd.f32 %v1229, %v1502
      %v1567 = vadd.f32 %v1230, %v1503
      %v1568 = vadd.f32 %v1231, %v1504
      %v1569 = vadd.f32 %v1232, %v1505
      %v1570 = vadd.f32 %v1233, %v1506
      %v1571 = vadd.f32 %v1234, %v1507
      %v1572 = vadd.f32 %v1235, %v1508
      %v1573 = vadd.f32 %v1236, %v1509
      %v1574 = vadd.f32 %v1237, %v1510
      %v1575 = vadd.f32 %v1238, %v1511
      %v1576 = vadd.f32 %v1239, %v1512
      %v1577 = vadd.f32 %v1240, %v1513
      %v1578 = vadd.f32 %v1241, %v1514
      %v1579 = vadd.f32 %v1242, %v1515
      %v1580 = vadd.f32 %v1243, %v1516
      %v1581 = vadd.f32 %v1244, %v1517
      %v1582 = vadd.f32 %v1245, %v1518
      %v1583 = vadd.f32 %v1246, %v1519
      %v1584 = vadd.f32 %v1247, %v1520
      %v1585 = vadd.f32 %v1248, %v1521
      %v1586 = vadd.f32 %v1249, %v1522
      %v1587 = vadd.f32 %v1250, %v1523
      %v1588 = vadd.f32 %v1251, %v1524
      %v1589 = vadd.f32 %v1252, %v1525
      %v1590 = vadd.f32 %v1253, %v1526
      %v1591 = vadd.f32 %v1254, %v1527
      %v1592 = vadd.f32 %v1255, %v1528
      %v1593 = vadd.f32 %v1256, %v1529
      %v1594 = vadd.f32 %v1257, %v1530
      %v1595 = vadd.f32 %v1258, %v1531
      %v1596 = vadd.f32 %v1259, %v1532
      %v1597 = vadd.f32 %v1260, %v1533
      %v1598 = vadd.f32 %v1261, %v1534
      %v1599 = vadd.f32 %v1262, %v1535
      %v1600 = vadd.f32 %v1263, %v1536
      %v1601 = vadd.f32 %v1264, %v1537
      %v1602 = vadd.f32 %v1265, %v1538
      %v1603 = vadd.f32 %v1266, %v1539
      %v1604 = vadd.f32 %v1267, %v1540
      %v1605 = vadd.f32 %v1268, %v1541
      %v1606 = vadd.f32 %v1269, %v1542
      %v1607 = vadd.f32 %v1270, %v1543
      %v1608 = vadd.f32 %v1271, %v1544
      %v1609 = vadd.f32 %v1272, %v1545
      %v1610 = vadd.f32 %v1273, %v1546
      %v1611 = vadd.f32 %v1274, %v1547
      %v1612 = vadd.f32 %v1275, %v1548
      %v1613 = vadd.f32 %v1276, %v1549
      %v1614 = vadd.f32 %v1277, %v1550
      %v1615 = vadd.f32 %v1278, %v1551
      %v1616 = vadd.f32 %v1279, %v1552
      %v1617 = vadd.f32 %v1280, %v1553
      %vm1618 = vcmask 1045504
      %v1619 = vrot.slane %v341, 2
      %v1620 = vrot.slane %v342, 2
      %v1621 = vsel %vm1618, %v1619, %v1620
      %v1622 = vrot.slane %v343, 2
      %v1623 = vsel %vm1618, %v1620, %v1622
      %v1624 = vrot.slane %v344, 2
      %v1625 = vsel %vm1618, %v1622, %v1624
      %v1626 = vrot.slane %v345, 2
      %v1627 = vsel %vm1618, %v1624, %v1626
      %v1628 = vrot.slane %v346, 2
      %v1629 = vsel %vm1618, %v1626, %v1628
      %v1630 = vrot.slane %v347, 2
      %v1631 = vsel %vm1618, %v1628, %v1630
      %v1632 = vrot.slane %v348, 2
      %v1633 = vsel %vm1618, %v1630, %v1632
      %v1634 = vrot.slane %v349, 2
      %v1635 = vrot.slane %v350, 2
      %v1636 = vsel %vm1618, %v1634, %v1635
      %v1637 = vrot.slane %v351, 2
      %v1638 = vsel %vm1618, %v1635, %v1637
      %v1639 = vrot.slane %v352, 2
      %v1640 = vsel %vm1618, %v1637, %v1639
      %v1641 = vrot.slane %v353, 2
      %v1642 = vsel %vm1618, %v1639, %v1641
      %v1643 = vrot.slane %v354, 2
      %v1644 = vsel %vm1618, %v1641, %v1643
      %v1645 = vrot.slane %v355, 2
      %v1646 = vsel %vm1618, %v1643, %v1645
      %v1647 = vrot.slane %v356, 2
      %v1648 = vsel %vm1618, %v1645, %v1647
      %v1649 = vrot.slane %v357, 2
      %v1650 = vrot.slane %v358, 2
      %v1651 = vsel %vm1618, %v1649, %v1650
      %v1652 = vrot.slane %v359, 2
      %v1653 = vsel %vm1618, %v1650, %v1652
      %v1654 = vrot.slane %v360, 2
      %v1655 = vsel %vm1618, %v1652, %v1654
      %v1656 = vrot.slane %v361, 2
      %v1657 = vsel %vm1618, %v1654, %v1656
      %v1658 = vrot.slane %v362, 2
      %v1659 = vsel %vm1618, %v1656, %v1658
      %v1660 = vrot.slane %v363, 2
      %v1661 = vsel %vm1618, %v1658, %v1660
      %v1662 = vrot.slane %v364, 2
      %v1663 = vsel %vm1618, %v1660, %v1662
      %v1664 = vrot.slane %v365, 2
      %v1665 = vrot.slane %v366, 2
      %v1666 = vsel %vm1618, %v1664, %v1665
      %v1667 = vrot.slane %v367, 2
      %v1668 = vsel %vm1618, %v1665, %v1667
      %v1669 = vrot.slane %v368, 2
      %v1670 = vsel %vm1618, %v1667, %v1669
      %v1671 = vrot.slane %v369, 2
      %v1672 = vsel %vm1618, %v1669, %v1671
      %v1673 = vrot.slane %v370, 2
      %v1674 = vsel %vm1618, %v1671, %v1673
      %v1675 = vrot.slane %v371, 2
      %v1676 = vsel %vm1618, %v1673, %v1675
      %v1677 = vrot.slane %v372, 2
      %v1678 = vsel %vm1618, %v1675, %v1677
      %v1683 = vsel %vm1618, %v1632, 0.0
      %v1684 = vsel %vm1618, %v1647, 0.0
      %v1685 = vsel %vm1618, %v1662, 0.0
      %v1686 = vsel %vm1618, %v1677, 0.0
      %1687 = vset.pattern.permute.xlu0 0
      %1688 = vperm.xlu0 %1687, %v1621
      %v1689 = vpop.permute.xlu0 %1688
      %1691 = vset.pattern.permute.xlu0 0
      %1692 = vperm.xlu0 %1691, %v1623
      %v1693 = vpop.permute.xlu0 %1692
      %1695 = vset.pattern.permute.xlu0 0
      %1696 = vperm.xlu0 %1695, %v1625
      %v1697 = vpop.permute.xlu0 %1696
      %1699 = vset.pattern.permute.xlu0 0
      %1700 = vperm.xlu0 %1699, %v1627
      %v1701 = vpop.permute.xlu0 %1700
      %1703 = vset.pattern.permute.xlu0 0
      %1704 = vperm.xlu0 %1703, %v1629
      %v1705 = vpop.permute.xlu0 %1704
      %1707 = vset.pattern.permute.xlu0 0
      %1708 = vperm.xlu0 %1707, %v1631
      %v1709 = vpop.permute.xlu0 %1708
      %1711 = vset.pattern.permute.xlu0 0
      %1712 = vperm.xlu0 %1711, %v1633
      %v1713 = vpop.permute.xlu0 %1712
      %1716 = vset.pattern.permute.xlu0 0
      %1717 = vperm.xlu0 %1716, %v1683
      %v1718 = vpop.permute.xlu0 %1717
      %1720 = vset.pattern.permute.xlu0 0
      %1721 = vperm.xlu0 %1720, %v1636
      %v1722 = vpop.permute.xlu0 %1721
      %1724 = vset.pattern.permute.xlu0 0
      %1725 = vperm.xlu0 %1724, %v1638
      %v1726 = vpop.permute.xlu0 %1725
      %1728 = vset.pattern.permute.xlu0 0
      %1729 = vperm.xlu0 %1728, %v1640
      %v1730 = vpop.permute.xlu0 %1729
      %1732 = vset.pattern.permute.xlu0 0
      %1733 = vperm.xlu0 %1732, %v1642
      %v1734 = vpop.permute.xlu0 %1733
      %1736 = vset.pattern.permute.xlu0 0
      %1737 = vperm.xlu0 %1736, %v1644
      %v1738 = vpop.permute.xlu0 %1737
      %1740 = vset.pattern.permute.xlu0 0
      %1741 = vperm.xlu0 %1740, %v1646
      %v1742 = vpop.permute.xlu0 %1741
      %1744 = vset.pattern.permute.xlu0 0
      %1745 = vperm.xlu0 %1744, %v1648
      %v1746 = vpop.permute.xlu0 %1745
      %1749 = vset.pattern.permute.xlu0 0
      %1750 = vperm.xlu0 %1749, %v1684
      %v1751 = vpop.permute.xlu0 %1750
      %1753 = vset.pattern.permute.xlu0 0
      %1754 = vperm.xlu0 %1753, %v1651
      %v1755 = vpop.permute.xlu0 %1754
      %1757 = vset.pattern.permute.xlu0 0
      %1758 = vperm.xlu0 %1757, %v1653
      %v1759 = vpop.permute.xlu0 %1758
      %1761 = vset.pattern.permute.xlu0 0
      %1762 = vperm.xlu0 %1761, %v1655
      %v1763 = vpop.permute.xlu0 %1762
      %1765 = vset.pattern.permute.xlu0 0
      %1766 = vperm.xlu0 %1765, %v1657
      %v1767 = vpop.permute.xlu0 %1766
      %1769 = vset.pattern.permute.xlu0 0
      %1770 = vperm.xlu0 %1769, %v1659
      %v1771 = vpop.permute.xlu0 %1770
      %1773 = vset.pattern.permute.xlu0 0
      %1774 = vperm.xlu0 %1773, %v1661
      %v1775 = vpop.permute.xlu0 %1774
      %1777 = vset.pattern.permute.xlu0 0
      %1778 = vperm.xlu0 %1777, %v1663
      %v1779 = vpop.permute.xlu0 %1778
      %1782 = vset.pattern.permute.xlu0 0
      %1783 = vperm.xlu0 %1782, %v1685
      %v1784 = vpop.permute.xlu0 %1783
      %1786 = vset.pattern.permute.xlu0 0
      %1787 = vperm.xlu0 %1786, %v1666
      %v1788 = vpop.permute.xlu0 %1787
      %1790 = vset.pattern.permute.xlu0 0
      %1791 = vperm.xlu0 %1790, %v1668
      %v1792 = vpop.permute.xlu0 %1791
      %1794 = vset.pattern.permute.xlu0 0
      %1795 = vperm.xlu0 %1794, %v1670
      %v1796 = vpop.permute.xlu0 %1795
      %1798 = vset.pattern.permute.xlu0 0
      %1799 = vperm.xlu0 %1798, %v1672
      %v1800 = vpop.permute.xlu0 %1799
      %1802 = vset.pattern.permute.xlu0 0
      %1803 = vperm.xlu0 %1802, %v1674
      %v1804 = vpop.permute.xlu0 %1803
      %1806 = vset.pattern.permute.xlu0 0
      %1807 = vperm.xlu0 %1806, %v1676
      %v1808 = vpop.permute.xlu0 %1807
      %1810 = vset.pattern.permute.xlu0 0
      %1811 = vperm.xlu0 %1810, %v1678
      %v1812 = vpop.permute.xlu0 %1811
      %1815 = vset.pattern.permute.xlu0 0
      %1816 = vperm.xlu0 %1815, %v1686
      %v1817 = vpop.permute.xlu0 %1816
      %v1819 = vlaneseq
      %v1820 = vshrl.u32 %v1819, 7
      %v1821 = vsub.s32 4, %v1820
      %v1822 = vrot.slane %v373, %v1821
      %v1823 = vlaneseq
      %v1824 = vshrl.u32 %v1823, 7
      %v1825 = vsub.s32 4, %v1824
      %v1826 = vrot.slane %v374, %v1825
      %v1827 = vmul.f32 %v1689, %v1822
      %v1828 = vmul.f32 %v1689, %v1826
      %v1829 = vmul.f32 %v1693, %v1822
      %v1830 = vmul.f32 %v1693, %v1826
      %v1831 = vmul.f32 %v1697, %v1822
      %v1832 = vmul.f32 %v1697, %v1826
      %v1833 = vmul.f32 %v1701, %v1822
      %v1834 = vmul.f32 %v1701, %v1826
      %v1835 = vmul.f32 %v1705, %v1822
      %v1836 = vmul.f32 %v1705, %v1826
      %v1837 = vmul.f32 %v1709, %v1822
      %v1838 = vmul.f32 %v1709, %v1826
      %v1839 = vmul.f32 %v1713, %v1822
      %v1840 = vmul.f32 %v1713, %v1826
      %v1841 = vmul.f32 %v1718, %v1822
      %v1842 = vmul.f32 %v1718, %v1826
      %v1843 = vmul.f32 %v1722, %v1822
      %v1844 = vmul.f32 %v1722, %v1826
      %v1845 = vmul.f32 %v1726, %v1822
      %v1846 = vmul.f32 %v1726, %v1826
      %v1847 = vmul.f32 %v1730, %v1822
      %v1848 = vmul.f32 %v1730, %v1826
      %v1849 = vmul.f32 %v1734, %v1822
      %v1850 = vmul.f32 %v1734, %v1826
      %v1851 = vmul.f32 %v1738, %v1822
      %v1852 = vmul.f32 %v1738, %v1826
      %v1853 = vmul.f32 %v1742, %v1822
      %v1854 = vmul.f32 %v1742, %v1826
      %v1855 = vmul.f32 %v1746, %v1822
      %v1856 = vmul.f32 %v1746, %v1826
      %v1857 = vmul.f32 %v1751, %v1822
      %v1858 = vmul.f32 %v1751, %v1826
      %v1859 = vmul.f32 %v1755, %v1822
      %v1860 = vmul.f32 %v1755, %v1826
      %v1861 = vmul.f32 %v1759, %v1822
      %v1862 = vmul.f32 %v1759, %v1826
      %v1863 = vmul.f32 %v1763, %v1822
      %v1864 = vmul.f32 %v1763, %v1826
      %v1865 = vmul.f32 %v1767, %v1822
      %v1866 = vmul.f32 %v1767, %v1826
      %v1867 = vmul.f32 %v1771, %v1822
      %v1868 = vmul.f32 %v1771, %v1826
      %v1869 = vmul.f32 %v1775, %v1822
      %v1870 = vmul.f32 %v1775, %v1826
      %v1871 = vmul.f32 %v1779, %v1822
      %v1872 = vmul.f32 %v1779, %v1826
      %v1873 = vmul.f32 %v1784, %v1822
      %v1874 = vmul.f32 %v1784, %v1826
      %v1875 = vmul.f32 %v1788, %v1822
      %v1876 = vmul.f32 %v1788, %v1826
      %v1877 = vmul.f32 %v1792, %v1822
      %v1878 = vmul.f32 %v1792, %v1826
      %v1879 = vmul.f32 %v1796, %v1822
      %v1880 = vmul.f32 %v1796, %v1826
      %v1881 = vmul.f32 %v1800, %v1822
      %v1882 = vmul.f32 %v1800, %v1826
      %v1883 = vmul.f32 %v1804, %v1822
      %v1884 = vmul.f32 %v1804, %v1826
      %v1885 = vmul.f32 %v1808, %v1822
      %v1886 = vmul.f32 %v1808, %v1826
      %v1887 = vmul.f32 %v1812, %v1822
      %v1888 = vmul.f32 %v1812, %v1826
      %v1889 = vmul.f32 %v1817, %v1822
      %v1890 = vmul.f32 %v1817, %v1826
      %v1891 = vadd.f32 %v1554, %v1827
      %v1892 = vadd.f32 %v1555, %v1828
      %v1893 = vadd.f32 %v1556, %v1829
      %v1894 = vadd.f32 %v1557, %v1830
      %v1895 = vadd.f32 %v1558, %v1831
      %v1896 = vadd.f32 %v1559, %v1832
      %v1897 = vadd.f32 %v1560, %v1833
      %v1898 = vadd.f32 %v1561, %v1834
      %v1899 = vadd.f32 %v1562, %v1835
      %v1900 = vadd.f32 %v1563, %v1836
      %v1901 = vadd.f32 %v1564, %v1837
      %v1902 = vadd.f32 %v1565, %v1838
      %v1903 = vadd.f32 %v1566, %v1839
      %v1904 = vadd.f32 %v1567, %v1840
      %v1905 = vadd.f32 %v1568, %v1841
      %v1906 = vadd.f32 %v1569, %v1842
      %v1907 = vadd.f32 %v1570, %v1843
      %v1908 = vadd.f32 %v1571, %v1844
      %v1909 = vadd.f32 %v1572, %v1845
      %v1910 = vadd.f32 %v1573, %v1846
      %v1911 = vadd.f32 %v1574, %v1847
      %v1912 = vadd.f32 %v1575, %v1848
      %v1913 = vadd.f32 %v1576, %v1849
      %v1914 = vadd.f32 %v1577, %v1850
      %v1915 = vadd.f32 %v1578, %v1851
      %v1916 = vadd.f32 %v1579, %v1852
      %v1917 = vadd.f32 %v1580, %v1853
      %v1918 = vadd.f32 %v1581, %v1854
      %v1919 = vadd.f32 %v1582, %v1855
      %v1920 = vadd.f32 %v1583, %v1856
      %v1921 = vadd.f32 %v1584, %v1857
      %v1922 = vadd.f32 %v1585, %v1858
      %v1923 = vadd.f32 %v1586, %v1859
      %v1924 = vadd.f32 %v1587, %v1860
      %v1925 = vadd.f32 %v1588, %v1861
      %v1926 = vadd.f32 %v1589, %v1862
      %v1927 = vadd.f32 %v1590, %v1863
      %v1928 = vadd.f32 %v1591, %v1864
      %v1929 = vadd.f32 %v1592, %v1865
      %v1930 = vadd.f32 %v1593, %v1866
      %v1931 = vadd.f32 %v1594, %v1867
      %v1932 = vadd.f32 %v1595, %v1868
      %v1933 = vadd.f32 %v1596, %v1869
      %v1934 = vadd.f32 %v1597, %v1870
      %v1935 = vadd.f32 %v1598, %v1871
      %v1936 = vadd.f32 %v1599, %v1872
      %v1937 = vadd.f32 %v1600, %v1873
      %v1938 = vadd.f32 %v1601, %v1874
      %v1939 = vadd.f32 %v1602, %v1875
      %v1940 = vadd.f32 %v1603, %v1876
      %v1941 = vadd.f32 %v1604, %v1877
      %v1942 = vadd.f32 %v1605, %v1878
      %v1943 = vadd.f32 %v1606, %v1879
      %v1944 = vadd.f32 %v1607, %v1880
      %v1945 = vadd.f32 %v1608, %v1881
      %v1946 = vadd.f32 %v1609, %v1882
      %v1947 = vadd.f32 %v1610, %v1883
      %v1948 = vadd.f32 %v1611, %v1884
      %v1949 = vadd.f32 %v1612, %v1885
      %v1950 = vadd.f32 %v1613, %v1886
      %v1951 = vadd.f32 %v1614, %v1887
      %v1952 = vadd.f32 %v1615, %v1888
      %v1953 = vadd.f32 %v1616, %v1889
      %v1954 = vadd.f32 %v1617, %v1890
      %v1955 = vld [vmem:[%s2] sm:$0x3]
      %v1957 = vlaneseq
      %v1958 = vshrl.u32 %v1957, 7
      %v1959 = vsub.s32 0, %v1958
      %v1960 = vrot.slane %v1955, %v1959
      %v1961 = vlaneseq
      %v1962 = vshrl.u32 %v1961, 7
      %v1963 = vsub.s32 1, %v1962
      %v1964 = vrot.slane %v1955, %v1963
      %v1967 = vadd.f32 %v1891, %v1960
      %v1968 = vadd.f32 %v1892, %v1964
      %v1969 = vadd.f32 %v1893, %v1960
      %v1970 = vadd.f32 %v1894, %v1964
      %v1971 = vadd.f32 %v1895, %v1960
      %v1972 = vadd.f32 %v1896, %v1964
      %v1973 = vadd.f32 %v1897, %v1960
      %v1974 = vadd.f32 %v1898, %v1964
      %v1975 = vadd.f32 %v1899, %v1960
      %v1976 = vadd.f32 %v1900, %v1964
      %v1977 = vadd.f32 %v1901, %v1960
      %v1978 = vadd.f32 %v1902, %v1964
      %v1979 = vadd.f32 %v1903, %v1960
      %v1980 = vadd.f32 %v1904, %v1964
      %v1981 = vadd.f32 %v1905, %v1960
      %v1982 = vadd.f32 %v1906, %v1964
      %v1983 = vadd.f32 %v1907, %v1960
      %v1984 = vadd.f32 %v1908, %v1964
      %v1985 = vadd.f32 %v1909, %v1960
      %v1986 = vadd.f32 %v1910, %v1964
      %v1987 = vadd.f32 %v1911, %v1960
      %v1988 = vadd.f32 %v1912, %v1964
      %v1989 = vadd.f32 %v1913, %v1960
      %v1990 = vadd.f32 %v1914, %v1964
      %v1991 = vadd.f32 %v1915, %v1960
      %v1992 = vadd.f32 %v1916, %v1964
      %v1993 = vadd.f32 %v1917, %v1960
      %v1994 = vadd.f32 %v1918, %v1964
      %v1995 = vadd.f32 %v1919, %v1960
      %v1996 = vadd.f32 %v1920, %v1964
      %v1997 = vadd.f32 %v1921, %v1960
      %v1998 = vadd.f32 %v1922, %v1964
      %v1999 = vadd.f32 %v1923, %v1960
      %v2000 = vadd.f32 %v1924, %v1964
      %v2001 = vadd.f32 %v1925, %v1960
      %v2002 = vadd.f32 %v1926, %v1964
      %v2003 = vadd.f32 %v1927, %v1960
      %v2004 = vadd.f32 %v1928, %v1964
      %v2005 = vadd.f32 %v1929, %v1960
      %v2006 = vadd.f32 %v1930, %v1964
      %v2007 = vadd.f32 %v1931, %v1960
      %v2008 = vadd.f32 %v1932, %v1964
      %v2009 = vadd.f32 %v1933, %v1960
      %v2010 = vadd.f32 %v1934, %v1964
      %v2011 = vadd.f32 %v1935, %v1960
      %v2012 = vadd.f32 %v1936, %v1964
      %v2013 = vadd.f32 %v1937, %v1960
      %v2014 = vadd.f32 %v1938, %v1964
      %v2015 = vadd.f32 %v1939, %v1960
      %v2016 = vadd.f32 %v1940, %v1964
      %v2017 = vadd.f32 %v1941, %v1960
      %v2018 = vadd.f32 %v1942, %v1964
      %v2019 = vadd.f32 %v1943, %v1960
      %v2020 = vadd.f32 %v1944, %v1964
      %v2021 = vadd.f32 %v1945, %v1960
      %v2022 = vadd.f32 %v1946, %v1964
      %v2023 = vadd.f32 %v1947, %v1960
      %v2024 = vadd.f32 %v1948, %v1964
      %v2025 = vadd.f32 %v1949, %v1960
      %v2026 = vadd.f32 %v1950, %v1964
      %v2027 = vadd.f32 %v1951, %v1960
      %v2028 = vadd.f32 %v1952, %v1964
      %v2029 = vadd.f32 %v1953, %v1960
      %v2030 = vadd.f32 %v1954, %v1964
      %v2031 = vmax.f32 %v1967, 0.0
      %v2032 = vmax.f32 %v1968, 0.0
      %v2033 = vmax.f32 %v1969, 0.0
      %v2034 = vmax.f32 %v1970, 0.0
      %v2035 = vmax.f32 %v1971, 0.0
      %v2036 = vmax.f32 %v1972, 0.0
      %v2037 = vmax.f32 %v1973, 0.0
      %v2038 = vmax.f32 %v1974, 0.0
      %v2039 = vmax.f32 %v1975, 0.0
      %v2040 = vmax.f32 %v1976, 0.0
      %v2041 = vmax.f32 %v1977, 0.0
      %v2042 = vmax.f32 %v1978, 0.0
      %v2043 = vmax.f32 %v1979, 0.0
      %v2044 = vmax.f32 %v1980, 0.0
      %v2045 = vmax.f32 %v1981, 0.0
      %v2046 = vmax.f32 %v1982, 0.0
      %v2047 = vmax.f32 %v1983, 0.0
      %v2048 = vmax.f32 %v1984, 0.0
      %v2049 = vmax.f32 %v1985, 0.0
      %v2050 = vmax.f32 %v1986, 0.0
      %v2051 = vmax.f32 %v1987, 0.0
      %v2052 = vmax.f32 %v1988, 0.0
      %v2053 = vmax.f32 %v1989, 0.0
      %v2054 = vmax.f32 %v1990, 0.0
      %v2055 = vmax.f32 %v1991, 0.0
      %v2056 = vmax.f32 %v1992, 0.0
      %v2057 = vmax.f32 %v1993, 0.0
      %v2058 = vmax.f32 %v1994, 0.0
      %v2059 = vmax.f32 %v1995, 0.0
      %v2060 = vmax.f32 %v1996, 0.0
      %v2061 = vmax.f32 %v1997, 0.0
      %v2062 = vmax.f32 %v1998, 0.0
      %v2063 = vmax.f32 %v1999, 0.0
      %v2064 = vmax.f32 %v2000, 0.0
      %v2065 = vmax.f32 %v2001, 0.0
      %v2066 = vmax.f32 %v2002, 0.0
      %v2067 = vmax.f32 %v2003, 0.0
      %v2068 = vmax.f32 %v2004, 0.0
      %v2069 = vmax.f32 %v2005, 0.0
      %v2070 = vmax.f32 %v2006, 0.0
      %v2071 = vmax.f32 %v2007, 0.0
      %v2072 = vmax.f32 %v2008, 0.0
      %v2073 = vmax.f32 %v2009, 0.0
      %v2074 = vmax.f32 %v2010, 0.0
      %v2075 = vmax.f32 %v2011, 0.0
      %v2076 = vmax.f32 %v2012, 0.0
      %v2077 = vmax.f32 %v2013, 0.0
      %v2078 = vmax.f32 %v2014, 0.0
      %v2079 = vmax.f32 %v2015, 0.0
      %v2080 = vmax.f32 %v2016, 0.0
      %v2081 = vmax.f32 %v2017, 0.0
      %v2082 = vmax.f32 %v2018, 0.0
      %v2083 = vmax.f32 %v2019, 0.0
      %v2084 = vmax.f32 %v2020, 0.0
      %v2085 = vmax.f32 %v2021, 0.0
      %v2086 = vmax.f32 %v2022, 0.0
      %v2087 = vmax.f32 %v2023, 0.0
      %v2088 = vmax.f32 %v2024, 0.0
      %v2089 = vmax.f32 %v2025, 0.0
      %v2090 = vmax.f32 %v2026, 0.0
      %v2091 = vmax.f32 %v2027, 0.0
      %v2092 = vmax.f32 %v2028, 0.0
      %v2093 = vmax.f32 %v2029, 0.0
      %v2094 = vmax.f32 %v2030, 0.0
      %v2095 = vld [vmem:[%s3] sm:$0xff]
      %v2096 = vld [vmem:[%s3 + $0x8] sm:$0xff]
      %v2097 = vld [vmem:[%s3 + $0x10] sm:$0xff]
      %v2098 = vld [vmem:[%s3 + $0x18] sm:$0xff]
      %v2099 = vld [vmem:[%s3 + $0x20] sm:$0xff]
      %v2100 = vld [vmem:[%s3 + $0x28] sm:$0xff]
      %v2101 = vld [vmem:[%s3 + $0x30] sm:$0xff]
      %v2102 = vld [vmem:[%s3 + $0x38] sm:$0xff]
      %v2103 = vld [vmem:[%s3 + $0x40] sm:$0xff]
      %v2104 = vld [vmem:[%s3 + $0x48] sm:$0xff]
      %v2105 = vld [vmem:[%s3 + $0x50] sm:$0xff]
      %v2106 = vld [vmem:[%s3 + $0x58] sm:$0xff]
      %v2107 = vld [vmem:[%s3 + $0x60] sm:$0xff]
      %v2108 = vld [vmem:[%s3 + $0x68] sm:$0xff]
      %v2109 = vld [vmem:[%s3 + $0x70] sm:$0xff]
      %v2110 = vld [vmem:[%s3 + $0x78] sm:$0xff]
      %v2111 = vld [vmem:[%s3 + $0x80] sm:$0xff]
      %v2112 = vld [vmem:[%s3 + $0x88] sm:$0xff]
      %v2113 = vld [vmem:[%s3 + $0x90] sm:$0xff]
      %v2114 = vld [vmem:[%s3 + $0x98] sm:$0xff]
      %v2115 = vld [vmem:[%s3 + $0xa0] sm:$0xff]
      %v2116 = vld [vmem:[%s3 + $0xa8] sm:$0xff]
      %v2117 = vld [vmem:[%s3 + $0xb0] sm:$0xff]
      %v2118 = vld [vmem:[%s3 + $0xb8] sm:$0xff]
      %v2119 = vld [vmem:[%s3 + $0xc0] sm:$0xff]
      %v2120 = vld [vmem:[%s3 + $0xc8] sm:$0xff]
      %v2121 = vld [vmem:[%s3 + $0xd0] sm:$0xff]
      %v2122 = vld [vmem:[%s3 + $0xd8] sm:$0xff]
      %v2123 = vld [vmem:[%s3 + $0xe0] sm:$0xff]
      %v2124 = vld [vmem:[%s3 + $0xe8] sm:$0xff]
      %v2125 = vld [vmem:[%s3 + $0xf0] sm:$0xff]
      %v2126 = vld [vmem:[%s3 + $0xf8] sm:$0xff]
      %v2127 = vld [vmem:[%s3 + $0x100] sm:$0xff]
      %v2128 = vld [vmem:[%s3 + $0x108] sm:$0xff]
      %v2129 = vld [vmem:[%s3 + $0x110] sm:$0xff]
      %v2130 = vld [vmem:[%s3 + $0x118] sm:$0xff]
      %v2131 = vld [vmem:[%s3 + $0x120] sm:$0xff]
      %v2132 = vld [vmem:[%s3 + $0x128] sm:$0xff]
      %v2133 = vld [vmem:[%s3 + $0x130] sm:$0xff]
      %v2134 = vld [vmem:[%s3 + $0x138] sm:$0xff]
      %v2135 = vld [vmem:[%s3 + $0x140] sm:$0xff]
      %v2136 = vld [vmem:[%s3 + $0x148] sm:$0xff]
      %v2137 = vld [vmem:[%s3 + $0x150] sm:$0xff]
      %v2138 = vld [vmem:[%s3 + $0x158] sm:$0xff]
      %v2139 = vld [vmem:[%s3 + $0x160] sm:$0xff]
      %v2140 = vld [vmem:[%s3 + $0x168] sm:$0xff]
      %v2141 = vld [vmem:[%s3 + $0x170] sm:$0xff]
      %v2142 = vld [vmem:[%s3 + $0x178] sm:$0xff]
      %v2143 = vld [vmem:[%s3 + $0x180] sm:$0xff]
      %v2144 = vld [vmem:[%s3 + $0x188] sm:$0xff]
      %v2145 = vld [vmem:[%s3 + $0x190] sm:$0xff]
      %v2146 = vld [vmem:[%s3 + $0x198] sm:$0xff]
      %v2147 = vld [vmem:[%s3 + $0x1a0] sm:$0xff]
      %v2148 = vld [vmem:[%s3 + $0x1a8] sm:$0xff]
      %v2149 = vld [vmem:[%s3 + $0x1b0] sm:$0xff]
      %v2150 = vld [vmem:[%s3 + $0x1b8] sm:$0xff]
      %v2151 = vld [vmem:[%s3 + $0x1c0] sm:$0xff]
      %v2152 = vld [vmem:[%s3 + $0x1c8] sm:$0xff]
      %v2153 = vld [vmem:[%s3 + $0x1d0] sm:$0xff]
      %v2154 = vld [vmem:[%s3 + $0x1d8] sm:$0xff]
      %v2155 = vld [vmem:[%s3 + $0x1e0] sm:$0xff]
      %v2156 = vld [vmem:[%s3 + $0x1e8] sm:$0xff]
      %v2157 = vld [vmem:[%s3 + $0x1f0] sm:$0xff]
      %v2158 = vld [vmem:[%s3 + $0x1f8] sm:$0xff]
      %v2159 = vld [vmem:[%s3 + $0x200] sm:$0xff]
      %v2160 = vld [vmem:[%s3 + $0x208] sm:$0xff]
      %v2161 = vld [vmem:[%s3 + $0x210] sm:$0xff]
      %v2162 = vld [vmem:[%s3 + $0x218] sm:$0xff]
      %v2163 = vld [vmem:[%s3 + $0x220] sm:$0xff]
      %v2164 = vld [vmem:[%s3 + $0x228] sm:$0xff]
      %v2165 = vld [vmem:[%s3 + $0x230] sm:$0xff]
      %v2166 = vld [vmem:[%s3 + $0x238] sm:$0xff]
      %v2167 = vld [vmem:[%s3 + $0x240] sm:$0xff]
      %v2168 = vld [vmem:[%s3 + $0x248] sm:$0xff]
      %v2169 = vld [vmem:[%s3 + $0x250] sm:$0xff]
      %v2170 = vld [vmem:[%s3 + $0x258] sm:$0xff]
      %v2171 = vld [vmem:[%s3 + $0x260] sm:$0xff]
      %v2172 = vld [vmem:[%s3 + $0x268] sm:$0xff]
      %v2173 = vld [vmem:[%s3 + $0x270] sm:$0xff]
      %v2174 = vld [vmem:[%s3 + $0x278] sm:$0xff]
      %v2175 = vld [vmem:[%s3 + $0x280] sm:$0xff]
      %v2176 = vld [vmem:[%s3 + $0x288] sm:$0xff]
      %v2177 = vld [vmem:[%s3 + $0x290] sm:$0xff]
      %v2178 = vld [vmem:[%s3 + $0x298] sm:$0xff]
      %v2179 = vld [vmem:[%s3 + $0x2a0] sm:$0xff]
      %v2180 = vld [vmem:[%s3 + $0x2a8] sm:$0xff]
      %v2181 = vld [vmem:[%s3 + $0x2b0] sm:$0xff]
      %v2182 = vld [vmem:[%s3 + $0x2b8] sm:$0xff]
      %v2183 = vld [vmem:[%s3 + $0x2c0] sm:$0xff]
      %v2184 = vld [vmem:[%s3 + $0x2c8] sm:$0xff]
      %v2185 = vld [vmem:[%s3 + $0x2d0] sm:$0xff]
      %v2186 = vld [vmem:[%s3 + $0x2d8] sm:$0xff]
      %v2187 = vld [vmem:[%s3 + $0x2e0] sm:$0xff]
      %v2188 = vld [vmem:[%s3 + $0x2e8] sm:$0xff]
      %v2189 = vld [vmem:[%s3 + $0x2f0] sm:$0xff]
      %v2190 = vld [vmem:[%s3 + $0x2f8] sm:$0xff]
      %v2191 = vld [vmem:[%s4] sm:$0x1]
      %v2256 = vrot.slane %v2031, 7
      %v2257 = vrot.slane %v2032, 7
      %v2258 = vrot.slane %v2033, 7
      %v2259 = vsel %vm680, %v2256, %v2258
      %v2260 = vrot.slane %v2034, 7
      %v2261 = vsel %vm680, %v2257, %v2260
      %v2262 = vrot.slane %v2035, 7
      %v2263 = vsel %vm680, %v2258, %v2262
      %v2264 = vrot.slane %v2036, 7
      %v2265 = vsel %vm680, %v2260, %v2264
      %v2266 = vrot.slane %v2037, 7
      %v2267 = vsel %vm680, %v2262, %v2266
      %v2268 = vrot.slane %v2038, 7
      %v2269 = vsel %vm680, %v2264, %v2268
      %v2270 = vrot.slane %v2039, 7
      %v2271 = vsel %vm680, %v2266, %v2270
      %v2272 = vrot.slane %v2040, 7
      %v2273 = vsel %vm680, %v2268, %v2272
      %v2274 = vrot.slane %v2041, 7
      %v2275 = vsel %vm680, %v2270, %v2274
      %v2276 = vrot.slane %v2042, 7
      %v2277 = vsel %vm680, %v2272, %v2276
      %v2278 = vrot.slane %v2043, 7
      %v2279 = vsel %vm680, %v2274, %v2278
      %v2280 = vrot.slane %v2044, 7
      %v2281 = vsel %vm680, %v2276, %v2280
      %v2282 = vrot.slane %v2045, 7
      %v2283 = vsel %vm680, %v2278, %v2282
      %v2284 = vrot.slane %v2046, 7
      %v2285 = vsel %vm680, %v2280, %v2284
      %v2286 = vrot.slane %v2047, 7
      %v2287 = vrot.slane %v2048, 7
      %v2288 = vrot.slane %v2049, 7
      %v2289 = vsel %vm680, %v2286, %v2288
      %v2290 = vrot.slane %v2050, 7
      %v2291 = vsel %vm680, %v2287, %v2290
      %v2292 = vrot.slane %v2051, 7
      %v2293 = vsel %vm680, %v2288, %v2292
      %v2294 = vrot.slane %v2052, 7
      %v2295 = vsel %vm680, %v2290, %v2294
      %v2296 = vrot.slane %v2053, 7
      %v2297 = vsel %vm680, %v2292, %v2296
      %v2298 = vrot.slane %v2054, 7
      %v2299 = vsel %vm680, %v2294, %v2298
      %v2300 = vrot.slane %v2055, 7
      %v2301 = vsel %vm680, %v2296, %v2300
      %v2302 = vrot.slane %v2056, 7
      %v2303 = vsel %vm680, %v2298, %v2302
      %v2304 = vrot.slane %v2057, 7
      %v2305 = vsel %vm680, %v2300, %v2304
      %v2306 = vrot.slane %v2058, 7
      %v2307 = vsel %vm680, %v2302, %v2306
      %v2308 = vrot.slane %v2059, 7
      %v2309 = vsel %vm680, %v2304, %v2308
      %v2310 = vrot.slane %v2060, 7
      %v2311 = vsel %vm680, %v2306, %v2310
      %v2312 = vrot.slane %v2061, 7
      %v2313 = vsel %vm680, %v2308, %v2312
      %v2314 = vrot.slane %v2062, 7
      %v2315 = vsel %vm680, %v2310, %v2314
      %v2316 = vrot.slane %v2063, 7
      %v2317 = vrot.slane %v2064, 7
      %v2318 = vrot.slane %v2065, 7
      %v2319 = vsel %vm680, %v2316, %v2318
      %v2320 = vrot.slane %v2066, 7
      %v2321 = vsel %vm680, %v2317, %v2320
      %v2322 = vrot.slane %v2067, 7
      %v2323 = vsel %vm680, %v2318, %v2322
      %v2324 = vrot.slane %v2068, 7
      %v2325 = vsel %vm680, %v2320, %v2324
      %v2326 = vrot.slane %v2069, 7
      %v2327 = vsel %vm680, %v2322, %v2326
      %v2328 = vrot.slane %v2070, 7
      %v2329 = vsel %vm680, %v2324, %v2328
      %v2330 = vrot.slane %v2071, 7
      %v2331 = vsel %vm680, %v2326, %v2330
      %v2332 = vrot.slane %v2072, 7
      %v2333 = vsel %vm680, %v2328, %v2332
      %v2334 = vrot.slane %v2073, 7
      %v2335 = vsel %vm680, %v2330, %v2334
      %v2336 = vrot.slane %v2074, 7
      %v2337 = vsel %vm680, %v2332, %v2336
      %v2338 = vrot.slane %v2075, 7
      %v2339 = vsel %vm680, %v2334, %v2338
      %v2340 = vrot.slane %v2076, 7
      %v2341 = vsel %vm680, %v2336, %v2340
      %v2342 = vrot.slane %v2077, 7
      %v2343 = vsel %vm680, %v2338, %v2342
      %v2344 = vrot.slane %v2078, 7
      %v2345 = vsel %vm680, %v2340, %v2344
      %v2346 = vrot.slane %v2079, 7
      %v2347 = vrot.slane %v2080, 7
      %v2348 = vrot.slane %v2081, 7
      %v2349 = vsel %vm680, %v2346, %v2348
      %v2350 = vrot.slane %v2082, 7
      %v2351 = vsel %vm680, %v2347, %v2350
      %v2352 = vrot.slane %v2083, 7
      %v2353 = vsel %vm680, %v2348, %v2352
      %v2354 = vrot.slane %v2084, 7
      %v2355 = vsel %vm680, %v2350, %v2354
      %v2356 = vrot.slane %v2085, 7
      %v2357 = vsel %vm680, %v2352, %v2356
      %v2358 = vrot.slane %v2086, 7
      %v2359 = vsel %vm680, %v2354, %v2358
      %v2360 = vrot.slane %v2087, 7
      %v2361 = vsel %vm680, %v2356, %v2360
      %v2362 = vrot.slane %v2088, 7
      %v2363 = vsel %vm680, %v2358, %v2362
      %v2364 = vrot.slane %v2089, 7
      %v2365 = vsel %vm680, %v2360, %v2364
      %v2366 = vrot.slane %v2090, 7
      %v2367 = vsel %vm680, %v2362, %v2366
      %v2368 = vrot.slane %v2091, 7
      %v2369 = vsel %vm680, %v2364, %v2368
      %v2370 = vrot.slane %v2092, 7
      %v2371 = vsel %vm680, %v2366, %v2370
      %v2372 = vrot.slane %v2093, 7
      %v2373 = vsel %vm680, %v2368, %v2372
      %v2374 = vrot.slane %v2094, 7
      %v2375 = vsel %vm680, %v2370, %v2374
      %v2440 = vsel %vm680, 0.0, %v2256
      %v2441 = vsel %vm680, 0.0, %v2257
      %v2442 = vsel %vm680, 0.0, %v2286
      %v2443 = vsel %vm680, 0.0, %v2287
      %v2444 = vsel %vm680, 0.0, %v2316
      %v2445 = vsel %vm680, 0.0, %v2317
      %v2446 = vsel %vm680, 0.0, %v2346
      %v2447 = vsel %vm680, 0.0, %v2347
      %v2448 = vrot.slane %v2031, 1
      %v2449 = vrot.slane %v2033, 1
      %v2450 = vsel %vm1281, %v2448, %v2449
      %v2451 = vrot.slane %v2032, 1
      %v2452 = vrot.slane %v2034, 1
      %v2453 = vsel %vm1281, %v2451, %v2452
      %v2454 = vrot.slane %v2035, 1
      %v2455 = vsel %vm1281, %v2449, %v2454
      %v2456 = vrot.slane %v2036, 1
      %v2457 = vsel %vm1281, %v2452, %v2456
      %v2458 = vrot.slane %v2037, 1
      %v2459 = vsel %vm1281, %v2454, %v2458
      %v2460 = vrot.slane %v2038, 1
      %v2461 = vsel %vm1281, %v2456, %v2460
      %v2462 = vrot.slane %v2039, 1
      %v2463 = vsel %vm1281, %v2458, %v2462
      %v2464 = vrot.slane %v2040, 1
      %v2465 = vsel %vm1281, %v2460, %v2464
      %v2466 = vrot.slane %v2041, 1
      %v2467 = vsel %vm1281, %v2462, %v2466
      %v2468 = vrot.slane %v2042, 1
      %v2469 = vsel %vm1281, %v2464, %v2468
      %v2470 = vrot.slane %v2043, 1
      %v2471 = vsel %vm1281, %v2466, %v2470
      %v2472 = vrot.slane %v2044, 1
      %v2473 = vsel %vm1281, %v2468, %v2472
      %v2474 = vrot.slane %v2045, 1
      %v2475 = vsel %vm1281, %v2470, %v2474
      %v2476 = vrot.slane %v2046, 1
      %v2477 = vsel %vm1281, %v2472, %v2476
      %v2478 = vrot.slane %v2047, 1
      %v2479 = vrot.slane %v2049, 1
      %v2480 = vsel %vm1281, %v2478, %v2479
      %v2481 = vrot.slane %v2048, 1
      %v2482 = vrot.slane %v2050, 1
      %v2483 = vsel %vm1281, %v2481, %v2482
      %v2484 = vrot.slane %v2051, 1
      %v2485 = vsel %vm1281, %v2479, %v2484
      %v2486 = vrot.slane %v2052, 1
      %v2487 = vsel %vm1281, %v2482, %v2486
      %v2488 = vrot.slane %v2053, 1
      %v2489 = vsel %vm1281, %v2484, %v2488
      %v2490 = vrot.slane %v2054, 1
      %v2491 = vsel %vm1281, %v2486, %v2490
      %v2492 = vrot.slane %v2055, 1
      %v2493 = vsel %vm1281, %v2488, %v2492
      %v2494 = vrot.slane %v2056, 1
      %v2495 = vsel %vm1281, %v2490, %v2494
      %v2496 = vrot.slane %v2057, 1
      %v2497 = vsel %vm1281, %v2492, %v2496
      %v2498 = vrot.slane %v2058, 1
      %v2499 = vsel %vm1281, %v2494, %v2498
      %v2500 = vrot.slane %v2059, 1
      %v2501 = vsel %vm1281, %v2496, %v2500
      %v2502 = vrot.slane %v2060, 1
      %v2503 = vsel %vm1281, %v2498, %v2502
      %v2504 = vrot.slane %v2061, 1
      %v2505 = vsel %vm1281, %v2500, %v2504
      %v2506 = vrot.slane %v2062, 1
      %v2507 = vsel %vm1281, %v2502, %v2506
      %v2508 = vrot.slane %v2063, 1
      %v2509 = vrot.slane %v2065, 1
      %v2510 = vsel %vm1281, %v2508, %v2509
      %v2511 = vrot.slane %v2064, 1
      %v2512 = vrot.slane %v2066, 1
      %v2513 = vsel %vm1281, %v2511, %v2512
      %v2514 = vrot.slane %v2067, 1
      %v2515 = vsel %vm1281, %v2509, %v2514
      %v2516 = vrot.slane %v2068, 1
      %v2517 = vsel %vm1281, %v2512, %v2516
      %v2518 = vrot.slane %v2069, 1
      %v2519 = vsel %vm1281, %v2514, %v2518
      %v2520 = vrot.slane %v2070, 1
      %v2521 = vsel %vm1281, %v2516, %v2520
      %v2522 = vrot.slane %v2071, 1
      %v2523 = vsel %vm1281, %v2518, %v2522
      %v2524 = vrot.slane %v2072, 1
      %v2525 = vsel %vm1281, %v2520, %v2524
      %v2526 = vrot.slane %v2073, 1
      %v2527 = vsel %vm1281, %v2522, %v2526
      %v2528 = vrot.slane %v2074, 1
      %v2529 = vsel %vm1281, %v2524, %v2528
      %v2530 = vrot.slane %v2075, 1
      %v2531 = vsel %vm1281, %v2526, %v2530
      %v2532 = vrot.slane %v2076, 1
      %v2533 = vsel %vm1281, %v2528, %v2532
      %v2534 = vrot.slane %v2077, 1
      %v2535 = vsel %vm1281, %v2530, %v2534
      %v2536 = vrot.slane %v2078, 1
      %v2537 = vsel %vm1281, %v2532, %v2536
      %v2538 = vrot.slane %v2079, 1
      %v2539 = vrot.slane %v2081, 1
      %v2540 = vsel %vm1281, %v2538, %v2539
      %v2541 = vrot.slane %v2080, 1
      %v2542 = vrot.slane %v2082, 1
      %v2543 = vsel %vm1281, %v2541, %v2542
      %v2544 = vrot.slane %v2083, 1
      %v2545 = vsel %vm1281, %v2539, %v2544
      %v2546 = vrot.slane %v2084, 1
      %v2547 = vsel %vm1281, %v2542, %v2546
      %v2548 = vrot.slane %v2085, 1
      %v2549 = vsel %vm1281, %v2544, %v2548
      %v2550 = vrot.slane %v2086, 1
      %v2551 = vsel %vm1281, %v2546, %v2550
      %v2552 = vrot.slane %v2087, 1
      %v2553 = vsel %vm1281, %v2548, %v2552
      %v2554 = vrot.slane %v2088, 1
      %v2555 = vsel %vm1281, %v2550, %v2554
      %v2556 = vrot.slane %v2089, 1
      %v2557 = vsel %vm1281, %v2552, %v2556
      %v2558 = vrot.slane %v2090, 1
      %v2559 = vsel %vm1281, %v2554, %v2558
      %v2560 = vrot.slane %v2091, 1
      %v2561 = vsel %vm1281, %v2556, %v2560
      %v2562 = vrot.slane %v2092, 1
      %v2563 = vsel %vm1281, %v2558, %v2562
      %v2564 = vrot.slane %v2093, 1
      %v2565 = vsel %vm1281, %v2560, %v2564
      %v2566 = vrot.slane %v2094, 1
      %v2567 = vsel %vm1281, %v2562, %v2566
      %v2632 = vsel %vm1281, %v2474, 0.0
      %v2633 = vsel %vm1281, %v2476, 0.0
      %v2634 = vsel %vm1281, %v2504, 0.0
      %v2635 = vsel %vm1281, %v2506, 0.0
      %v2636 = vsel %vm1281, %v2534, 0.0
      %v2637 = vsel %vm1281, %v2536, 0.0
      %v2638 = vsel %vm1281, %v2564, 0.0
      %v2639 = vsel %vm1281, %v2566, 0.0
      %v2641 = vlaneseq
      %v2642 = vshrl.u32 %v2641, 7
      %v2643 = vsub.s32 0, %v2642
      %v2644 = vrot.slane %v2191, %v2643
      %2646 = vmatprep.subr.mxu0 0.0
      %2647 = vmatpush1.msra.mxu0 %v2110
      %2648 = vmatprep.subr.mxu0 0.0
      %2649 = vmatpush1.msra.mxu0 %v2109
      %2650 = vmatprep.subr.mxu0 0.0
      %2651 = vmatpush1.msra.mxu0 %v2108
      %2652 = vmatprep.subr.mxu0 0.0
      %2653 = vmatpush1.msra.mxu0 %v2107
      %2654 = vmatprep.subr.mxu0 0.0
      %2655 = vmatpush1.msra.mxu0 %v2106
      %2656 = vmatprep.subr.mxu0 0.0
      %2657 = vmatpush1.msra.mxu0 %v2105
      %2658 = vmatprep.subr.mxu0 0.0
      %2659 = vmatpush1.msra.mxu0 %v2104
      %2660 = vmatprep.subr.mxu0 0.0
      %2661 = vmatpush1.msra.mxu0 %v2103
      %2662 = vmatprep.subr.mxu0 0.0
      %2663 = vmatpush1.msra.mxu0 %v2102
      %2664 = vmatprep.subr.mxu0 0.0
      %2665 = vmatpush1.msra.mxu0 %v2101
      %2666 = vmatprep.subr.mxu0 0.0
      %2667 = vmatpush1.msra.mxu0 %v2100
      %2668 = vmatprep.subr.mxu0 0.0
      %2669 = vmatpush1.msra.mxu0 %v2099
      %2670 = vmatprep.subr.mxu0 0.0
      %2671 = vmatpush1.msra.mxu0 %v2098
      %2672 = vmatprep.subr.mxu0 0.0
      %2673 = vmatpush1.msra.mxu0 %v2097
      %2674 = vmatprep.subr.mxu0 0.0
      %2675 = vmatpush1.msra.mxu0 %v2096
      %2676 = vmatprep.subr.mxu0 0.0
      %2677 = vmatpush1.msra.mxu0 %v2095
      %2678 = vmatprep.subr.mxu0 0.0
      %2679 = vmatpush2.msra.mxu0 %v2126
      %2680 = vmatprep.subr.mxu0 0.0
      %2681 = vmatpush2.msra.mxu0 %v2125
      %2682 = vmatprep.subr.mxu0 0.0
      %2683 = vmatpush2.msra.mxu0 %v2124
      %2684 = vmatprep.subr.mxu0 0.0
      %2685 = vmatpush2.msra.mxu0 %v2123
      %2686 = vmatprep.subr.mxu0 0.0
      %2687 = vmatpush2.msra.mxu0 %v2122
      %2688 = vmatprep.subr.mxu0 0.0
      %2689 = vmatpush2.msra.mxu0 %v2121
      %2690 = vmatprep.subr.mxu0 0.0
      %2691 = vmatpush2.msra.mxu0 %v2120
      %2692 = vmatprep.subr.mxu0 0.0
      %2693 = vmatpush2.msra.mxu0 %v2119
      %2694 = vmatprep.subr.mxu0 0.0
      %2695 = vmatpush2.msra.mxu0 %v2118
      %2696 = vmatprep.subr.mxu0 0.0
      %2697 = vmatpush2.msra.mxu0 %v2117
      %2698 = vmatprep.subr.mxu0 0.0
      %2699 = vmatpush2.msra.mxu0 %v2116
      %2700 = vmatprep.subr.mxu0 0.0
      %2701 = vmatpush2.msra.mxu0 %v2115
      %2702 = vmatprep.subr.mxu0 0.0
      %2703 = vmatpush2.msra.mxu0 %v2114
      %2704 = vmatprep.subr.mxu0 0.0
      %2705 = vmatpush2.msra.mxu0 %v2113
      %2706 = vmatprep.subr.mxu0 0.0
      %2707 = vmatpush2.msra.mxu0 %v2112
      %2708 = vmatprep.subr.mxu0 0.0
      %2709 = vmatpush2.msra.mxu0 %v2111
      %2710 = vmatprep.mubr.f32.mxu0 %v2441
      %2711 = vmatmul.mubr.f32.gmra.mxu0 %v2440
      %v2712 = vpop.f32.mrf.mxu0
      %v2713 = vadd.f32 %v2644, %v2712
      %v2714 = vpop.f32.mrf.mxu0
      %2715 = vmatprep.mubr.f32.mxu0 %v2261
      %2716 = vmatmul.mubr.f32.gmra.mxu0 %v2259
      %v2717 = vpop.f32.mrf.mxu0
      %v2718 = vadd.f32 %v2644, %v2717
      %v2719 = vpop.f32.mrf.mxu0
      %2720 = vmatprep.mubr.f32.mxu0 %v2265
      %2721 = vmatmul.mubr.f32.gmra.mxu0 %v2263
      %v2722 = vpop.f32.mrf.mxu0
      %v2723 = vadd.f32 %v2644, %v2722
      %v2724 = vpop.f32.mrf.mxu0
      %2725 = vmatprep.mubr.f32.mxu0 %v2269
      %2726 = vmatmul.mubr.f32.gmra.mxu0 %v2267
      %v2727 = vpop.f32.mrf.mxu0
      %v2728 = vadd.f32 %v2644, %v2727
      %v2729 = vpop.f32.mrf.mxu0
      %2730 = vmatprep.mubr.f32.mxu0 %v2273
      %2731 = vmatmul.mubr.f32.gmra.mxu0 %v2271
      %v2732 = vpop.f32.mrf.mxu0
      %v2733 = vadd.f32 %v2644, %v2732
      %v2734 = vpop.f32.mrf.mxu0
      %2735 = vmatprep.mubr.f32.mxu0 %v2277
      %2736 = vmatmul.mubr.f32.gmra.mxu0 %v2275
      %v2737 = vpop.f32.mrf.mxu0
      %v2738 = vadd.f32 %v2644, %v2737
      %v2739 = vpop.f32.mrf.mxu0
      %2740 = vmatprep.mubr.f32.mxu0 %v2281
      %2741 = vmatmul.mubr.f32.gmra.mxu0 %v2279
      %v2742 = vpop.f32.mrf.mxu0
      %v2743 = vadd.f32 %v2644, %v2742
      %v2744 = vpop.f32.mrf.mxu0
      %2745 = vmatprep.mubr.f32.mxu0 %v2285
      %2746 = vmatmul.mubr.f32.gmra.mxu0 %v2283
      %v2747 = vpop.f32.mrf.mxu0
      %v2748 = vadd.f32 %v2644, %v2747
      %v2749 = vpop.f32.mrf.mxu0
      %2750 = vmatprep.mubr.f32.mxu0 %v2443
      %2751 = vmatmul.mubr.f32.gmra.mxu0 %v2442
      %v2752 = vpop.f32.mrf.mxu0
      %v2753 = vadd.f32 %v2644, %v2752
      %v2754 = vpop.f32.mrf.mxu0
      %2755 = vmatprep.mubr.f32.mxu0 %v2291
      %2756 = vmatmul.mubr.f32.gmra.mxu0 %v2289
      %v2757 = vpop.f32.mrf.mxu0
      %v2758 = vadd.f32 %v2644, %v2757
      %v2759 = vpop.f32.mrf.mxu0
      %2760 = vmatprep.mubr.f32.mxu0 %v2295
      %2761 = vmatmul.mubr.f32.gmra.mxu0 %v2293
      %v2762 = vpop.f32.mrf.mxu0
      %v2763 = vadd.f32 %v2644, %v2762
      %v2764 = vpop.f32.mrf.mxu0
      %2765 = vmatprep.mubr.f32.mxu0 %v2299
      %2766 = vmatmul.mubr.f32.gmra.mxu0 %v2297
      %v2767 = vpop.f32.mrf.mxu0
      %v2768 = vadd.f32 %v2644, %v2767
      %v2769 = vpop.f32.mrf.mxu0
      %2770 = vmatprep.mubr.f32.mxu0 %v2303
      %2771 = vmatmul.mubr.f32.gmra.mxu0 %v2301
      %v2772 = vpop.f32.mrf.mxu0
      %v2773 = vadd.f32 %v2644, %v2772
      %v2774 = vpop.f32.mrf.mxu0
      %2775 = vmatprep.mubr.f32.mxu0 %v2307
      %2776 = vmatmul.mubr.f32.gmra.mxu0 %v2305
      %v2777 = vpop.f32.mrf.mxu0
      %v2778 = vadd.f32 %v2644, %v2777
      %v2779 = vpop.f32.mrf.mxu0
      %2780 = vmatprep.mubr.f32.mxu0 %v2311
      %2781 = vmatmul.mubr.f32.gmra.mxu0 %v2309
      %v2782 = vpop.f32.mrf.mxu0
      %v2783 = vadd.f32 %v2644, %v2782
      %v2784 = vpop.f32.mrf.mxu0
      %2785 = vmatprep.mubr.f32.mxu0 %v2315
      %2786 = vmatmul.mubr.f32.gmra.mxu0 %v2313
      %v2787 = vpop.f32.mrf.mxu0
      %v2788 = vadd.f32 %v2644, %v2787
      %v2789 = vpop.f32.mrf.mxu0
      %2790 = vmatprep.mubr.f32.mxu0 %v2445
      %2791 = vmatmul.mubr.f32.gmra.mxu0 %v2444
      %v2792 = vpop.f32.mrf.mxu0
      %v2793 = vadd.f32 %v2644, %v2792
      %v2794 = vpop.f32.mrf.mxu0
      %2795 = vmatprep.mubr.f32.mxu0 %v2321
      %2796 = vmatmul.mubr.f32.gmra.mxu0 %v2319
      %v2797 = vpop.f32.mrf.mxu0
      %v2798 = vadd.f32 %v2644, %v2797
      %v2799 = vpop.f32.mrf.mxu0
      %2800 = vmatprep.mubr.f32.mxu0 %v2325
      %2801 = vmatmul.mubr.f32.gmra.mxu0 %v2323
      %v2802 = vpop.f32.mrf.mxu0
      %v2803 = vadd.f32 %v2644, %v2802
      %v2804 = vpop.f32.mrf.mxu0
      %2805 = vmatprep.mubr.f32.mxu0 %v2329
      %2806 = vmatmul.mubr.f32.gmra.mxu0 %v2327
      %v2807 = vpop.f32.mrf.mxu0
      %v2808 = vadd.f32 %v2644, %v2807
      %v2809 = vpop.f32.mrf.mxu0
      %2810 = vmatprep.mubr.f32.mxu0 %v2333
      %2811 = vmatmul.mubr.f32.gmra.mxu0 %v2331
      %v2812 = vpop.f32.mrf.mxu0
      %v2813 = vadd.f32 %v2644, %v2812
      %v2814 = vpop.f32.mrf.mxu0
      %2815 = vmatprep.mubr.f32.mxu0 %v2337
      %2816 = vmatmul.mubr.f32.gmra.mxu0 %v2335
      %v2817 = vpop.f32.mrf.mxu0
      %v2818 = vadd.f32 %v2644, %v2817
      %v2819 = vpop.f32.mrf.mxu0
      %2820 = vmatprep.mubr.f32.mxu0 %v2341
      %2821 = vmatmul.mubr.f32.gmra.mxu0 %v2339
      %v2822 = vpop.f32.mrf.mxu0
      %v2823 = vadd.f32 %v2644, %v2822
      %v2824 = vpop.f32.mrf.mxu0
      %2825 = vmatprep.mubr.f32.mxu0 %v2345
      %2826 = vmatmul.mubr.f32.gmra.mxu0 %v2343
      %v2827 = vpop.f32.mrf.mxu0
      %v2828 = vadd.f32 %v2644, %v2827
      %v2829 = vpop.f32.mrf.mxu0
      %2830 = vmatprep.mubr.f32.mxu0 %v2447
      %2831 = vmatmul.mubr.f32.gmra.mxu0 %v2446
      %v2832 = vpop.f32.mrf.mxu0
      %v2833 = vadd.f32 %v2644, %v2832
      %v2834 = vpop.f32.mrf.mxu0
      %2835 = vmatprep.mubr.f32.mxu0 %v2351
      %2836 = vmatmul.mubr.f32.gmra.mxu0 %v2349
      %v2837 = vpop.f32.mrf.mxu0
      %v2838 = vadd.f32 %v2644, %v2837
      %v2839 = vpop.f32.mrf.mxu0
      %2840 = vmatprep.mubr.f32.mxu0 %v2355
      %2841 = vmatmul.mubr.f32.gmra.mxu0 %v2353
      %v2842 = vpop.f32.mrf.mxu0
      %v2843 = vadd.f32 %v2644, %v2842
      %v2844 = vpop.f32.mrf.mxu0
      %2845 = vmatprep.mubr.f32.mxu0 %v2359
      %2846 = vmatmul.mubr.f32.gmra.mxu0 %v2357
      %v2847 = vpop.f32.mrf.mxu0
      %v2848 = vadd.f32 %v2644, %v2847
      %v2849 = vpop.f32.mrf.mxu0
      %2850 = vmatprep.mubr.f32.mxu0 %v2363
      %2851 = vmatmul.mubr.f32.gmra.mxu0 %v2361
      %v2852 = vpop.f32.mrf.mxu0
      %v2853 = vadd.f32 %v2644, %v2852
      %v2854 = vpop.f32.mrf.mxu0
      %2855 = vmatprep.mubr.f32.mxu0 %v2367
      %2856 = vmatmul.mubr.f32.gmra.mxu0 %v2365
      %v2857 = vpop.f32.mrf.mxu0
      %v2858 = vadd.f32 %v2644, %v2857
      %v2859 = vpop.f32.mrf.mxu0
      %2860 = vmatprep.mubr.f32.mxu0 %v2371
      %2861 = vmatmul.mubr.f32.gmra.mxu0 %v2369
      %v2862 = vpop.f32.mrf.mxu0
      %v2863 = vadd.f32 %v2644, %v2862
      %v2864 = vpop.f32.mrf.mxu0
      %2865 = vmatprep.mubr.f32.mxu0 %v2375
      %2866 = vmatmul.mubr.f32.gmra.mxu0 %v2373
      %v2867 = vpop.f32.mrf.mxu0
      %v2868 = vadd.f32 %v2644, %v2867
      %v2869 = vpop.f32.mrf.mxu0
      %2870 = vdwg.mxu0
      %2871 = vmatprep.subr.mxu0 0.0
      %2872 = vmatpush1.msra.mxu0 %v2142
      %2873 = vmatprep.subr.mxu0 0.0
      %2874 = vmatpush1.msra.mxu0 %v2141
      %2875 = vmatprep.subr.mxu0 0.0
      %2876 = vmatpush1.msra.mxu0 %v2140
      %2877 = vmatprep.subr.mxu0 0.0
      %2878 = vmatpush1.msra.mxu0 %v2139
      %2879 = vmatprep.subr.mxu0 0.0
      %2880 = vmatpush1.msra.mxu0 %v2138
      %2881 = vmatprep.subr.mxu0 0.0
      %2882 = vmatpush1.msra.mxu0 %v2137
      %2883 = vmatprep.subr.mxu0 0.0
      %2884 = vmatpush1.msra.mxu0 %v2136
      %2885 = vmatprep.subr.mxu0 0.0
      %2886 = vmatpush1.msra.mxu0 %v2135
      %2887 = vmatprep.subr.mxu0 0.0
      %2888 = vmatpush1.msra.mxu0 %v2134
      %2889 = vmatprep.subr.mxu0 0.0
      %2890 = vmatpush1.msra.mxu0 %v2133
      %2891 = vmatprep.subr.mxu0 0.0
      %2892 = vmatpush1.msra.mxu0 %v2132
      %2893 = vmatprep.subr.mxu0 0.0
      %2894 = vmatpush1.msra.mxu0 %v2131
      %2895 = vmatprep.subr.mxu0 0.0
      %2896 = vmatpush1.msra.mxu0 %v2130
      %2897 = vmatprep.subr.mxu0 0.0
      %2898 = vmatpush1.msra.mxu0 %v2129
      %2899 = vmatprep.subr.mxu0 0.0
      %2900 = vmatpush1.msra.mxu0 %v2128
      %2901 = vmatprep.subr.mxu0 0.0
      %2902 = vmatpush1.msra.mxu0 %v2127
      %2903 = vmatprep.subr.mxu0 0.0
      %2904 = vmatpush2.msra.mxu0 %v2158
      %2905 = vmatprep.subr.mxu0 0.0
      %2906 = vmatpush2.msra.mxu0 %v2157
      %2907 = vmatprep.subr.mxu0 0.0
      %2908 = vmatpush2.msra.mxu0 %v2156
      %2909 = vmatprep.subr.mxu0 0.0
      %2910 = vmatpush2.msra.mxu0 %v2155
      %2911 = vmatprep.subr.mxu0 0.0
      %2912 = vmatpush2.msra.mxu0 %v2154
      %2913 = vmatprep.subr.mxu0 0.0
      %2914 = vmatpush2.msra.mxu0 %v2153
      %2915 = vmatprep.subr.mxu0 0.0
      %2916 = vmatpush2.msra.mxu0 %v2152
      %2917 = vmatprep.subr.mxu0 0.0
      %2918 = vmatpush2.msra.mxu0 %v2151
      %2919 = vmatprep.subr.mxu0 0.0
      %2920 = vmatpush2.msra.mxu0 %v2150
      %2921 = vmatprep.subr.mxu0 0.0
      %2922 = vmatpush2.msra.mxu0 %v2149
      %2923 = vmatprep.subr.mxu0 0.0
      %2924 = vmatpush2.msra.mxu0 %v2148
      %2925 = vmatprep.subr.mxu0 0.0
      %2926 = vmatpush2.msra.mxu0 %v2147
      %2927 = vmatprep.subr.mxu0 0.0
      %2928 = vmatpush2.msra.mxu0 %v2146
      %2929 = vmatprep.subr.mxu0 0.0
      %2930 = vmatpush2.msra.mxu0 %v2145
      %2931 = vmatprep.subr.mxu0 0.0
      %2932 = vmatpush2.msra.mxu0 %v2144
      %2933 = vmatprep.subr.mxu0 0.0
      %2934 = vmatpush2.msra.mxu0 %v2143
      %2935 = vmatprep.mubr.f32.mxu0 %v2032
      %2936 = vmatmul.mubr.f32.gmra.mxu0 %v2031
      %v2937 = vpop.f32.mrf.mxu0
      %v2938 = vadd.f32 %v2713, %v2937
      %v2939 = vpop.f32.mrf.mxu0
      %2940 = vmatprep.mubr.f32.mxu0 %v2034
      %2941 = vmatmul.mubr.f32.gmra.mxu0 %v2033
      %v2942 = vpop.f32.mrf.mxu0
      %v2943 = vadd.f32 %v2718, %v2942
      %v2944 = vpop.f32.mrf.mxu0
      %2945 = vmatprep.mubr.f32.mxu0 %v2036
      %2946 = vmatmul.mubr.f32.gmra.mxu0 %v2035
      %v2947 = vpop.f32.mrf.mxu0
      %v2948 = vadd.f32 %v2723, %v2947
      %v2949 = vpop.f32.mrf.mxu0
      %2950 = vmatprep.mubr.f32.mxu0 %v2038
      %2951 = vmatmul.mubr.f32.gmra.mxu0 %v2037
      %v2952 = vpop.f32.mrf.mxu0
      %v2953 = vadd.f32 %v2728, %v2952
      %v2954 = vpop.f32.mrf.mxu0
      %2955 = vmatprep.mubr.f32.mxu0 %v2040
      %2956 = vmatmul.mubr.f32.gmra.mxu0 %v2039
      %v2957 = vpop.f32.mrf.mxu0
      %v2958 = vadd.f32 %v2733, %v2957
      %v2959 = vpop.f32.mrf.mxu0
      %2960 = vmatprep.mubr.f32.mxu0 %v2042
      %2961 = vmatmul.mubr.f32.gmra.mxu0 %v2041
      %v2962 = vpop.f32.mrf.mxu0
      %v2963 = vadd.f32 %v2738, %v2962
      %v2964 = vpop.f32.mrf.mxu0
      %2965 = vmatprep.mubr.f32.mxu0 %v2044
      %2966 = vmatmul.mubr.f32.gmra.mxu0 %v2043
      %v2967 = vpop.f32.mrf.mxu0
      %v2968 = vadd.f32 %v2743, %v2967
      %v2969 = vpop.f32.mrf.mxu0
      %2970 = vmatprep.mubr.f32.mxu0 %v2046
      %2971 = vmatmul.mubr.f32.gmra.mxu0 %v2045
      %v2972 = vpop.f32.mrf.mxu0
      %v2973 = vadd.f32 %v2748, %v2972
      %v2974 = vpop.f32.mrf.mxu0
      %2975 = vmatprep.mubr.f32.mxu0 %v2048
      %2976 = vmatmul.mubr.f32.gmra.mxu0 %v2047
      %v2977 = vpop.f32.mrf.mxu0
      %v2978 = vadd.f32 %v2753, %v2977
      %v2979 = vpop.f32.mrf.mxu0
      %2980 = vmatprep.mubr.f32.mxu0 %v2050
      %2981 = vmatmul.mubr.f32.gmra.mxu0 %v2049
      %v2982 = vpop.f32.mrf.mxu0
      %v2983 = vadd.f32 %v2758, %v2982
      %v2984 = vpop.f32.mrf.mxu0
      %2985 = vmatprep.mubr.f32.mxu0 %v2052
      %2986 = vmatmul.mubr.f32.gmra.mxu0 %v2051
      %v2987 = vpop.f32.mrf.mxu0
      %v2988 = vadd.f32 %v2763, %v2987
      %v2989 = vpop.f32.mrf.mxu0
      %2990 = vmatprep.mubr.f32.mxu0 %v2054
      %2991 = vmatmul.mubr.f32.gmra.mxu0 %v2053
      %v2992 = vpop.f32.mrf.mxu0
      %v2993 = vadd.f32 %v2768, %v2992
      %v2994 = vpop.f32.mrf.mxu0
      %2995 = vmatprep.mubr.f32.mxu0 %v2056
      %2996 = vmatmul.mubr.f32.gmra.mxu0 %v2055
      %v2997 = vpop.f32.mrf.mxu0
      %v2998 = vadd.f32 %v2773, %v2997
      %v2999 = vpop.f32.mrf.mxu0
      %3000 = vmatprep.mubr.f32.mxu0 %v2058
      %3001 = vmatmul.mubr.f32.gmra.mxu0 %v2057
      %v3002 = vpop.f32.mrf.mxu0
      %v3003 = vadd.f32 %v2778, %v3002
      %v3004 = vpop.f32.mrf.mxu0
      %3005 = vmatprep.mubr.f32.mxu0 %v2060
      %3006 = vmatmul.mubr.f32.gmra.mxu0 %v2059
      %v3007 = vpop.f32.mrf.mxu0
      %v3008 = vadd.f32 %v2783, %v3007
      %v3009 = vpop.f32.mrf.mxu0
      %3010 = vmatprep.mubr.f32.mxu0 %v2062
      %3011 = vmatmul.mubr.f32.gmra.mxu0 %v2061
      %v3012 = vpop.f32.mrf.mxu0
      %v3013 = vadd.f32 %v2788, %v3012
      %v3014 = vpop.f32.mrf.mxu0
      %3015 = vmatprep.mubr.f32.mxu0 %v2064
      %3016 = vmatmul.mubr.f32.gmra.mxu0 %v2063
      %v3017 = vpop.f32.mrf.mxu0
      %v3018 = vadd.f32 %v2793, %v3017
      %v3019 = vpop.f32.mrf.mxu0
      %3020 = vmatprep.mubr.f32.mxu0 %v2066
      %3021 = vmatmul.mubr.f32.gmra.mxu0 %v2065
      %v3022 = vpop.f32.mrf.mxu0
      %v3023 = vadd.f32 %v2798, %v3022
      %v3024 = vpop.f32.mrf.mxu0
      %3025 = vmatprep.mubr.f32.mxu0 %v2068
      %3026 = vmatmul.mubr.f32.gmra.mxu0 %v2067
      %v3027 = vpop.f32.mrf.mxu0
      %v3028 = vadd.f32 %v2803, %v3027
      %v3029 = vpop.f32.mrf.mxu0
      %3030 = vmatprep.mubr.f32.mxu0 %v2070
      %3031 = vmatmul.mubr.f32.gmra.mxu0 %v2069
      %v3032 = vpop.f32.mrf.mxu0
      %v3033 = vadd.f32 %v2808, %v3032
      %v3034 = vpop.f32.mrf.mxu0
      %3035 = vmatprep.mubr.f32.mxu0 %v2072
      %3036 = vmatmul.mubr.f32.gmra.mxu0 %v2071
      %v3037 = vpop.f32.mrf.mxu0
      %v3038 = vadd.f32 %v2813, %v3037
      %v3039 = vpop.f32.mrf.mxu0
      %3040 = vmatprep.mubr.f32.mxu0 %v2074
      %3041 = vmatmul.mubr.f32.gmra.mxu0 %v2073
      %v3042 = vpop.f32.mrf.mxu0
      %v3043 = vadd.f32 %v2818, %v3042
      %v3044 = vpop.f32.mrf.mxu0
      %3045 = vmatprep.mubr.f32.mxu0 %v2076
      %3046 = vmatmul.mubr.f32.gmra.mxu0 %v2075
      %v3047 = vpop.f32.mrf.mxu0
      %v3048 = vadd.f32 %v2823, %v3047
      %v3049 = vpop.f32.mrf.mxu0
      %3050 = vmatprep.mubr.f32.mxu0 %v2078
      %3051 = vmatmul.mubr.f32.gmra.mxu0 %v2077
      %v3052 = vpop.f32.mrf.mxu0
      %v3053 = vadd.f32 %v2828, %v3052
      %v3054 = vpop.f32.mrf.mxu0
      %3055 = vmatprep.mubr.f32.mxu0 %v2080
      %3056 = vmatmul.mubr.f32.gmra.mxu0 %v2079
      %v3057 = vpop.f32.mrf.mxu0
      %v3058 = vadd.f32 %v2833, %v3057
      %v3059 = vpop.f32.mrf.mxu0
      %3060 = vmatprep.mubr.f32.mxu0 %v2082
      %3061 = vmatmul.mubr.f32.gmra.mxu0 %v2081
      %v3062 = vpop.f32.mrf.mxu0
      %v3063 = vadd.f32 %v2838, %v3062
      %v3064 = vpop.f32.mrf.mxu0
      %3065 = vmatprep.mubr.f32.mxu0 %v2084
      %3066 = vmatmul.mubr.f32.gmra.mxu0 %v2083
      %v3067 = vpop.f32.mrf.mxu0
      %v3068 = vadd.f32 %v2843, %v3067
      %v3069 = vpop.f32.mrf.mxu0
      %3070 = vmatprep.mubr.f32.mxu0 %v2086
      %3071 = vmatmul.mubr.f32.gmra.mxu0 %v2085
      %v3072 = vpop.f32.mrf.mxu0
      %v3073 = vadd.f32 %v2848, %v3072
      %v3074 = vpop.f32.mrf.mxu0
      %3075 = vmatprep.mubr.f32.mxu0 %v2088
      %3076 = vmatmul.mubr.f32.gmra.mxu0 %v2087
      %v3077 = vpop.f32.mrf.mxu0
      %v3078 = vadd.f32 %v2853, %v3077
      %v3079 = vpop.f32.mrf.mxu0
      %3080 = vmatprep.mubr.f32.mxu0 %v2090
      %3081 = vmatmul.mubr.f32.gmra.mxu0 %v2089
      %v3082 = vpop.f32.mrf.mxu0
      %v3083 = vadd.f32 %v2858, %v3082
      %v3084 = vpop.f32.mrf.mxu0
      %3085 = vmatprep.mubr.f32.mxu0 %v2092
      %3086 = vmatmul.mubr.f32.gmra.mxu0 %v2091
      %v3087 = vpop.f32.mrf.mxu0
      %v3088 = vadd.f32 %v2863, %v3087
      %v3089 = vpop.f32.mrf.mxu0
      %3090 = vmatprep.mubr.f32.mxu0 %v2094
      %3091 = vmatmul.mubr.f32.gmra.mxu0 %v2093
      %v3092 = vpop.f32.mrf.mxu0
      %v3093 = vadd.f32 %v2868, %v3092
      %v3094 = vpop.f32.mrf.mxu0
      %3095 = vdwg.mxu0
      %3096 = vmatprep.subr.mxu0 0.0
      %3097 = vmatpush1.msra.mxu0 %v2174
      %3098 = vmatprep.subr.mxu0 0.0
      %3099 = vmatpush1.msra.mxu0 %v2173
      %3100 = vmatprep.subr.mxu0 0.0
      %3101 = vmatpush1.msra.mxu0 %v2172
      %3102 = vmatprep.subr.mxu0 0.0
      %3103 = vmatpush1.msra.mxu0 %v2171
      %3104 = vmatprep.subr.mxu0 0.0
      %3105 = vmatpush1.msra.mxu0 %v2170
      %3106 = vmatprep.subr.mxu0 0.0
      %3107 = vmatpush1.msra.mxu0 %v2169
      %3108 = vmatprep.subr.mxu0 0.0
      %3109 = vmatpush1.msra.mxu0 %v2168
      %3110 = vmatprep.subr.mxu0 0.0
      %3111 = vmatpush1.msra.mxu0 %v2167
      %3112 = vmatprep.subr.mxu0 0.0
      %3113 = vmatpush1.msra.mxu0 %v2166
      %3114 = vmatprep.subr.mxu0 0.0
      %3115 = vmatpush1.msra.mxu0 %v2165
      %3116 = vmatprep.subr.mxu0 0.0
      %3117 = vmatpush1.msra.mxu0 %v2164
      %3118 = vmatprep.subr.mxu0 0.0
      %3119 = vmatpush1.msra.mxu0 %v2163
      %3120 = vmatprep.subr.mxu0 0.0
      %3121 = vmatpush1.msra.mxu0 %v2162
      %3122 = vmatprep.subr.mxu0 0.0
      %3123 = vmatpush1.msra.mxu0 %v2161
      %3124 = vmatprep.subr.mxu0 0.0
      %3125 = vmatpush1.msra.mxu0 %v2160
      %3126 = vmatprep.subr.mxu0 0.0
      %3127 = vmatpush1.msra.mxu0 %v2159
      %3128 = vmatprep.subr.mxu0 0.0
      %3129 = vmatpush2.msra.mxu0 %v2190
      %3130 = vmatprep.subr.mxu0 0.0
      %3131 = vmatpush2.msra.mxu0 %v2189
      %3132 = vmatprep.subr.mxu0 0.0
      %3133 = vmatpush2.msra.mxu0 %v2188
      %3134 = vmatprep.subr.mxu0 0.0
      %3135 = vmatpush2.msra.mxu0 %v2187
      %3136 = vmatprep.subr.mxu0 0.0
      %3137 = vmatpush2.msra.mxu0 %v2186
      %3138 = vmatprep.subr.mxu0 0.0
      %3139 = vmatpush2.msra.mxu0 %v2185
      %3140 = vmatprep.subr.mxu0 0.0
      %3141 = vmatpush2.msra.mxu0 %v2184
      %3142 = vmatprep.subr.mxu0 0.0
      %3143 = vmatpush2.msra.mxu0 %v2183
      %3144 = vmatprep.subr.mxu0 0.0
      %3145 = vmatpush2.msra.mxu0 %v2182
      %3146 = vmatprep.subr.mxu0 0.0
      %3147 = vmatpush2.msra.mxu0 %v2181
      %3148 = vmatprep.subr.mxu0 0.0
      %3149 = vmatpush2.msra.mxu0 %v2180
      %3150 = vmatprep.subr.mxu0 0.0
      %3151 = vmatpush2.msra.mxu0 %v2179
      %3152 = vmatprep.subr.mxu0 0.0
      %3153 = vmatpush2.msra.mxu0 %v2178
      %3154 = vmatprep.subr.mxu0 0.0
      %3155 = vmatpush2.msra.mxu0 %v2177
      %3156 = vmatprep.subr.mxu0 0.0
      %3157 = vmatpush2.msra.mxu0 %v2176
      %3158 = vmatprep.subr.mxu0 0.0
      %3159 = vmatpush2.msra.mxu0 %v2175
      %3160 = vmatprep.mubr.f32.mxu0 %v2453
      %3161 = vmatmul.mubr.f32.gmra.mxu0 %v2450
      %v3162 = vpop.f32.mrf.mxu0
      %v3163 = vadd.f32 %v2938, %v3162
      %v3164 = vpop.f32.mrf.mxu0
      %3165 = vmatprep.mubr.f32.mxu0 %v2457
      %3166 = vmatmul.mubr.f32.gmra.mxu0 %v2455
      %v3167 = vpop.f32.mrf.mxu0
      %v3168 = vadd.f32 %v2943, %v3167
      %v3169 = vpop.f32.mrf.mxu0
      %3170 = vmatprep.mubr.f32.mxu0 %v2461
      %3171 = vmatmul.mubr.f32.gmra.mxu0 %v2459
      %v3172 = vpop.f32.mrf.mxu0
      %v3173 = vadd.f32 %v2948, %v3172
      %v3174 = vpop.f32.mrf.mxu0
      %3175 = vmatprep.mubr.f32.mxu0 %v2465
      %3176 = vmatmul.mubr.f32.gmra.mxu0 %v2463
      %v3177 = vpop.f32.mrf.mxu0
      %v3178 = vadd.f32 %v2953, %v3177
      %v3179 = vpop.f32.mrf.mxu0
      %3180 = vmatprep.mubr.f32.mxu0 %v2469
      %3181 = vmatmul.mubr.f32.gmra.mxu0 %v2467
      %v3182 = vpop.f32.mrf.mxu0
      %v3183 = vadd.f32 %v2958, %v3182
      %v3184 = vpop.f32.mrf.mxu0
      %3185 = vmatprep.mubr.f32.mxu0 %v2473
      %3186 = vmatmul.mubr.f32.gmra.mxu0 %v2471
      %v3187 = vpop.f32.mrf.mxu0
      %v3188 = vadd.f32 %v2963, %v3187
      %v3189 = vpop.f32.mrf.mxu0
      %3190 = vmatprep.mubr.f32.mxu0 %v2477
      %3191 = vmatmul.mubr.f32.gmra.mxu0 %v2475
      %v3192 = vpop.f32.mrf.mxu0
      %v3193 = vadd.f32 %v2968, %v3192
      %v3194 = vpop.f32.mrf.mxu0
      %3195 = vmatprep.mubr.f32.mxu0 %v2633
      %3196 = vmatmul.mubr.f32.gmra.mxu0 %v2632
      %v3197 = vpop.f32.mrf.mxu0
      %v3198 = vadd.f32 %v2973, %v3197
      %v3199 = vpop.f32.mrf.mxu0
      %3200 = vmatprep.mubr.f32.mxu0 %v2483
      %3201 = vmatmul.mubr.f32.gmra.mxu0 %v2480
      %v3202 = vpop.f32.mrf.mxu0
      %v3203 = vadd.f32 %v2978, %v3202
      %v3204 = vpop.f32.mrf.mxu0
      %3205 = vmatprep.mubr.f32.mxu0 %v2487
      %3206 = vmatmul.mubr.f32.gmra.mxu0 %v2485
      %v3207 = vpop.f32.mrf.mxu0
      %v3208 = vadd.f32 %v2983, %v3207
      %v3209 = vpop.f32.mrf.mxu0
      %3210 = vmatprep.mubr.f32.mxu0 %v2491
      %3211 = vmatmul.mubr.f32.gmra.mxu0 %v2489
      %v3212 = vpop.f32.mrf.mxu0
      %v3213 = vadd.f32 %v2988, %v3212
      %v3214 = vpop.f32.mrf.mxu0
      %3215 = vmatprep.mubr.f32.mxu0 %v2495
      %3216 = vmatmul.mubr.f32.gmra.mxu0 %v2493
      %v3217 = vpop.f32.mrf.mxu0
      %v3218 = vadd.f32 %v2993, %v3217
      %v3219 = vpop.f32.mrf.mxu0
      %3220 = vmatprep.mubr.f32.mxu0 %v2499
      %3221 = vmatmul.mubr.f32.gmra.mxu0 %v2497
      %v3222 = vpop.f32.mrf.mxu0
      %v3223 = vadd.f32 %v2998, %v3222
      %v3224 = vpop.f32.mrf.mxu0
      %3225 = vmatprep.mubr.f32.mxu0 %v2503
      %3226 = vmatmul.mubr.f32.gmra.mxu0 %v2501
      %v3227 = vpop.f32.mrf.mxu0
      %v3228 = vadd.f32 %v3003, %v3227
      %v3229 = vpop.f32.mrf.mxu0
      %3230 = vmatprep.mubr.f32.mxu0 %v2507
      %3231 = vmatmul.mubr.f32.gmra.mxu0 %v2505
      %v3232 = vpop.f32.mrf.mxu0
      %v3233 = vadd.f32 %v3008, %v3232
      %v3234 = vpop.f32.mrf.mxu0
      %3235 = vmatprep.mubr.f32.mxu0 %v2635
      %3236 = vmatmul.mubr.f32.gmra.mxu0 %v2634
      %v3237 = vpop.f32.mrf.mxu0
      %v3238 = vadd.f32 %v3013, %v3237
      %v3239 = vpop.f32.mrf.mxu0
      %3240 = vmatprep.mubr.f32.mxu0 %v2513
      %3241 = vmatmul.mubr.f32.gmra.mxu0 %v2510
      %v3242 = vpop.f32.mrf.mxu0
      %v3243 = vadd.f32 %v3018, %v3242
      %v3244 = vpop.f32.mrf.mxu0
      %3245 = vmatprep.mubr.f32.mxu0 %v2517
      %3246 = vmatmul.mubr.f32.gmra.mxu0 %v2515
      %v3247 = vpop.f32.mrf.mxu0
      %v3248 = vadd.f32 %v3023, %v3247
      %v3249 = vpop.f32.mrf.mxu0
      %3250 = vmatprep.mubr.f32.mxu0 %v2521
      %3251 = vmatmul.mubr.f32.gmra.mxu0 %v2519
      %v3252 = vpop.f32.mrf.mxu0
      %v3253 = vadd.f32 %v3028, %v3252
      %v3254 = vpop.f32.mrf.mxu0
      %3255 = vmatprep.mubr.f32.mxu0 %v2525
      %3256 = vmatmul.mubr.f32.gmra.mxu0 %v2523
      %v3257 = vpop.f32.mrf.mxu0
      %v3258 = vadd.f32 %v3033, %v3257
      %v3259 = vpop.f32.mrf.mxu0
      %3260 = vmatprep.mubr.f32.mxu0 %v2529
      %3261 = vmatmul.mubr.f32.gmra.mxu0 %v2527
      %v3262 = vpop.f32.mrf.mxu0
      %v3263 = vadd.f32 %v3038, %v3262
      %v3264 = vpop.f32.mrf.mxu0
      %3265 = vmatprep.mubr.f32.mxu0 %v2533
      %3266 = vmatmul.mubr.f32.gmra.mxu0 %v2531
      %v3267 = vpop.f32.mrf.mxu0
      %v3268 = vadd.f32 %v3043, %v3267
      %v3269 = vpop.f32.mrf.mxu0
      %3270 = vmatprep.mubr.f32.mxu0 %v2537
      %3271 = vmatmul.mubr.f32.gmra.mxu0 %v2535
      %v3272 = vpop.f32.mrf.mxu0
      %v3273 = vadd.f32 %v3048, %v3272
      %v3274 = vpop.f32.mrf.mxu0
      %3275 = vmatprep.mubr.f32.mxu0 %v2637
      %3276 = vmatmul.mubr.f32.gmra.mxu0 %v2636
      %v3277 = vpop.f32.mrf.mxu0
      %v3278 = vadd.f32 %v3053, %v3277
      %v3279 = vpop.f32.mrf.mxu0
      %3280 = vmatprep.mubr.f32.mxu0 %v2543
      %3281 = vmatmul.mubr.f32.gmra.mxu0 %v2540
      %v3282 = vpop.f32.mrf.mxu0
      %v3283 = vadd.f32 %v3058, %v3282
      %v3284 = vpop.f32.mrf.mxu0
      %3285 = vmatprep.mubr.f32.mxu0 %v2547
      %3286 = vmatmul.mubr.f32.gmra.mxu0 %v2545
      %v3287 = vpop.f32.mrf.mxu0
      %v3288 = vadd.f32 %v3063, %v3287
      %v3289 = vpop.f32.mrf.mxu0
      %3290 = vmatprep.mubr.f32.mxu0 %v2551
      %3291 = vmatmul.mubr.f32.gmra.mxu0 %v2549
      %v3292 = vpop.f32.mrf.mxu0
      %v3293 = vadd.f32 %v3068, %v3292
      %v3294 = vpop.f32.mrf.mxu0
      %3295 = vmatprep.mubr.f32.mxu0 %v2555
      %3296 = vmatmul.mubr.f32.gmra.mxu0 %v2553
      %v3297 = vpop.f32.mrf.mxu0
      %v3298 = vadd.f32 %v3073, %v3297
      %v3299 = vpop.f32.mrf.mxu0
      %3300 = vmatprep.mubr.f32.mxu0 %v2559
      %3301 = vmatmul.mubr.f32.gmra.mxu0 %v2557
      %v3302 = vpop.f32.mrf.mxu0
      %v3303 = vadd.f32 %v3078, %v3302
      %v3304 = vpop.f32.mrf.mxu0
      %3305 = vmatprep.mubr.f32.mxu0 %v2563
      %3306 = vmatmul.mubr.f32.gmra.mxu0 %v2561
      %v3307 = vpop.f32.mrf.mxu0
      %v3308 = vadd.f32 %v3083, %v3307
      %v3309 = vpop.f32.mrf.mxu0
      %3310 = vmatprep.mubr.f32.mxu0 %v2567
      %3311 = vmatmul.mubr.f32.gmra.mxu0 %v2565
      %v3312 = vpop.f32.mrf.mxu0
      %v3313 = vadd.f32 %v3088, %v3312
      %v3314 = vpop.f32.mrf.mxu0
      %3315 = vmatprep.mubr.f32.mxu0 %v2639
      %3316 = vmatmul.mubr.f32.gmra.mxu0 %v2638
      %v3317 = vpop.f32.mrf.mxu0
      %v3318 = vadd.f32 %v3093, %v3317
      %v3319 = vpop.f32.mrf.mxu0
      %3320 = vdwg.mxu0
      %v3321 = vmax.f32 %v3163, 0.0
      %v3322 = vmax.f32 %v3168, 0.0
      %v3323 = vmax.f32 %v3173, 0.0
      %v3324 = vmax.f32 %v3178, 0.0
      %v3325 = vmax.f32 %v3183, 0.0
      %v3326 = vmax.f32 %v3188, 0.0
      %v3327 = vmax.f32 %v3193, 0.0
      %v3328 = vmax.f32 %v3198, 0.0
      %v3329 = vmax.f32 %v3203, 0.0
      %v3330 = vmax.f32 %v3208, 0.0
      %v3331 = vmax.f32 %v3213, 0.0
      %v3332 = vmax.f32 %v3218, 0.0
      %v3333 = vmax.f32 %v3223, 0.0
      %v3334 = vmax.f32 %v3228, 0.0
      %v3335 = vmax.f32 %v3233, 0.0
      %v3336 = vmax.f32 %v3238, 0.0
      %v3337 = vmax.f32 %v3243, 0.0
      %v3338 = vmax.f32 %v3248, 0.0
      %v3339 = vmax.f32 %v3253, 0.0
      %v3340 = vmax.f32 %v3258, 0.0
      %v3341 = vmax.f32 %v3263, 0.0
      %v3342 = vmax.f32 %v3268, 0.0
      %v3343 = vmax.f32 %v3273, 0.0
      %v3344 = vmax.f32 %v3278, 0.0
      %v3345 = vmax.f32 %v3283, 0.0
      %v3346 = vmax.f32 %v3288, 0.0
      %v3347 = vmax.f32 %v3293, 0.0
      %v3348 = vmax.f32 %v3298, 0.0
      %v3349 = vmax.f32 %v3303, 0.0
      %v3350 = vmax.f32 %v3308, 0.0
      %v3351 = vmax.f32 %v3313, 0.0
      %v3352 = vmax.f32 %v3318, 0.0
      %v3353 = vld [vmem:[%s5] sm:$0xff]
      %v3354 = vld [vmem:[%s5 + $0x8] sm:$0xff]
      %v3355 = vld [vmem:[%s5 + $0x10] sm:$0xff]
      %v3356 = vld [vmem:[%s5 + $0x18] sm:$0xff]
      %v3357 = vld [vmem:[%s5 + $0x20] sm:$0xff]
      %v3358 = vld [vmem:[%s5 + $0x28] sm:$0xff]
      %v3359 = vld [vmem:[%s5 + $0x30] sm:$0xff]
      %v3360 = vld [vmem:[%s5 + $0x38] sm:$0xff]
      %v3361 = vld [vmem:[%s5 + $0x40] sm:$0xff]
      %v3362 = vld [vmem:[%s5 + $0x48] sm:$0xff]
      %v3363 = vld [vmem:[%s5 + $0x50] sm:$0xff]
      %v3364 = vld [vmem:[%s5 + $0x58] sm:$0xff]
      %v3365 = vld [vmem:[%s5 + $0x60] sm:$0xff]
      %v3366 = vld [vmem:[%s5 + $0x68] sm:$0xff]
      %v3367 = vld [vmem:[%s5 + $0x70] sm:$0xff]
      %v3368 = vld [vmem:[%s5 + $0x78] sm:$0xff]
      %v3369 = vld [vmem:[%s5 + $0x80] sm:$0xff]
      %v3370 = vld [vmem:[%s5 + $0x88] sm:$0xff]
      %v3371 = vld [vmem:[%s5 + $0x90] sm:$0xff]
      %v3372 = vld [vmem:[%s5 + $0x98] sm:$0xff]
      %v3373 = vld [vmem:[%s5 + $0xa0] sm:$0xff]
      %v3374 = vld [vmem:[%s5 + $0xa8] sm:$0xff]
      %v3375 = vld [vmem:[%s5 + $0xb0] sm:$0xff]
      %v3376 = vld [vmem:[%s5 + $0xb8] sm:$0xff]
      %v3377 = vld [vmem:[%s5 + $0xc0] sm:$0xff]
      %v3378 = vld [vmem:[%s5 + $0xc8] sm:$0xff]
      %v3379 = vld [vmem:[%s5 + $0xd0] sm:$0xff]
      %v3380 = vld [vmem:[%s5 + $0xd8] sm:$0xff]
      %v3381 = vld [vmem:[%s5 + $0xe0] sm:$0xff]
      %v3382 = vld [vmem:[%s5 + $0xe8] sm:$0xff]
      %v3383 = vld [vmem:[%s5 + $0xf0] sm:$0xff]
      %v3384 = vld [vmem:[%s5 + $0xf8] sm:$0xff]
      %v3385 = vld [vmem:[%s5 + $0x100] sm:$0xff]
      %v3386 = vld [vmem:[%s5 + $0x108] sm:$0xff]
      %v3387 = vld [vmem:[%s5 + $0x110] sm:$0xff]
      %v3388 = vld [vmem:[%s5 + $0x118] sm:$0xff]
      %v3389 = vld [vmem:[%s5 + $0x120] sm:$0xff]
      %v3390 = vld [vmem:[%s5 + $0x128] sm:$0xff]
      %v3391 = vld [vmem:[%s5 + $0x130] sm:$0xff]
      %v3392 = vld [vmem:[%s5 + $0x138] sm:$0xff]
      %v3393 = vld [vmem:[%s5 + $0x140] sm:$0xff]
      %v3394 = vld [vmem:[%s5 + $0x148] sm:$0xff]
      %v3395 = vld [vmem:[%s5 + $0x150] sm:$0xff]
      %v3396 = vld [vmem:[%s5 + $0x158] sm:$0xff]
      %v3397 = vld [vmem:[%s5 + $0x160] sm:$0xff]
      %v3398 = vld [vmem:[%s5 + $0x168] sm:$0xff]
      %v3399 = vld [vmem:[%s5 + $0x170] sm:$0xff]
      %v3400 = vld [vmem:[%s5 + $0x178] sm:$0xff]
      %v3401 = vld [vmem:[%s6] sm:$0x1]
      %v3434 = vrot.slane %v3321, 7
      %v3435 = vrot.slane %v3322, 7
      %v3436 = vsel %vm680, %v3434, %v3435
      %v3437 = vrot.slane %v3323, 7
      %v3438 = vsel %vm680, %v3435, %v3437
      %v3439 = vrot.slane %v3324, 7
      %v3440 = vsel %vm680, %v3437, %v3439
      %v3441 = vrot.slane %v3325, 7
      %v3442 = vsel %vm680, %v3439, %v3441
      %v3443 = vrot.slane %v3326, 7
      %v3444 = vsel %vm680, %v3441, %v3443
      %v3445 = vrot.slane %v3327, 7
      %v3446 = vsel %vm680, %v3443, %v3445
      %v3447 = vrot.slane %v3328, 7
      %v3448 = vsel %vm680, %v3445, %v3447
      %v3449 = vrot.slane %v3329, 7
      %v3450 = vrot.slane %v3330, 7
      %v3451 = vsel %vm680, %v3449, %v3450
      %v3452 = vrot.slane %v3331, 7
      %v3453 = vsel %vm680, %v3450, %v3452
      %v3454 = vrot.slane %v3332, 7
      %v3455 = vsel %vm680, %v3452, %v3454
      %v3456 = vrot.slane %v3333, 7
      %v3457 = vsel %vm680, %v3454, %v3456
      %v3458 = vrot.slane %v3334, 7
      %v3459 = vsel %vm680, %v3456, %v3458
      %v3460 = vrot.slane %v3335, 7
      %v3461 = vsel %vm680, %v3458, %v3460
      %v3462 = vrot.slane %v3336, 7
      %v3463 = vsel %vm680, %v3460, %v3462
      %v3464 = vrot.slane %v3337, 7
      %v3465 = vrot.slane %v3338, 7
      %v3466 = vsel %vm680, %v3464, %v3465
      %v3467 = vrot.slane %v3339, 7
      %v3468 = vsel %vm680, %v3465, %v3467
      %v3469 = vrot.slane %v3340, 7
      %v3470 = vsel %vm680, %v3467, %v3469
      %v3471 = vrot.slane %v3341, 7
      %v3472 = vsel %vm680, %v3469, %v3471
      %v3473 = vrot.slane %v3342, 7
      %v3474 = vsel %vm680, %v3471, %v3473
      %v3475 = vrot.slane %v3343, 7
      %v3476 = vsel %vm680, %v3473, %v3475
      %v3477 = vrot.slane %v3344, 7
      %v3478 = vsel %vm680, %v3475, %v3477
      %v3479 = vrot.slane %v3345, 7
      %v3480 = vrot.slane %v3346, 7
      %v3481 = vsel %vm680, %v3479, %v3480
      %v3482 = vrot.slane %v3347, 7
      %v3483 = vsel %vm680, %v3480, %v3482
      %v3484 = vrot.slane %v3348, 7
      %v3485 = vsel %vm680, %v3482, %v3484
      %v3486 = vrot.slane %v3349, 7
      %v3487 = vsel %vm680, %v3484, %v3486
      %v3488 = vrot.slane %v3350, 7
      %v3489 = vsel %vm680, %v3486, %v3488
      %v3490 = vrot.slane %v3351, 7
      %v3491 = vsel %vm680, %v3488, %v3490
      %v3492 = vrot.slane %v3352, 7
      %v3493 = vsel %vm680, %v3490, %v3492
      %v3526 = vsel %vm680, 0.0, %v3434
      %v3527 = vsel %vm680, 0.0, %v3449
      %v3528 = vsel %vm680, 0.0, %v3464
      %v3529 = vsel %vm680, 0.0, %v3479
      %v3530 = vrot.slane %v3321, 1
      %v3531 = vrot.slane %v3322, 1
      %v3532 = vsel %vm1281, %v3530, %v3531
      %v3533 = vrot.slane %v3323, 1
      %v3534 = vsel %vm1281, %v3531, %v3533
      %v3535 = vrot.slane %v3324, 1
      %v3536 = vsel %vm1281, %v3533, %v3535
      %v3537 = vrot.slane %v3325, 1
      %v3538 = vsel %vm1281, %v3535, %v3537
      %v3539 = vrot.slane %v3326, 1
      %v3540 = vsel %vm1281, %v3537, %v3539
      %v3541 = vrot.slane %v3327, 1
      %v3542 = vsel %vm1281, %v3539, %v3541
      %v3543 = vrot.slane %v3328, 1
      %v3544 = vsel %vm1281, %v3541, %v3543
      %v3545 = vrot.slane %v3329, 1
      %v3546 = vrot.slane %v3330, 1
      %v3547 = vsel %vm1281, %v3545, %v3546
      %v3548 = vrot.slane %v3331, 1
      %v3549 = vsel %vm1281, %v3546, %v3548
      %v3550 = vrot.slane %v3332, 1
      %v3551 = vsel %vm1281, %v3548, %v3550
      %v3552 = vrot.slane %v3333, 1
      %v3553 = vsel %vm1281, %v3550, %v3552
      %v3554 = vrot.slane %v3334, 1
      %v3555 = vsel %vm1281, %v3552, %v3554
      %v3556 = vrot.slane %v3335, 1
      %v3557 = vsel %vm1281, %v3554, %v3556
      %v3558 = vrot.slane %v3336, 1
      %v3559 = vsel %vm1281, %v3556, %v3558
      %v3560 = vrot.slane %v3337, 1
      %v3561 = vrot.slane %v3338, 1
      %v3562 = vsel %vm1281, %v3560, %v3561
      %v3563 = vrot.slane %v3339, 1
      %v3564 = vsel %vm1281, %v3561, %v3563
      %v3565 = vrot.slane %v3340, 1
      %v3566 = vsel %vm1281, %v3563, %v3565
      %v3567 = vrot.slane %v3341, 1
      %v3568 = vsel %vm1281, %v3565, %v3567
      %v3569 = vrot.slane %v3342, 1
      %v3570 = vsel %vm1281, %v3567, %v3569
      %v3571 = vrot.slane %v3343, 1
      %v3572 = vsel %vm1281, %v3569, %v3571
      %v3573 = vrot.slane %v3344, 1
      %v3574 = vsel %vm1281, %v3571, %v3573
      %v3575 = vrot.slane %v3345, 1
      %v3576 = vrot.slane %v3346, 1
      %v3577 = vsel %vm1281, %v3575, %v3576
      %v3578 = vrot.slane %v3347, 1
      %v3579 = vsel %vm1281, %v3576, %v3578
      %v3580 = vrot.slane %v3348, 1
      %v3581 = vsel %vm1281, %v3578, %v3580
      %v3582 = vrot.slane %v3349, 1
      %v3583 = vsel %vm1281, %v3580, %v3582
      %v3584 = vrot.slane %v3350, 1
      %v3585 = vsel %vm1281, %v3582, %v3584
      %v3586 = vrot.slane %v3351, 1
      %v3587 = vsel %vm1281, %v3584, %v3586
      %v3588 = vrot.slane %v3352, 1
      %v3589 = vsel %vm1281, %v3586, %v3588
      %v3622 = vsel %vm1281, %v3543, 0.0
      %v3623 = vsel %vm1281, %v3558, 0.0
      %v3624 = vsel %vm1281, %v3573, 0.0
      %v3625 = vsel %vm1281, %v3588, 0.0
      %v3627 = vlaneseq
      %v3628 = vshrl.u32 %v3627, 7
      %v3629 = vsub.s32 0, %v3628
      %v3630 = vrot.slane %v3401, %v3629
      %3632 = vmatprep.subr.mxu0 0.0
      %3633 = vmatpush1.msra.mxu0 %v3368
      %3634 = vmatprep.subr.mxu0 0.0
      %3635 = vmatpush1.msra.mxu0 %v3367
      %3636 = vmatprep.subr.mxu0 0.0
      %3637 = vmatpush1.msra.mxu0 %v3366
      %3638 = vmatprep.subr.mxu0 0.0
      %3639 = vmatpush1.msra.mxu0 %v3365
      %3640 = vmatprep.subr.mxu0 0.0
      %3641 = vmatpush1.msra.mxu0 %v3364
      %3642 = vmatprep.subr.mxu0 0.0
      %3643 = vmatpush1.msra.mxu0 %v3363
      %3644 = vmatprep.subr.mxu0 0.0
      %3645 = vmatpush1.msra.mxu0 %v3362
      %3646 = vmatprep.subr.mxu0 0.0
      %3647 = vmatpush1.msra.mxu0 %v3361
      %3648 = vmatprep.subr.mxu0 0.0
      %3649 = vmatpush1.msra.mxu0 %v3360
      %3650 = vmatprep.subr.mxu0 0.0
      %3651 = vmatpush1.msra.mxu0 %v3359
      %3652 = vmatprep.subr.mxu0 0.0
      %3653 = vmatpush1.msra.mxu0 %v3358
      %3654 = vmatprep.subr.mxu0 0.0
      %3655 = vmatpush1.msra.mxu0 %v3357
      %3656 = vmatprep.subr.mxu0 0.0
      %3657 = vmatpush1.msra.mxu0 %v3356
      %3658 = vmatprep.subr.mxu0 0.0
      %3659 = vmatpush1.msra.mxu0 %v3355
      %3660 = vmatprep.subr.mxu0 0.0
      %3661 = vmatpush1.msra.mxu0 %v3354
      %3662 = vmatprep.subr.mxu0 0.0
      %3663 = vmatpush1.msra.mxu0 %v3353
      %3664 = vmatprep.subr.mxu0 0.0
      %3665 = vmatpush2.msra.mxu0 %v3384
      %3666 = vmatprep.subr.mxu0 0.0
      %3667 = vmatpush2.msra.mxu0 %v3383
      %3668 = vmatprep.subr.mxu0 0.0
      %3669 = vmatpush2.msra.mxu0 %v3382
      %3670 = vmatprep.subr.mxu0 0.0
      %3671 = vmatpush2.msra.mxu0 %v3381
      %3672 = vmatprep.subr.mxu0 0.0
      %3673 = vmatpush2.msra.mxu0 %v3380
      %3674 = vmatprep.subr.mxu0 0.0
      %3675 = vmatpush2.msra.mxu0 %v3379
      %3676 = vmatprep.subr.mxu0 0.0
      %3677 = vmatpush2.msra.mxu0 %v3378
      %3678 = vmatprep.subr.mxu0 0.0
      %3679 = vmatpush2.msra.mxu0 %v3377
      %3680 = vmatprep.subr.mxu0 0.0
      %3681 = vmatpush2.msra.mxu0 %v3376
      %3682 = vmatprep.subr.mxu0 0.0
      %3683 = vmatpush2.msra.mxu0 %v3375
      %3684 = vmatprep.subr.mxu0 0.0
      %3685 = vmatpush2.msra.mxu0 %v3374
      %3686 = vmatprep.subr.mxu0 0.0
      %3687 = vmatpush2.msra.mxu0 %v3373
      %3688 = vmatprep.subr.mxu0 0.0
      %3689 = vmatpush2.msra.mxu0 %v3372
      %3690 = vmatprep.subr.mxu0 0.0
      %3691 = vmatpush2.msra.mxu0 %v3371
      %3692 = vmatprep.subr.mxu0 0.0
      %3693 = vmatpush2.msra.mxu0 %v3370
      %3694 = vmatprep.subr.mxu0 0.0
      %3695 = vmatpush2.msra.mxu0 %v3369
      %3696 = vmatprep.mubr.f32.mxu0 %v3321
      %3697 = vmatmul.mubr.f32.gmra.mxu0 %v3526
      %v3698 = vpop.f32.mrf.mxu0
      %v3699 = vadd.f32 %v3630, %v3698
      %v3700 = vpop.f32.mrf.mxu0
      %3701 = vmatprep.mubr.f32.mxu0 %v3322
      %3702 = vmatmul.mubr.f32.gmra.mxu0 %v3436
      %v3703 = vpop.f32.mrf.mxu0
      %v3704 = vadd.f32 %v3630, %v3703
      %v3705 = vpop.f32.mrf.mxu0
      %3706 = vmatprep.mubr.f32.mxu0 %v3323
      %3707 = vmatmul.mubr.f32.gmra.mxu0 %v3438
      %v3708 = vpop.f32.mrf.mxu0
      %v3709 = vadd.f32 %v3630, %v3708
      %v3710 = vpop.f32.mrf.mxu0
      %3711 = vmatprep.mubr.f32.mxu0 %v3324
      %3712 = vmatmul.mubr.f32.gmra.mxu0 %v3440
      %v3713 = vpop.f32.mrf.mxu0
      %v3714 = vadd.f32 %v3630, %v3713
      %v3715 = vpop.f32.mrf.mxu0
      %3716 = vmatprep.mubr.f32.mxu0 %v3325
      %3717 = vmatmul.mubr.f32.gmra.mxu0 %v3442
      %v3718 = vpop.f32.mrf.mxu0
      %v3719 = vadd.f32 %v3630, %v3718
      %v3720 = vpop.f32.mrf.mxu0
      %3721 = vmatprep.mubr.f32.mxu0 %v3326
      %3722 = vmatmul.mubr.f32.gmra.mxu0 %v3444
      %v3723 = vpop.f32.mrf.mxu0
      %v3724 = vadd.f32 %v3630, %v3723
      %v3725 = vpop.f32.mrf.mxu0
      %3726 = vmatprep.mubr.f32.mxu0 %v3327
      %3727 = vmatmul.mubr.f32.gmra.mxu0 %v3446
      %v3728 = vpop.f32.mrf.mxu0
      %v3729 = vadd.f32 %v3630, %v3728
      %v3730 = vpop.f32.mrf.mxu0
      %3731 = vmatprep.mubr.f32.mxu0 %v3328
      %3732 = vmatmul.mubr.f32.gmra.mxu0 %v3448
      %v3733 = vpop.f32.mrf.mxu0
      %v3734 = vadd.f32 %v3630, %v3733
      %v3735 = vpop.f32.mrf.mxu0
      %3736 = vmatprep.mubr.f32.mxu0 %v3329
      %3737 = vmatmul.mubr.f32.gmra.mxu0 %v3527
      %v3738 = vpop.f32.mrf.mxu0
      %v3739 = vadd.f32 %v3630, %v3738
      %v3740 = vpop.f32.mrf.mxu0
      %3741 = vmatprep.mubr.f32.mxu0 %v3330
      %3742 = vmatmul.mubr.f32.gmra.mxu0 %v3451
      %v3743 = vpop.f32.mrf.mxu0
      %v3744 = vadd.f32 %v3630, %v3743
      %v3745 = vpop.f32.mrf.mxu0
      %3746 = vmatprep.mubr.f32.mxu0 %v3331
      %3747 = vmatmul.mubr.f32.gmra.mxu0 %v3453
      %v3748 = vpop.f32.mrf.mxu0
      %v3749 = vadd.f32 %v3630, %v3748
      %v3750 = vpop.f32.mrf.mxu0
      %3751 = vmatprep.mubr.f32.mxu0 %v3332
      %3752 = vmatmul.mubr.f32.gmra.mxu0 %v3455
      %v3753 = vpop.f32.mrf.mxu0
      %v3754 = vadd.f32 %v3630, %v3753
      %v3755 = vpop.f32.mrf.mxu0
      %3756 = vmatprep.mubr.f32.mxu0 %v3333
      %3757 = vmatmul.mubr.f32.gmra.mxu0 %v3457
      %v3758 = vpop.f32.mrf.mxu0
      %v3759 = vadd.f32 %v3630, %v3758
      %v3760 = vpop.f32.mrf.mxu0
      %3761 = vmatprep.mubr.f32.mxu0 %v3334
      %3762 = vmatmul.mubr.f32.gmra.mxu0 %v3459
      %v3763 = vpop.f32.mrf.mxu0
      %v3764 = vadd.f32 %v3630, %v3763
      %v3765 = vpop.f32.mrf.mxu0
      %3766 = vmatprep.mubr.f32.mxu0 %v3335
      %3767 = vmatmul.mubr.f32.gmra.mxu0 %v3461
      %v3768 = vpop.f32.mrf.mxu0
      %v3769 = vadd.f32 %v3630, %v3768
      %v3770 = vpop.f32.mrf.mxu0
      %3771 = vmatprep.mubr.f32.mxu0 %v3336
      %3772 = vmatmul.mubr.f32.gmra.mxu0 %v3463
      %v3773 = vpop.f32.mrf.mxu0
      %v3774 = vadd.f32 %v3630, %v3773
      %v3775 = vpop.f32.mrf.mxu0
      %3776 = vmatprep.mubr.f32.mxu0 %v3337
      %3777 = vmatmul.mubr.f32.gmra.mxu0 %v3528
      %v3778 = vpop.f32.mrf.mxu0
      %v3779 = vadd.f32 %v3630, %v3778
      %v3780 = vpop.f32.mrf.mxu0
      %3781 = vmatprep.mubr.f32.mxu0 %v3338
      %3782 = vmatmul.mubr.f32.gmra.mxu0 %v3466
      %v3783 = vpop.f32.mrf.mxu0
      %v3784 = vadd.f32 %v3630, %v3783
      %v3785 = vpop.f32.mrf.mxu0
      %3786 = vmatprep.mubr.f32.mxu0 %v3339
      %3787 = vmatmul.mubr.f32.gmra.mxu0 %v3468
      %v3788 = vpop.f32.mrf.mxu0
      %v3789 = vadd.f32 %v3630, %v3788
      %v3790 = vpop.f32.mrf.mxu0
      %3791 = vmatprep.mubr.f32.mxu0 %v3340
      %3792 = vmatmul.mubr.f32.gmra.mxu0 %v3470
      %v3793 = vpop.f32.mrf.mxu0
      %v3794 = vadd.f32 %v3630, %v3793
      %v3795 = vpop.f32.mrf.mxu0
      %3796 = vmatprep.mubr.f32.mxu0 %v3341
      %3797 = vmatmul.mubr.f32.gmra.mxu0 %v3472
      %v3798 = vpop.f32.mrf.mxu0
      %v3799 = vadd.f32 %v3630, %v3798
      %v3800 = vpop.f32.mrf.mxu0
      %3801 = vmatprep.mubr.f32.mxu0 %v3342
      %3802 = vmatmul.mubr.f32.gmra.mxu0 %v3474
      %v3803 = vpop.f32.mrf.mxu0
      %v3804 = vadd.f32 %v3630, %v3803
      %v3805 = vpop.f32.mrf.mxu0
      %3806 = vmatprep.mubr.f32.mxu0 %v3343
      %3807 = vmatmul.mubr.f32.gmra.mxu0 %v3476
      %v3808 = vpop.f32.mrf.mxu0
      %v3809 = vadd.f32 %v3630, %v3808
      %v3810 = vpop.f32.mrf.mxu0
      %3811 = vmatprep.mubr.f32.mxu0 %v3344
      %3812 = vmatmul.mubr.f32.gmra.mxu0 %v3478
      %v3813 = vpop.f32.mrf.mxu0
      %v3814 = vadd.f32 %v3630, %v3813
      %v3815 = vpop.f32.mrf.mxu0
      %3816 = vmatprep.mubr.f32.mxu0 %v3345
      %3817 = vmatmul.mubr.f32.gmra.mxu0 %v3529
      %v3818 = vpop.f32.mrf.mxu0
      %v3819 = vadd.f32 %v3630, %v3818
      %v3820 = vpop.f32.mrf.mxu0
      %3821 = vmatprep.mubr.f32.mxu0 %v3346
      %3822 = vmatmul.mubr.f32.gmra.mxu0 %v3481
      %v3823 = vpop.f32.mrf.mxu0
      %v3824 = vadd.f32 %v3630, %v3823
      %v3825 = vpop.f32.mrf.mxu0
      %3826 = vmatprep.mubr.f32.mxu0 %v3347
      %3827 = vmatmul.mubr.f32.gmra.mxu0 %v3483
      %v3828 = vpop.f32.mrf.mxu0
      %v3829 = vadd.f32 %v3630, %v3828
      %v3830 = vpop.f32.mrf.mxu0
      %3831 = vmatprep.mubr.f32.mxu0 %v3348
      %3832 = vmatmul.mubr.f32.gmra.mxu0 %v3485
      %v3833 = vpop.f32.mrf.mxu0
      %v3834 = vadd.f32 %v3630, %v3833
      %v3835 = vpop.f32.mrf.mxu0
      %3836 = vmatprep.mubr.f32.mxu0 %v3349
      %3837 = vmatmul.mubr.f32.gmra.mxu0 %v3487
      %v3838 = vpop.f32.mrf.mxu0
      %v3839 = vadd.f32 %v3630, %v3838
      %v3840 = vpop.f32.mrf.mxu0
      %3841 = vmatprep.mubr.f32.mxu0 %v3350
      %3842 = vmatmul.mubr.f32.gmra.mxu0 %v3489
      %v3843 = vpop.f32.mrf.mxu0
      %v3844 = vadd.f32 %v3630, %v3843
      %v3845 = vpop.f32.mrf.mxu0
      %3846 = vmatprep.mubr.f32.mxu0 %v3351
      %3847 = vmatmul.mubr.f32.gmra.mxu0 %v3491
      %v3848 = vpop.f32.mrf.mxu0
      %v3849 = vadd.f32 %v3630, %v3848
      %v3850 = vpop.f32.mrf.mxu0
      %3851 = vmatprep.mubr.f32.mxu0 %v3352
      %3852 = vmatmul.mubr.f32.gmra.mxu0 %v3493
      %v3853 = vpop.f32.mrf.mxu0
      %v3854 = vadd.f32 %v3630, %v3853
      %v3855 = vpop.f32.mrf.mxu0
      %3856 = vdwg.mxu0
      %3857 = vmatprep.subr.mxu0 0.0
      %3858 = vmatpush1.msra.mxu0 %v3400
      %3859 = vmatprep.subr.mxu0 0.0
      %3860 = vmatpush1.msra.mxu0 %v3399
      %3861 = vmatprep.subr.mxu0 0.0
      %3862 = vmatpush1.msra.mxu0 %v3398
      %3863 = vmatprep.subr.mxu0 0.0
      %3864 = vmatpush1.msra.mxu0 %v3397
      %3865 = vmatprep.subr.mxu0 0.0
      %3866 = vmatpush1.msra.mxu0 %v3396
      %3867 = vmatprep.subr.mxu0 0.0
      %3868 = vmatpush1.msra.mxu0 %v3395
      %3869 = vmatprep.subr.mxu0 0.0
      %3870 = vmatpush1.msra.mxu0 %v3394
      %3871 = vmatprep.subr.mxu0 0.0
      %3872 = vmatpush1.msra.mxu0 %v3393
      %3873 = vmatprep.subr.mxu0 0.0
      %3874 = vmatpush1.msra.mxu0 %v3392
      %3875 = vmatprep.subr.mxu0 0.0
      %3876 = vmatpush1.msra.mxu0 %v3391
      %3877 = vmatprep.subr.mxu0 0.0
      %3878 = vmatpush1.msra.mxu0 %v3390
      %3879 = vmatprep.subr.mxu0 0.0
      %3880 = vmatpush1.msra.mxu0 %v3389
      %3881 = vmatprep.subr.mxu0 0.0
      %3882 = vmatpush1.msra.mxu0 %v3388
      %3883 = vmatprep.subr.mxu0 0.0
      %3884 = vmatpush1.msra.mxu0 %v3387
      %3885 = vmatprep.subr.mxu0 0.0
      %3886 = vmatpush1.msra.mxu0 %v3386
      %3887 = vmatprep.subr.mxu0 0.0
      %3888 = vmatpush1.msra.mxu0 %v3385
      %3889 = vmatprep.subr.mxu0 0.0
      %3890 = vmatpush2.msra.mxu0 0.0
      %3891 = vmatprep.subr.mxu0 0.0
      %3892 = vmatpush2.msra.mxu0 0.0
      %3893 = vmatprep.subr.mxu0 0.0
      %3894 = vmatpush2.msra.mxu0 0.0
      %3895 = vmatprep.subr.mxu0 0.0
      %3896 = vmatpush2.msra.mxu0 0.0
      %3897 = vmatprep.subr.mxu0 0.0
      %3898 = vmatpush2.msra.mxu0 0.0
      %3899 = vmatprep.subr.mxu0 0.0
      %3900 = vmatpush2.msra.mxu0 0.0
      %3901 = vmatprep.subr.mxu0 0.0
      %3902 = vmatpush2.msra.mxu0 0.0
      %3903 = vmatprep.subr.mxu0 0.0
      %3904 = vmatpush2.msra.mxu0 0.0
      %3905 = vmatprep.subr.mxu0 0.0
      %3906 = vmatpush2.msra.mxu0 0.0
      %3907 = vmatprep.subr.mxu0 0.0
      %3908 = vmatpush2.msra.mxu0 0.0
      %3909 = vmatprep.subr.mxu0 0.0
      %3910 = vmatpush2.msra.mxu0 0.0
      %3911 = vmatprep.subr.mxu0 0.0
      %3912 = vmatpush2.msra.mxu0 0.0
      %3913 = vmatprep.subr.mxu0 0.0
      %3914 = vmatpush2.msra.mxu0 0.0
      %3915 = vmatprep.subr.mxu0 0.0
      %3916 = vmatpush2.msra.mxu0 0.0
      %3917 = vmatprep.subr.mxu0 0.0
      %3918 = vmatpush2.msra.mxu0 0.0
      %3919 = vmatprep.subr.mxu0 0.0
      %3920 = vmatpush2.msra.mxu0 0.0
      %3921 = vmatprep.mubr.f32.mxu0 0.0
      %3922 = vmatmul.mubr.f32.gmra.mxu0 %v3532
      %v3923 = vpop.f32.mrf.mxu0
      %v3924 = vadd.f32 %v3699, %v3923
      %v3925 = vpop.f32.mrf.mxu0
      %3926 = vmatprep.mubr.f32.mxu0 0.0
      %3927 = vmatmul.mubr.f32.gmra.mxu0 %v3534
      %v3928 = vpop.f32.mrf.mxu0
      %v3929 = vadd.f32 %v3704, %v3928
      %v3930 = vpop.f32.mrf.mxu0
      %3931 = vmatprep.mubr.f32.mxu0 0.0
      %3932 = vmatmul.mubr.f32.gmra.mxu0 %v3536
      %v3933 = vpop.f32.mrf.mxu0
      %v3934 = vadd.f32 %v3709, %v3933
      %v3935 = vpop.f32.mrf.mxu0
      %3936 = vmatprep.mubr.f32.mxu0 0.0
      %3937 = vmatmul.mubr.f32.gmra.mxu0 %v3538
      %v3938 = vpop.f32.mrf.mxu0
      %v3939 = vadd.f32 %v3714, %v3938
      %v3940 = vpop.f32.mrf.mxu0
      %3941 = vmatprep.mubr.f32.mxu0 0.0
      %3942 = vmatmul.mubr.f32.gmra.mxu0 %v3540
      %v3943 = vpop.f32.mrf.mxu0
      %v3944 = vadd.f32 %v3719, %v3943
      %v3945 = vpop.f32.mrf.mxu0
      %3946 = vmatprep.mubr.f32.mxu0 0.0
      %3947 = vmatmul.mubr.f32.gmra.mxu0 %v3542
      %v3948 = vpop.f32.mrf.mxu0
      %v3949 = vadd.f32 %v3724, %v3948
      %v3950 = vpop.f32.mrf.mxu0
      %3951 = vmatprep.mubr.f32.mxu0 0.0
      %3952 = vmatmul.mubr.f32.gmra.mxu0 %v3544
      %v3953 = vpop.f32.mrf.mxu0
      %v3954 = vadd.f32 %v3729, %v3953
      %v3955 = vpop.f32.mrf.mxu0
      %3956 = vmatprep.mubr.f32.mxu0 0.0
      %3957 = vmatmul.mubr.f32.gmra.mxu0 %v3622
      %v3958 = vpop.f32.mrf.mxu0
      %v3959 = vadd.f32 %v3734, %v3958
      %v3960 = vpop.f32.mrf.mxu0
      %3961 = vmatprep.mubr.f32.mxu0 0.0
      %3962 = vmatmul.mubr.f32.gmra.mxu0 %v3547
      %v3963 = vpop.f32.mrf.mxu0
      %v3964 = vadd.f32 %v3739, %v3963
      %v3965 = vpop.f32.mrf.mxu0
      %3966 = vmatprep.mubr.f32.mxu0 0.0
      %3967 = vmatmul.mubr.f32.gmra.mxu0 %v3549
      %v3968 = vpop.f32.mrf.mxu0
      %v3969 = vadd.f32 %v3744, %v3968
      %v3970 = vpop.f32.mrf.mxu0
      %3971 = vmatprep.mubr.f32.mxu0 0.0
      %3972 = vmatmul.mubr.f32.gmra.mxu0 %v3551
      %v3973 = vpop.f32.mrf.mxu0
      %v3974 = vadd.f32 %v3749, %v3973
      %v3975 = vpop.f32.mrf.mxu0
      %3976 = vmatprep.mubr.f32.mxu0 0.0
      %3977 = vmatmul.mubr.f32.gmra.mxu0 %v3553
      %v3978 = vpop.f32.mrf.mxu0
      %v3979 = vadd.f32 %v3754, %v3978
      %v3980 = vpop.f32.mrf.mxu0
      %3981 = vmatprep.mubr.f32.mxu0 0.0
      %3982 = vmatmul.mubr.f32.gmra.mxu0 %v3555
      %v3983 = vpop.f32.mrf.mxu0
      %v3984 = vadd.f32 %v3759, %v3983
      %v3985 = vpop.f32.mrf.mxu0
      %3986 = vmatprep.mubr.f32.mxu0 0.0
      %3987 = vmatmul.mubr.f32.gmra.mxu0 %v3557
      %v3988 = vpop.f32.mrf.mxu0
      %v3989 = vadd.f32 %v3764, %v3988
      %v3990 = vpop.f32.mrf.mxu0
      %3991 = vmatprep.mubr.f32.mxu0 0.0
      %3992 = vmatmul.mubr.f32.gmra.mxu0 %v3559
      %v3993 = vpop.f32.mrf.mxu0
      %v3994 = vadd.f32 %v3769, %v3993
      %v3995 = vpop.f32.mrf.mxu0
      %3996 = vmatprep.mubr.f32.mxu0 0.0
      %3997 = vmatmul.mubr.f32.gmra.mxu0 %v3623
      %v3998 = vpop.f32.mrf.mxu0
      %v3999 = vadd.f32 %v3774, %v3998
      %v4000 = vpop.f32.mrf.mxu0
      %4001 = vmatprep.mubr.f32.mxu0 0.0
      %4002 = vmatmul.mubr.f32.gmra.mxu0 %v3562
      %v4003 = vpop.f32.mrf.mxu0
      %v4004 = vadd.f32 %v3779, %v4003
      %v4005 = vpop.f32.mrf.mxu0
      %4006 = vmatprep.mubr.f32.mxu0 0.0
      %4007 = vmatmul.mubr.f32.gmra.mxu0 %v3564
      %v4008 = vpop.f32.mrf.mxu0
      %v4009 = vadd.f32 %v3784, %v4008
      %v4010 = vpop.f32.mrf.mxu0
      %4011 = vmatprep.mubr.f32.mxu0 0.0
      %4012 = vmatmul.mubr.f32.gmra.mxu0 %v3566
      %v4013 = vpop.f32.mrf.mxu0
      %v4014 = vadd.f32 %v3789, %v4013
      %v4015 = vpop.f32.mrf.mxu0
      %4016 = vmatprep.mubr.f32.mxu0 0.0
      %4017 = vmatmul.mubr.f32.gmra.mxu0 %v3568
      %v4018 = vpop.f32.mrf.mxu0
      %v4019 = vadd.f32 %v3794, %v4018
      %v4020 = vpop.f32.mrf.mxu0
      %4021 = vmatprep.mubr.f32.mxu0 0.0
      %4022 = vmatmul.mubr.f32.gmra.mxu0 %v3570
      %v4023 = vpop.f32.mrf.mxu0
      %v4024 = vadd.f32 %v3799, %v4023
      %v4025 = vpop.f32.mrf.mxu0
      %4026 = vmatprep.mubr.f32.mxu0 0.0
      %4027 = vmatmul.mubr.f32.gmra.mxu0 %v3572
      %v4028 = vpop.f32.mrf.mxu0
      %v4029 = vadd.f32 %v3804, %v4028
      %v4030 = vpop.f32.mrf.mxu0
      %4031 = vmatprep.mubr.f32.mxu0 0.0
      %4032 = vmatmul.mubr.f32.gmra.mxu0 %v3574
      %v4033 = vpop.f32.mrf.mxu0
      %v4034 = vadd.f32 %v3809, %v4033
      %v4035 = vpop.f32.mrf.mxu0
      %4036 = vmatprep.mubr.f32.mxu0 0.0
      %4037 = vmatmul.mubr.f32.gmra.mxu0 %v3624
      %v4038 = vpop.f32.mrf.mxu0
      %v4039 = vadd.f32 %v3814, %v4038
      %v4040 = vpop.f32.mrf.mxu0
      %4041 = vmatprep.mubr.f32.mxu0 0.0
      %4042 = vmatmul.mubr.f32.gmra.mxu0 %v3577
      %v4043 = vpop.f32.mrf.mxu0
      %v4044 = vadd.f32 %v3819, %v4043
      %v4045 = vpop.f32.mrf.mxu0
      %4046 = vmatprep.mubr.f32.mxu0 0.0
      %4047 = vmatmul.mubr.f32.gmra.mxu0 %v3579
      %v4048 = vpop.f32.mrf.mxu0
      %v4049 = vadd.f32 %v3824, %v4048
      %v4050 = vpop.f32.mrf.mxu0
      %4051 = vmatprep.mubr.f32.mxu0 0.0
      %4052 = vmatmul.mubr.f32.gmra.mxu0 %v3581
      %v4053 = vpop.f32.mrf.mxu0
      %v4054 = vadd.f32 %v3829, %v4053
      %v4055 = vpop.f32.mrf.mxu0
      %4056 = vmatprep.mubr.f32.mxu0 0.0
      %4057 = vmatmul.mubr.f32.gmra.mxu0 %v3583
      %v4058 = vpop.f32.mrf.mxu0
      %v4059 = vadd.f32 %v3834, %v4058
      %v4060 = vpop.f32.mrf.mxu0
      %4061 = vmatprep.mubr.f32.mxu0 0.0
      %4062 = vmatmul.mubr.f32.gmra.mxu0 %v3585
      %v4063 = vpop.f32.mrf.mxu0
      %v4064 = vadd.f32 %v3839, %v4063
      %v4065 = vpop.f32.mrf.mxu0
      %4066 = vmatprep.mubr.f32.mxu0 0.0
      %4067 = vmatmul.mubr.f32.gmra.mxu0 %v3587
      %v4068 = vpop.f32.mrf.mxu0
      %v4069 = vadd.f32 %v3844, %v4068
      %v4070 = vpop.f32.mrf.mxu0
      %4071 = vmatprep.mubr.f32.mxu0 0.0
      %4072 = vmatmul.mubr.f32.gmra.mxu0 %v3589
      %v4073 = vpop.f32.mrf.mxu0
      %v4074 = vadd.f32 %v3849, %v4073
      %v4075 = vpop.f32.mrf.mxu0
      %4076 = vmatprep.mubr.f32.mxu0 0.0
      %4077 = vmatmul.mubr.f32.gmra.mxu0 %v3625
      %v4078 = vpop.f32.mrf.mxu0
      %v4079 = vadd.f32 %v3854, %v4078
      %v4080 = vpop.f32.mrf.mxu0
      %4081 = vdwg.mxu0
      %v4082 = vmax.f32 %v3924, 0.0
      %v4083 = vmax.f32 %v3929, 0.0
      %v4084 = vmax.f32 %v3934, 0.0
      %v4085 = vmax.f32 %v3939, 0.0
      %v4086 = vmax.f32 %v3944, 0.0
      %v4087 = vmax.f32 %v3949, 0.0
      %v4088 = vmax.f32 %v3954, 0.0
      %v4089 = vmax.f32 %v3959, 0.0
      %v4090 = vmax.f32 %v3964, 0.0
      %v4091 = vmax.f32 %v3969, 0.0
      %v4092 = vmax.f32 %v3974, 0.0
      %v4093 = vmax.f32 %v3979, 0.0
      %v4094 = vmax.f32 %v3984, 0.0
      %v4095 = vmax.f32 %v3989, 0.0
      %v4096 = vmax.f32 %v3994, 0.0
      %v4097 = vmax.f32 %v3999, 0.0
      %v4098 = vmax.f32 %v4004, 0.0
      %v4099 = vmax.f32 %v4009, 0.0
      %v4100 = vmax.f32 %v4014, 0.0
      %v4101 = vmax.f32 %v4019, 0.0
      %v4102 = vmax.f32 %v4024, 0.0
      %v4103 = vmax.f32 %v4029, 0.0
      %v4104 = vmax.f32 %v4034, 0.0
      %v4105 = vmax.f32 %v4039, 0.0
      %v4106 = vmax.f32 %v4044, 0.0
      %v4107 = vmax.f32 %v4049, 0.0
      %v4108 = vmax.f32 %v4054, 0.0
      %v4109 = vmax.f32 %v4059, 0.0
      %v4110 = vmax.f32 %v4064, 0.0
      %v4111 = vmax.f32 %v4069, 0.0
      %v4112 = vmax.f32 %v4074, 0.0
      %v4113 = vmax.f32 %v4079, 0.0
      %v4114 = vld [vmem:[%s7] sm:$0xff]
      %v4115 = vld [vmem:[%s7 + $0x8] sm:$0xff]
      %v4116 = vld [vmem:[%s7 + $0x10] sm:$0xff]
      %v4117 = vld [vmem:[%s7 + $0x18] sm:$0xff]
      %v4118 = vld [vmem:[%s7 + $0x20] sm:$0xff]
      %v4119 = vld [vmem:[%s7 + $0x28] sm:$0xff]
      %v4120 = vld [vmem:[%s7 + $0x30] sm:$0xff]
      %v4121 = vld [vmem:[%s7 + $0x38] sm:$0xff]
      %v4122 = vld [vmem:[%s7 + $0x40] sm:$0xff]
      %v4123 = vld [vmem:[%s7 + $0x48] sm:$0xff]
      %v4124 = vld [vmem:[%s7 + $0x50] sm:$0xff]
      %v4125 = vld [vmem:[%s7 + $0x58] sm:$0xff]
      %v4126 = vld [vmem:[%s7 + $0x60] sm:$0xff]
      %v4127 = vld [vmem:[%s7 + $0x68] sm:$0xff]
      %v4128 = vld [vmem:[%s7 + $0x70] sm:$0xff]
      %v4129 = vld [vmem:[%s7 + $0x78] sm:$0xff]
      %v4130 = vld [vmem:[%s7 + $0x80] sm:$0xff]
      %v4131 = vld [vmem:[%s7 + $0x88] sm:$0xff]
      %v4132 = vld [vmem:[%s7 + $0x90] sm:$0xff]
      %v4133 = vld [vmem:[%s7 + $0x98] sm:$0xff]
      %v4134 = vld [vmem:[%s7 + $0xa0] sm:$0xff]
      %v4135 = vld [vmem:[%s7 + $0xa8] sm:$0xff]
      %v4136 = vld [vmem:[%s7 + $0xb0] sm:$0xff]
      %v4137 = vld [vmem:[%s7 + $0xb8] sm:$0xff]
      %v4138 = vld [vmem:[%s8] sm:$0x1]
      %v4140 = vlaneseq
      %v4141 = vshrl.u32 %v4140, 7
      %v4142 = vsub.s32 0, %v4141
      %v4143 = vrot.slane %v4138, %v4142
      %v4145 = vadd.f32 %v4143, 0.0
      %v4178 = vrot.slane %v4082, 7
      %v4179 = vrot.slane %v4083, 7
      %v4180 = vsel %vm680, %v4178, %v4179
      %v4181 = vrot.slane %v4084, 7
      %v4182 = vsel %vm680, %v4179, %v4181
      %v4183 = vrot.slane %v4085, 7
      %v4184 = vsel %vm680, %v4181, %v4183
      %v4185 = vrot.slane %v4086, 7
      %v4186 = vsel %vm680, %v4183, %v4185
      %v4187 = vrot.slane %v4087, 7
      %v4188 = vsel %vm680, %v4185, %v4187
      %v4189 = vrot.slane %v4088, 7
      %v4190 = vsel %vm680, %v4187, %v4189
      %v4191 = vrot.slane %v4089, 7
      %v4192 = vsel %vm680, %v4189, %v4191
      %v4193 = vrot.slane %v4090, 7
      %v4194 = vrot.slane %v4091, 7
      %v4195 = vsel %vm680, %v4193, %v4194
      %v4196 = vrot.slane %v4092, 7
      %v4197 = vsel %vm680, %v4194, %v4196
      %v4198 = vrot.slane %v4093, 7
      %v4199 = vsel %vm680, %v4196, %v4198
      %v4200 = vrot.slane %v4094, 7
      %v4201 = vsel %vm680, %v4198, %v4200
      %v4202 = vrot.slane %v4095, 7
      %v4203 = vsel %vm680, %v4200, %v4202
      %v4204 = vrot.slane %v4096, 7
      %v4205 = vsel %vm680, %v4202, %v4204
      %v4206 = vrot.slane %v4097, 7
      %v4207 = vsel %vm680, %v4204, %v4206
      %v4208 = vrot.slane %v4098, 7
      %v4209 = vrot.slane %v4099, 7
      %v4210 = vsel %vm680, %v4208, %v4209
      %v4211 = vrot.slane %v4100, 7
      %v4212 = vsel %vm680, %v4209, %v4211
      %v4213 = vrot.slane %v4101, 7
      %v4214 = vsel %vm680, %v4211, %v4213
      %v4215 = vrot.slane %v4102, 7
      %v4216 = vsel %vm680, %v4213, %v4215
      %v4217 = vrot.slane %v4103, 7
      %v4218 = vsel %vm680, %v4215, %v4217
      %v4219 = vrot.slane %v4104, 7
      %v4220 = vsel %vm680, %v4217, %v4219
      %v4221 = vrot.slane %v4105, 7
      %v4222 = vsel %vm680, %v4219, %v4221
      %v4223 = vrot.slane %v4106, 7
      %v4224 = vrot.slane %v4107, 7
      %v4225 = vsel %vm680, %v4223, %v4224
      %v4226 = vrot.slane %v4108, 7
      %v4227 = vsel %vm680, %v4224, %v4226
      %v4228 = vrot.slane %v4109, 7
      %v4229 = vsel %vm680, %v4226, %v4228
      %v4230 = vrot.slane %v4110, 7
      %v4231 = vsel %vm680, %v4228, %v4230
      %v4232 = vrot.slane %v4111, 7
      %v4233 = vsel %vm680, %v4230, %v4232
      %v4234 = vrot.slane %v4112, 7
      %v4235 = vsel %vm680, %v4232, %v4234
      %v4236 = vrot.slane %v4113, 7
      %v4237 = vsel %vm680, %v4234, %v4236
      %v4242 = vsel %vm680, 0.0, %v4178
      %v4243 = vsel %vm680, 0.0, %v4193
      %v4244 = vsel %vm680, 0.0, %v4208
      %v4245 = vsel %vm680, 0.0, %v4223
      %vm4246 = vcmask 523264
      %v4248 = vsel %vm4246, %v4242, 0
      %v4250 = vsel %vm4246, %v4180, 0
      %v4252 = vsel %vm4246, %v4182, 0
      %v4254 = vsel %vm4246, %v4184, 0
      %v4256 = vsel %vm4246, %v4186, 0
      %v4258 = vsel %vm4246, %v4188, 0
      %v4260 = vsel %vm4246, %v4190, 0
      %v4262 = vsel %vm4246, %v4192, 0
      %v4265 = vsel %vm4246, %v4243, 0
      %v4267 = vsel %vm4246, %v4195, 0
      %v4269 = vsel %vm4246, %v4197, 0
      %v4271 = vsel %vm4246, %v4199, 0
      %v4273 = vsel %vm4246, %v4201, 0
      %v4275 = vsel %vm4246, %v4203, 0
      %v4277 = vsel %vm4246, %v4205, 0
      %v4279 = vsel %vm4246, %v4207, 0
      %v4282 = vsel %vm4246, %v4244, 0
      %v4284 = vsel %vm4246, %v4210, 0
      %v4286 = vsel %vm4246, %v4212, 0
      %v4288 = vsel %vm4246, %v4214, 0
      %v4290 = vsel %vm4246, %v4216, 0
      %v4292 = vsel %vm4246, %v4218, 0
      %v4294 = vsel %vm4246, %v4220, 0
      %v4296 = vsel %vm4246, %v4222, 0
      %v4299 = vsel %vm4246, %v4245, 0
      %v4301 = vsel %vm4246, %v4225, 0
      %v4303 = vsel %vm4246, %v4227, 0
      %v4305 = vsel %vm4246, %v4229, 0
      %v4307 = vsel %vm4246, %v4231, 0
      %v4309 = vsel %vm4246, %v4233, 0
      %v4311 = vsel %vm4246, %v4235, 0
      %v4313 = vsel %vm4246, %v4237, 0
      %4315 = vmatprep.subr.mxu0 0.0
      %4316 = vmatpush1.msra.mxu0 0.0
      %4317 = vmatprep.subr.mxu0 0.0
      %4318 = vmatpush1.msra.mxu0 0.0
      %4319 = vmatprep.subr.mxu0 0.0
      %4320 = vmatpush1.msra.mxu0 0.0
      %4321 = vmatprep.subr.mxu0 0.0
      %4322 = vmatpush1.msra.mxu0 0.0
      %4323 = vmatprep.subr.mxu0 0.0
      %4324 = vmatpush1.msra.mxu0 0.0
      %4325 = vmatprep.subr.mxu0 0.0
      %4326 = vmatpush1.msra.mxu0 0.0
      %4327 = vmatprep.subr.mxu0 0.0
      %4328 = vmatpush1.msra.mxu0 0.0
      %4329 = vmatprep.subr.mxu0 0.0
      %4330 = vmatpush1.msra.mxu0 0.0
      %4331 = vmatprep.subr.mxu0 0.0
      %4332 = vmatpush1.msra.mxu0 %v4121
      %4333 = vmatprep.subr.mxu0 0.0
      %4334 = vmatpush1.msra.mxu0 %v4120
      %4335 = vmatprep.subr.mxu0 0.0
      %4336 = vmatpush1.msra.mxu0 %v4119
      %4337 = vmatprep.subr.mxu0 0.0
      %4338 = vmatpush1.msra.mxu0 %v4118
      %4339 = vmatprep.subr.mxu0 0.0
      %4340 = vmatpush1.msra.mxu0 %v4117
      %4341 = vmatprep.subr.mxu0 0.0
      %4342 = vmatpush1.msra.mxu0 %v4116
      %4343 = vmatprep.subr.mxu0 0.0
      %4344 = vmatpush1.msra.mxu0 %v4115
      %4345 = vmatprep.subr.mxu0 0.0
      %4346 = vmatpush1.msra.mxu0 %v4114
      %4347 = vmatprep.subr.mxu0 0.0
      %4348 = vmatpush2.msra.mxu0 0.0
      %4349 = vmatprep.subr.mxu0 0.0
      %4350 = vmatpush2.msra.mxu0 0.0
      %4351 = vmatprep.subr.mxu0 0.0
      %4352 = vmatpush2.msra.mxu0 0.0
      %4353 = vmatprep.subr.mxu0 0.0
      %4354 = vmatpush2.msra.mxu0 0.0
      %4355 = vmatprep.subr.mxu0 0.0
      %4356 = vmatpush2.msra.mxu0 0.0
      %4357 = vmatprep.subr.mxu0 0.0
      %4358 = vmatpush2.msra.mxu0 0.0
      %4359 = vmatprep.subr.mxu0 0.0
      %4360 = vmatpush2.msra.mxu0 0.0
      %4361 = vmatprep.subr.mxu0 0.0
      %4362 = vmatpush2.msra.mxu0 0.0
      %4363 = vmatprep.subr.mxu0 0.0
      %4364 = vmatpush2.msra.mxu0 0.0
      %4365 = vmatprep.subr.mxu0 0.0
      %4366 = vmatpush2.msra.mxu0 0.0
      %4367 = vmatprep.subr.mxu0 0.0
      %4368 = vmatpush2.msra.mxu0 0.0
      %4369 = vmatprep.subr.mxu0 0.0
      %4370 = vmatpush2.msra.mxu0 0.0
      %4371 = vmatprep.subr.mxu0 0.0
      %4372 = vmatpush2.msra.mxu0 0.0
      %4373 = vmatprep.subr.mxu0 0.0
      %4374 = vmatpush2.msra.mxu0 0.0
      %4375 = vmatprep.subr.mxu0 0.0
      %4376 = vmatpush2.msra.mxu0 0.0
      %4377 = vmatprep.subr.mxu0 0.0
      %4378 = vmatpush2.msra.mxu0 0.0
      %4379 = vmatprep.mubr.f32.mxu0 0.0
      %4380 = vmatmul.mubr.f32.gmra.mxu0 %v4248
      %v4381 = vpop.f32.mrf.mxu0
      %v4382 = vadd.f32 0.0, %v4381
      %v4383 = vpop.f32.mrf.mxu0
      %4384 = vmatprep.mubr.f32.mxu0 0.0
      %4385 = vmatmul.mubr.f32.gmra.mxu0 %v4250
      %v4386 = vpop.f32.mrf.mxu0
      %v4387 = vadd.f32 0.0, %v4386
      %v4388 = vpop.f32.mrf.mxu0
      %4389 = vmatprep.mubr.f32.mxu0 0.0
      %4390 = vmatmul.mubr.f32.gmra.mxu0 %v4252
      %v4391 = vpop.f32.mrf.mxu0
      %v4392 = vadd.f32 0.0, %v4391
      %v4393 = vpop.f32.mrf.mxu0
      %4394 = vmatprep.mubr.f32.mxu0 0.0
      %4395 = vmatmul.mubr.f32.gmra.mxu0 %v4254
      %v4396 = vpop.f32.mrf.mxu0
      %v4397 = vadd.f32 0.0, %v4396
      %v4398 = vpop.f32.mrf.mxu0
      %4399 = vmatprep.mubr.f32.mxu0 0.0
      %4400 = vmatmul.mubr.f32.gmra.mxu0 %v4256
      %v4401 = vpop.f32.mrf.mxu0
      %v4402 = vadd.f32 0.0, %v4401
      %v4403 = vpop.f32.mrf.mxu0
      %4404 = vmatprep.mubr.f32.mxu0 0.0
      %4405 = vmatmul.mubr.f32.gmra.mxu0 %v4258
      %v4406 = vpop.f32.mrf.mxu0
      %v4407 = vadd.f32 0.0, %v4406
      %v4408 = vpop.f32.mrf.mxu0
      %4409 = vmatprep.mubr.f32.mxu0 0.0
      %4410 = vmatmul.mubr.f32.gmra.mxu0 %v4260
      %v4411 = vpop.f32.mrf.mxu0
      %v4412 = vadd.f32 0.0, %v4411
      %v4413 = vpop.f32.mrf.mxu0
      %4414 = vmatprep.mubr.f32.mxu0 0.0
      %4415 = vmatmul.mubr.f32.gmra.mxu0 %v4262
      %v4416 = vpop.f32.mrf.mxu0
      %v4417 = vadd.f32 0.0, %v4416
      %v4418 = vpop.f32.mrf.mxu0
      %4419 = vmatprep.mubr.f32.mxu0 0.0
      %4420 = vmatmul.mubr.f32.gmra.mxu0 %v4265
      %v4421 = vpop.f32.mrf.mxu0
      %v4422 = vadd.f32 0.0, %v4421
      %v4423 = vpop.f32.mrf.mxu0
      %4424 = vmatprep.mubr.f32.mxu0 0.0
      %4425 = vmatmul.mubr.f32.gmra.mxu0 %v4267
      %v4426 = vpop.f32.mrf.mxu0
      %v4427 = vadd.f32 0.0, %v4426
      %v4428 = vpop.f32.mrf.mxu0
      %4429 = vmatprep.mubr.f32.mxu0 0.0
      %4430 = vmatmul.mubr.f32.gmra.mxu0 %v4269
      %v4431 = vpop.f32.mrf.mxu0
      %v4432 = vadd.f32 0.0, %v4431
      %v4433 = vpop.f32.mrf.mxu0
      %4434 = vmatprep.mubr.f32.mxu0 0.0
      %4435 = vmatmul.mubr.f32.gmra.mxu0 %v4271
      %v4436 = vpop.f32.mrf.mxu0
      %v4437 = vadd.f32 0.0, %v4436
      %v4438 = vpop.f32.mrf.mxu0
      %4439 = vmatprep.mubr.f32.mxu0 0.0
      %4440 = vmatmul.mubr.f32.gmra.mxu0 %v4273
      %v4441 = vpop.f32.mrf.mxu0
      %v4442 = vadd.f32 0.0, %v4441
      %v4443 = vpop.f32.mrf.mxu0
      %4444 = vmatprep.mubr.f32.mxu0 0.0
      %4445 = vmatmul.mubr.f32.gmra.mxu0 %v4275
      %v4446 = vpop.f32.mrf.mxu0
      %v4447 = vadd.f32 0.0, %v4446
      %v4448 = vpop.f32.mrf.mxu0
      %4449 = vmatprep.mubr.f32.mxu0 0.0
      %4450 = vmatmul.mubr.f32.gmra.mxu0 %v4277
      %v4451 = vpop.f32.mrf.mxu0
      %v4452 = vadd.f32 0.0, %v4451
      %v4453 = vpop.f32.mrf.mxu0
      %4454 = vmatprep.mubr.f32.mxu0 0.0
      %4455 = vmatmul.mubr.f32.gmra.mxu0 %v4279
      %v4456 = vpop.f32.mrf.mxu0
      %v4457 = vadd.f32 0.0, %v4456
      %v4458 = vpop.f32.mrf.mxu0
      %4459 = vmatprep.mubr.f32.mxu0 0.0
      %4460 = vmatmul.mubr.f32.gmra.mxu0 %v4282
      %v4461 = vpop.f32.mrf.mxu0
      %v4462 = vadd.f32 0.0, %v4461
      %v4463 = vpop.f32.mrf.mxu0
      %4464 = vmatprep.mubr.f32.mxu0 0.0
      %4465 = vmatmul.mubr.f32.gmra.mxu0 %v4284
      %v4466 = vpop.f32.mrf.mxu0
      %v4467 = vadd.f32 0.0, %v4466
      %v4468 = vpop.f32.mrf.mxu0
      %4469 = vmatprep.mubr.f32.mxu0 0.0
      %4470 = vmatmul.mubr.f32.gmra.mxu0 %v4286
      %v4471 = vpop.f32.mrf.mxu0
      %v4472 = vadd.f32 0.0, %v4471
      %v4473 = vpop.f32.mrf.mxu0
      %4474 = vmatprep.mubr.f32.mxu0 0.0
      %4475 = vmatmul.mubr.f32.gmra.mxu0 %v4288
      %v4476 = vpop.f32.mrf.mxu0
      %v4477 = vadd.f32 0.0, %v4476
      %v4478 = vpop.f32.mrf.mxu0
      %4479 = vmatprep.mubr.f32.mxu0 0.0
      %4480 = vmatmul.mubr.f32.gmra.mxu0 %v4290
      %v4481 = vpop.f32.mrf.mxu0
      %v4482 = vadd.f32 0.0, %v4481
      %v4483 = vpop.f32.mrf.mxu0
      %4484 = vmatprep.mubr.f32.mxu0 0.0
      %4485 = vmatmul.mubr.f32.gmra.mxu0 %v4292
      %v4486 = vpop.f32.mrf.mxu0
      %v4487 = vadd.f32 0.0, %v4486
      %v4488 = vpop.f32.mrf.mxu0
      %4489 = vmatprep.mubr.f32.mxu0 0.0
      %4490 = vmatmul.mubr.f32.gmra.mxu0 %v4294
      %v4491 = vpop.f32.mrf.mxu0
      %v4492 = vadd.f32 0.0, %v4491
      %v4493 = vpop.f32.mrf.mxu0
      %4494 = vmatprep.mubr.f32.mxu0 0.0
      %4495 = vmatmul.mubr.f32.gmra.mxu0 %v4296
      %v4496 = vpop.f32.mrf.mxu0
      %v4497 = vadd.f32 0.0, %v4496
      %v4498 = vpop.f32.mrf.mxu0
      %4499 = vmatprep.mubr.f32.mxu0 0.0
      %4500 = vmatmul.mubr.f32.gmra.mxu0 %v4299
      %v4501 = vpop.f32.mrf.mxu0
      %v4502 = vadd.f32 0.0, %v4501
      %v4503 = vpop.f32.mrf.mxu0
      %4504 = vmatprep.mubr.f32.mxu0 0.0
      %4505 = vmatmul.mubr.f32.gmra.mxu0 %v4301
      %v4506 = vpop.f32.mrf.mxu0
      %v4507 = vadd.f32 0.0, %v4506
      %v4508 = vpop.f32.mrf.mxu0
      %4509 = vmatprep.mubr.f32.mxu0 0.0
      %4510 = vmatmul.mubr.f32.gmra.mxu0 %v4303
      %v4511 = vpop.f32.mrf.mxu0
      %v4512 = vadd.f32 0.0, %v4511
      %v4513 = vpop.f32.mrf.mxu0
      %4514 = vmatprep.mubr.f32.mxu0 0.0
      %4515 = vmatmul.mubr.f32.gmra.mxu0 %v4305
      %v4516 = vpop.f32.mrf.mxu0
      %v4517 = vadd.f32 0.0, %v4516
      %v4518 = vpop.f32.mrf.mxu0
      %4519 = vmatprep.mubr.f32.mxu0 0.0
      %4520 = vmatmul.mubr.f32.gmra.mxu0 %v4307
      %v4521 = vpop.f32.mrf.mxu0
      %v4522 = vadd.f32 0.0, %v4521
      %v4523 = vpop.f32.mrf.mxu0
      %4524 = vmatprep.mubr.f32.mxu0 0.0
      %4525 = vmatmul.mubr.f32.gmra.mxu0 %v4309
      %v4526 = vpop.f32.mrf.mxu0
      %v4527 = vadd.f32 0.0, %v4526
      %v4528 = vpop.f32.mrf.mxu0
      %4529 = vmatprep.mubr.f32.mxu0 0.0
      %4530 = vmatmul.mubr.f32.gmra.mxu0 %v4311
      %v4531 = vpop.f32.mrf.mxu0
      %v4532 = vadd.f32 0.0, %v4531
      %v4533 = vpop.f32.mrf.mxu0
      %4534 = vmatprep.mubr.f32.mxu0 0.0
      %4535 = vmatmul.mubr.f32.gmra.mxu0 %v4313
      %v4536 = vpop.f32.mrf.mxu0
      %v4537 = vadd.f32 0.0, %v4536
      %v4538 = vpop.f32.mrf.mxu0
      %4539 = vdwg.mxu0
      %v4540 = vadd.f32 %v4145, %v4382
      %v4541 = vadd.f32 %v4145, %v4387
      %v4542 = vadd.f32 %v4145, %v4392
      %v4543 = vadd.f32 %v4145, %v4397
      %v4544 = vadd.f32 %v4145, %v4402
      %v4545 = vadd.f32 %v4145, %v4407
      %v4546 = vadd.f32 %v4145, %v4412
      %v4547 = vadd.f32 %v4145, %v4417
      %v4548 = vadd.f32 %v4145, %v4422
      %v4549 = vadd.f32 %v4145, %v4427
      %v4550 = vadd.f32 %v4145, %v4432
      %v4551 = vadd.f32 %v4145, %v4437
      %v4552 = vadd.f32 %v4145, %v4442
      %v4553 = vadd.f32 %v4145, %v4447
      %v4554 = vadd.f32 %v4145, %v4452
      %v4555 = vadd.f32 %v4145, %v4457
      %v4556 = vadd.f32 %v4145, %v4462
      %v4557 = vadd.f32 %v4145, %v4467
      %v4558 = vadd.f32 %v4145, %v4472
      %v4559 = vadd.f32 %v4145, %v4477
      %v4560 = vadd.f32 %v4145, %v4482
      %v4561 = vadd.f32 %v4145, %v4487
      %v4562 = vadd.f32 %v4145, %v4492
      %v4563 = vadd.f32 %v4145, %v4497
      %v4564 = vadd.f32 %v4145, %v4502
      %v4565 = vadd.f32 %v4145, %v4507
      %v4566 = vadd.f32 %v4145, %v4512
      %v4567 = vadd.f32 %v4145, %v4517
      %v4568 = vadd.f32 %v4145, %v4522
      %v4569 = vadd.f32 %v4145, %v4527
      %v4570 = vadd.f32 %v4145, %v4532
      %v4571 = vadd.f32 %v4145, %v4537
      %v4572 = vsel %vm4246, %v4082, 0
      %v4574 = vsel %vm4246, %v4083, 0
      %v4576 = vsel %vm4246, %v4084, 0
      %v4578 = vsel %vm4246, %v4085, 0
      %v4580 = vsel %vm4246, %v4086, 0
      %v4582 = vsel %vm4246, %v4087, 0
      %v4584 = vsel %vm4246, %v4088, 0
      %v4586 = vsel %vm4246, %v4089, 0
      %v4588 = vsel %vm4246, %v4090, 0
      %v4590 = vsel %vm4246, %v4091, 0
      %v4592 = vsel %vm4246, %v4092, 0
      %v4594 = vsel %vm4246, %v4093, 0
      %v4596 = vsel %vm4246, %v4094, 0
      %v4598 = vsel %vm4246, %v4095, 0
      %v4600 = vsel %vm4246, %v4096, 0
      %v4602 = vsel %vm4246, %v4097, 0
      %v4604 = vsel %vm4246, %v4098, 0
      %v4606 = vsel %vm4246, %v4099, 0
      %v4608 = vsel %vm4246, %v4100, 0
      %v4610 = vsel %vm4246, %v4101, 0
      %v4612 = vsel %vm4246, %v4102, 0
      %v4614 = vsel %vm4246, %v4103, 0
      %v4616 = vsel %vm4246, %v4104, 0
      %v4618 = vsel %vm4246, %v4105, 0
      %v4620 = vsel %vm4246, %v4106, 0
      %v4622 = vsel %vm4246, %v4107, 0
      %v4624 = vsel %vm4246, %v4108, 0
      %v4626 = vsel %vm4246, %v4109, 0
      %v4628 = vsel %vm4246, %v4110, 0
      %v4630 = vsel %vm4246, %v4111, 0
      %v4632 = vsel %vm4246, %v4112, 0
      %v4634 = vsel %vm4246, %v4113, 0
      %4636 = vmatprep.subr.mxu0 0.0
      %4637 = vmatpush1.msra.mxu0 0.0
      %4638 = vmatprep.subr.mxu0 0.0
      %4639 = vmatpush1.msra.mxu0 0.0
      %4640 = vmatprep.subr.mxu0 0.0
      %4641 = vmatpush1.msra.mxu0 0.0
      %4642 = vmatprep.subr.mxu0 0.0
      %4643 = vmatpush1.msra.mxu0 0.0
      %4644 = vmatprep.subr.mxu0 0.0
      %4645 = vmatpush1.msra.mxu0 0.0
      %4646 = vmatprep.subr.mxu0 0.0
      %4647 = vmatpush1.msra.mxu0 0.0
      %4648 = vmatprep.subr.mxu0 0.0
      %4649 = vmatpush1.msra.mxu0 0.0
      %4650 = vmatprep.subr.mxu0 0.0
      %4651 = vmatpush1.msra.mxu0 0.0
      %4652 = vmatprep.subr.mxu0 0.0
      %4653 = vmatpush1.msra.mxu0 %v4129
      %4654 = vmatprep.subr.mxu0 0.0
      %4655 = vmatpush1.msra.mxu0 %v4128
      %4656 = vmatprep.subr.mxu0 0.0
      %4657 = vmatpush1.msra.mxu0 %v4127
      %4658 = vmatprep.subr.mxu0 0.0
      %4659 = vmatpush1.msra.mxu0 %v4126
      %4660 = vmatprep.subr.mxu0 0.0
      %4661 = vmatpush1.msra.mxu0 %v4125
      %4662 = vmatprep.subr.mxu0 0.0
      %4663 = vmatpush1.msra.mxu0 %v4124
      %4664 = vmatprep.subr.mxu0 0.0
      %4665 = vmatpush1.msra.mxu0 %v4123
      %4666 = vmatprep.subr.mxu0 0.0
      %4667 = vmatpush1.msra.mxu0 %v4122
      %4668 = vmatprep.subr.mxu0 0.0
      %4669 = vmatpush2.msra.mxu0 0.0
      %4670 = vmatprep.subr.mxu0 0.0
      %4671 = vmatpush2.msra.mxu0 0.0
      %4672 = vmatprep.subr.mxu0 0.0
      %4673 = vmatpush2.msra.mxu0 0.0
      %4674 = vmatprep.subr.mxu0 0.0
      %4675 = vmatpush2.msra.mxu0 0.0
      %4676 = vmatprep.subr.mxu0 0.0
      %4677 = vmatpush2.msra.mxu0 0.0
      %4678 = vmatprep.subr.mxu0 0.0
      %4679 = vmatpush2.msra.mxu0 0.0
      %4680 = vmatprep.subr.mxu0 0.0
      %4681 = vmatpush2.msra.mxu0 0.0
      %4682 = vmatprep.subr.mxu0 0.0
      %4683 = vmatpush2.msra.mxu0 0.0
      %4684 = vmatprep.subr.mxu0 0.0
      %4685 = vmatpush2.msra.mxu0 0.0
      %4686 = vmatprep.subr.mxu0 0.0
      %4687 = vmatpush2.msra.mxu0 0.0
      %4688 = vmatprep.subr.mxu0 0.0
      %4689 = vmatpush2.msra.mxu0 0.0
      %4690 = vmatprep.subr.mxu0 0.0
      %4691 = vmatpush2.msra.mxu0 0.0
      %4692 = vmatprep.subr.mxu0 0.0
      %4693 = vmatpush2.msra.mxu0 0.0
      %4694 = vmatprep.subr.mxu0 0.0
      %4695 = vmatpush2.msra.mxu0 0.0
      %4696 = vmatprep.subr.mxu0 0.0
      %4697 = vmatpush2.msra.mxu0 0.0
      %4698 = vmatprep.subr.mxu0 0.0
      %4699 = vmatpush2.msra.mxu0 0.0
      %4700 = vmatprep.mubr.f32.mxu0 0.0
      %4701 = vmatmul.mubr.f32.gmra.mxu0 %v4572
      %v4702 = vpop.f32.mrf.mxu0
      %v4703 = vadd.f32 0.0, %v4702
      %v4704 = vpop.f32.mrf.mxu0
      %4705 = vmatprep.mubr.f32.mxu0 0.0
      %4706 = vmatmul.mubr.f32.gmra.mxu0 %v4574
      %v4707 = vpop.f32.mrf.mxu0
      %v4708 = vadd.f32 0.0, %v4707
      %v4709 = vpop.f32.mrf.mxu0
      %4710 = vmatprep.mubr.f32.mxu0 0.0
      %4711 = vmatmul.mubr.f32.gmra.mxu0 %v4576
      %v4712 = vpop.f32.mrf.mxu0
      %v4713 = vadd.f32 0.0, %v4712
      %v4714 = vpop.f32.mrf.mxu0
      %4715 = vmatprep.mubr.f32.mxu0 0.0
      %4716 = vmatmul.mubr.f32.gmra.mxu0 %v4578
      %v4717 = vpop.f32.mrf.mxu0
      %v4718 = vadd.f32 0.0, %v4717
      %v4719 = vpop.f32.mrf.mxu0
      %4720 = vmatprep.mubr.f32.mxu0 0.0
      %4721 = vmatmul.mubr.f32.gmra.mxu0 %v4580
      %v4722 = vpop.f32.mrf.mxu0
      %v4723 = vadd.f32 0.0, %v4722
      %v4724 = vpop.f32.mrf.mxu0
      %4725 = vmatprep.mubr.f32.mxu0 0.0
      %4726 = vmatmul.mubr.f32.gmra.mxu0 %v4582
      %v4727 = vpop.f32.mrf.mxu0
      %v4728 = vadd.f32 0.0, %v4727
      %v4729 = vpop.f32.mrf.mxu0
      %4730 = vmatprep.mubr.f32.mxu0 0.0
      %4731 = vmatmul.mubr.f32.gmra.mxu0 %v4584
      %v4732 = vpop.f32.mrf.mxu0
      %v4733 = vadd.f32 0.0, %v4732
      %v4734 = vpop.f32.mrf.mxu0
      %4735 = vmatprep.mubr.f32.mxu0 0.0
      %4736 = vmatmul.mubr.f32.gmra.mxu0 %v4586
      %v4737 = vpop.f32.mrf.mxu0
      %v4738 = vadd.f32 0.0, %v4737
      %v4739 = vpop.f32.mrf.mxu0
      %4740 = vmatprep.mubr.f32.mxu0 0.0
      %4741 = vmatmul.mubr.f32.gmra.mxu0 %v4588
      %v4742 = vpop.f32.mrf.mxu0
      %v4743 = vadd.f32 0.0, %v4742
      %v4744 = vpop.f32.mrf.mxu0
      %4745 = vmatprep.mubr.f32.mxu0 0.0
      %4746 = vmatmul.mubr.f32.gmra.mxu0 %v4590
      %v4747 = vpop.f32.mrf.mxu0
      %v4748 = vadd.f32 0.0, %v4747
      %v4749 = vpop.f32.mrf.mxu0
      %4750 = vmatprep.mubr.f32.mxu0 0.0
      %4751 = vmatmul.mubr.f32.gmra.mxu0 %v4592
      %v4752 = vpop.f32.mrf.mxu0
      %v4753 = vadd.f32 0.0, %v4752
      %v4754 = vpop.f32.mrf.mxu0
      %4755 = vmatprep.mubr.f32.mxu0 0.0
      %4756 = vmatmul.mubr.f32.gmra.mxu0 %v4594
      %v4757 = vpop.f32.mrf.mxu0
      %v4758 = vadd.f32 0.0, %v4757
      %v4759 = vpop.f32.mrf.mxu0
      %4760 = vmatprep.mubr.f32.mxu0 0.0
      %4761 = vmatmul.mubr.f32.gmra.mxu0 %v4596
      %v4762 = vpop.f32.mrf.mxu0
      %v4763 = vadd.f32 0.0, %v4762
      %v4764 = vpop.f32.mrf.mxu0
      %4765 = vmatprep.mubr.f32.mxu0 0.0
      %4766 = vmatmul.mubr.f32.gmra.mxu0 %v4598
      %v4767 = vpop.f32.mrf.mxu0
      %v4768 = vadd.f32 0.0, %v4767
      %v4769 = vpop.f32.mrf.mxu0
      %4770 = vmatprep.mubr.f32.mxu0 0.0
      %4771 = vmatmul.mubr.f32.gmra.mxu0 %v4600
      %v4772 = vpop.f32.mrf.mxu0
      %v4773 = vadd.f32 0.0, %v4772
      %v4774 = vpop.f32.mrf.mxu0
      %4775 = vmatprep.mubr.f32.mxu0 0.0
      %4776 = vmatmul.mubr.f32.gmra.mxu0 %v4602
      %v4777 = vpop.f32.mrf.mxu0
      %v4778 = vadd.f32 0.0, %v4777
      %v4779 = vpop.f32.mrf.mxu0
      %4780 = vmatprep.mubr.f32.mxu0 0.0
      %4781 = vmatmul.mubr.f32.gmra.mxu0 %v4604
      %v4782 = vpop.f32.mrf.mxu0
      %v4783 = vadd.f32 0.0, %v4782
      %v4784 = vpop.f32.mrf.mxu0
      %4785 = vmatprep.mubr.f32.mxu0 0.0
      %4786 = vmatmul.mubr.f32.gmra.mxu0 %v4606
      %v4787 = vpop.f32.mrf.mxu0
      %v4788 = vadd.f32 0.0, %v4787
      %v4789 = vpop.f32.mrf.mxu0
      %4790 = vmatprep.mubr.f32.mxu0 0.0
      %4791 = vmatmul.mubr.f32.gmra.mxu0 %v4608
      %v4792 = vpop.f32.mrf.mxu0
      %v4793 = vadd.f32 0.0, %v4792
      %v4794 = vpop.f32.mrf.mxu0
      %4795 = vmatprep.mubr.f32.mxu0 0.0
      %4796 = vmatmul.mubr.f32.gmra.mxu0 %v4610
      %v4797 = vpop.f32.mrf.mxu0
      %v4798 = vadd.f32 0.0, %v4797
      %v4799 = vpop.f32.mrf.mxu0
      %4800 = vmatprep.mubr.f32.mxu0 0.0
      %4801 = vmatmul.mubr.f32.gmra.mxu0 %v4612
      %v4802 = vpop.f32.mrf.mxu0
      %v4803 = vadd.f32 0.0, %v4802
      %v4804 = vpop.f32.mrf.mxu0
      %4805 = vmatprep.mubr.f32.mxu0 0.0
      %4806 = vmatmul.mubr.f32.gmra.mxu0 %v4614
      %v4807 = vpop.f32.mrf.mxu0
      %v4808 = vadd.f32 0.0, %v4807
      %v4809 = vpop.f32.mrf.mxu0
      %4810 = vmatprep.mubr.f32.mxu0 0.0
      %4811 = vmatmul.mubr.f32.gmra.mxu0 %v4616
      %v4812 = vpop.f32.mrf.mxu0
      %v4813 = vadd.f32 0.0, %v4812
      %v4814 = vpop.f32.mrf.mxu0
      %4815 = vmatprep.mubr.f32.mxu0 0.0
      %4816 = vmatmul.mubr.f32.gmra.mxu0 %v4618
      %v4817 = vpop.f32.mrf.mxu0
      %v4818 = vadd.f32 0.0, %v4817
      %v4819 = vpop.f32.mrf.mxu0
      %4820 = vmatprep.mubr.f32.mxu0 0.0
      %4821 = vmatmul.mubr.f32.gmra.mxu0 %v4620
      %v4822 = vpop.f32.mrf.mxu0
      %v4823 = vadd.f32 0.0, %v4822
      %v4824 = vpop.f32.mrf.mxu0
      %4825 = vmatprep.mubr.f32.mxu0 0.0
      %4826 = vmatmul.mubr.f32.gmra.mxu0 %v4622
      %v4827 = vpop.f32.mrf.mxu0
      %v4828 = vadd.f32 0.0, %v4827
      %v4829 = vpop.f32.mrf.mxu0
      %4830 = vmatprep.mubr.f32.mxu0 0.0
      %4831 = vmatmul.mubr.f32.gmra.mxu0 %v4624
      %v4832 = vpop.f32.mrf.mxu0
      %v4833 = vadd.f32 0.0, %v4832
      %v4834 = vpop.f32.mrf.mxu0
      %4835 = vmatprep.mubr.f32.mxu0 0.0
      %4836 = vmatmul.mubr.f32.gmra.mxu0 %v4626
      %v4837 = vpop.f32.mrf.mxu0
      %v4838 = vadd.f32 0.0, %v4837
      %v4839 = vpop.f32.mrf.mxu0
      %4840 = vmatprep.mubr.f32.mxu0 0.0
      %4841 = vmatmul.mubr.f32.gmra.mxu0 %v4628
      %v4842 = vpop.f32.mrf.mxu0
      %v4843 = vadd.f32 0.0, %v4842
      %v4844 = vpop.f32.mrf.mxu0
      %4845 = vmatprep.mubr.f32.mxu0 0.0
      %4846 = vmatmul.mubr.f32.gmra.mxu0 %v4630
      %v4847 = vpop.f32.mrf.mxu0
      %v4848 = vadd.f32 0.0, %v4847
      %v4849 = vpop.f32.mrf.mxu0
      %4850 = vmatprep.mubr.f32.mxu0 0.0
      %4851 = vmatmul.mubr.f32.gmra.mxu0 %v4632
      %v4852 = vpop.f32.mrf.mxu0
      %v4853 = vadd.f32 0.0, %v4852
      %v4854 = vpop.f32.mrf.mxu0
      %4855 = vmatprep.mubr.f32.mxu0 0.0
      %4856 = vmatmul.mubr.f32.gmra.mxu0 %v4634
      %v4857 = vpop.f32.mrf.mxu0
      %v4858 = vadd.f32 0.0, %v4857
      %v4859 = vpop.f32.mrf.mxu0
      %4860 = vdwg.mxu0
      %v4861 = vadd.f32 %v4540, %v4703
      %v4862 = vadd.f32 %v4541, %v4708
      %v4863 = vadd.f32 %v4542, %v4713
      %v4864 = vadd.f32 %v4543, %v4718
      %v4865 = vadd.f32 %v4544, %v4723
      %v4866 = vadd.f32 %v4545, %v4728
      %v4867 = vadd.f32 %v4546, %v4733
      %v4868 = vadd.f32 %v4547, %v4738
      %v4869 = vadd.f32 %v4548, %v4743
      %v4870 = vadd.f32 %v4549, %v4748
      %v4871 = vadd.f32 %v4550, %v4753
      %v4872 = vadd.f32 %v4551, %v4758
      %v4873 = vadd.f32 %v4552, %v4763
      %v4874 = vadd.f32 %v4553, %v4768
      %v4875 = vadd.f32 %v4554, %v4773
      %v4876 = vadd.f32 %v4555, %v4778
      %v4877 = vadd.f32 %v4556, %v4783
      %v4878 = vadd.f32 %v4557, %v4788
      %v4879 = vadd.f32 %v4558, %v4793
      %v4880 = vadd.f32 %v4559, %v4798
      %v4881 = vadd.f32 %v4560, %v4803
      %v4882 = vadd.f32 %v4561, %v4808
      %v4883 = vadd.f32 %v4562, %v4813
      %v4884 = vadd.f32 %v4563, %v4818
      %v4885 = vadd.f32 %v4564, %v4823
      %v4886 = vadd.f32 %v4565, %v4828
      %v4887 = vadd.f32 %v4566, %v4833
      %v4888 = vadd.f32 %v4567, %v4838
      %v4889 = vadd.f32 %v4568, %v4843
      %v4890 = vadd.f32 %v4569, %v4848
      %v4891 = vadd.f32 %v4570, %v4853
      %v4892 = vadd.f32 %v4571, %v4858
      %v4893 = vrot.slane %v4082, 1
      %v4894 = vrot.slane %v4083, 1
      %v4895 = vsel %vm1281, %v4893, %v4894
      %v4896 = vrot.slane %v4084, 1
      %v4897 = vsel %vm1281, %v4894, %v4896
      %v4898 = vrot.slane %v4085, 1
      %v4899 = vsel %vm1281, %v4896, %v4898
      %v4900 = vrot.slane %v4086, 1
      %v4901 = vsel %vm1281, %v4898, %v4900
      %v4902 = vrot.slane %v4087, 1
      %v4903 = vsel %vm1281, %v4900, %v4902
      %v4904 = vrot.slane %v4088, 1
      %v4905 = vsel %vm1281, %v4902, %v4904
      %v4906 = vrot.slane %v4089, 1
      %v4907 = vsel %vm1281, %v4904, %v4906
      %v4908 = vrot.slane %v4090, 1
      %v4909 = vrot.slane %v4091, 1
      %v4910 = vsel %vm1281, %v4908, %v4909
      %v4911 = vrot.slane %v4092, 1
      %v4912 = vsel %vm1281, %v4909, %v4911
      %v4913 = vrot.slane %v4093, 1
      %v4914 = vsel %vm1281, %v4911, %v4913
      %v4915 = vrot.slane %v4094, 1
      %v4916 = vsel %vm1281, %v4913, %v4915
      %v4917 = vrot.slane %v4095, 1
      %v4918 = vsel %vm1281, %v4915, %v4917
      %v4919 = vrot.slane %v4096, 1
      %v4920 = vsel %vm1281, %v4917, %v4919
      %v4921 = vrot.slane %v4097, 1
      %v4922 = vsel %vm1281, %v4919, %v4921
      %v4923 = vrot.slane %v4098, 1
      %v4924 = vrot.slane %v4099, 1
      %v4925 = vsel %vm1281, %v4923, %v4924
      %v4926 = vrot.slane %v4100, 1
      %v4927 = vsel %vm1281, %v4924, %v4926
      %v4928 = vrot.slane %v4101, 1
      %v4929 = vsel %vm1281, %v4926, %v4928
      %v4930 = vrot.slane %v4102, 1
      %v4931 = vsel %vm1281, %v4928, %v4930
      %v4932 = vrot.slane %v4103, 1
      %v4933 = vsel %vm1281, %v4930, %v4932
      %v4934 = vrot.slane %v4104, 1
      %v4935 = vsel %vm1281, %v4932, %v4934
      %v4936 = vrot.slane %v4105, 1
      %v4937 = vsel %vm1281, %v4934, %v4936
      %v4938 = vrot.slane %v4106, 1
      %v4939 = vrot.slane %v4107, 1
      %v4940 = vsel %vm1281, %v4938, %v4939
      %v4941 = vrot.slane %v4108, 1
      %v4942 = vsel %vm1281, %v4939, %v4941
      %v4943 = vrot.slane %v4109, 1
      %v4944 = vsel %vm1281, %v4941, %v4943
      %v4945 = vrot.slane %v4110, 1
      %v4946 = vsel %vm1281, %v4943, %v4945
      %v4947 = vrot.slane %v4111, 1
      %v4948 = vsel %vm1281, %v4945, %v4947
      %v4949 = vrot.slane %v4112, 1
      %v4950 = vsel %vm1281, %v4947, %v4949
      %v4951 = vrot.slane %v4113, 1
      %v4952 = vsel %vm1281, %v4949, %v4951
      %v4957 = vsel %vm1281, %v4906, 0.0
      %v4958 = vsel %vm1281, %v4921, 0.0
      %v4959 = vsel %vm1281, %v4936, 0.0
      %v4960 = vsel %vm1281, %v4951, 0.0
      %v4961 = vsel %vm4246, %v4895, 0
      %v4963 = vsel %vm4246, %v4897, 0
      %v4965 = vsel %vm4246, %v4899, 0
      %v4967 = vsel %vm4246, %v4901, 0
      %v4969 = vsel %vm4246, %v4903, 0
      %v4971 = vsel %vm4246, %v4905, 0
      %v4973 = vsel %vm4246, %v4907, 0
      %v4976 = vsel %vm4246, %v4957, 0
      %v4978 = vsel %vm4246, %v4910, 0
      %v4980 = vsel %vm4246, %v4912, 0
      %v4982 = vsel %vm4246, %v4914, 0
      %v4984 = vsel %vm4246, %v4916, 0
      %v4986 = vsel %vm4246, %v4918, 0
      %v4988 = vsel %vm4246, %v4920, 0
      %v4990 = vsel %vm4246, %v4922, 0
      %v4993 = vsel %vm4246, %v4958, 0
      %v4995 = vsel %vm4246, %v4925, 0
      %v4997 = vsel %vm4246, %v4927, 0
      %v4999 = vsel %vm4246, %v4929, 0
      %v5001 = vsel %vm4246, %v4931, 0
      %v5003 = vsel %vm4246, %v4933, 0
      %v5005 = vsel %vm4246, %v4935, 0
      %v5007 = vsel %vm4246, %v4937, 0
      %v5010 = vsel %vm4246, %v4959, 0
      %v5012 = vsel %vm4246, %v4940, 0
      %v5014 = vsel %vm4246, %v4942, 0
      %v5016 = vsel %vm4246, %v4944, 0
      %v5018 = vsel %vm4246, %v4946, 0
      %v5020 = vsel %vm4246, %v4948, 0
      %v5022 = vsel %vm4246, %v4950, 0
      %v5024 = vsel %vm4246, %v4952, 0
      %v5027 = vsel %vm4246, %v4960, 0
      %5029 = vmatprep.subr.mxu0 0.0
      %5030 = vmatpush1.msra.mxu0 0.0
      %5031 = vmatprep.subr.mxu0 0.0
      %5032 = vmatpush1.msra.mxu0 0.0
      %5033 = vmatprep.subr.mxu0 0.0
      %5034 = vmatpush1.msra.mxu0 0.0
      %5035 = vmatprep.subr.mxu0 0.0
      %5036 = vmatpush1.msra.mxu0 0.0
      %5037 = vmatprep.subr.mxu0 0.0
      %5038 = vmatpush1.msra.mxu0 0.0
      %5039 = vmatprep.subr.mxu0 0.0
      %5040 = vmatpush1.msra.mxu0 0.0
      %5041 = vmatprep.subr.mxu0 0.0
      %5042 = vmatpush1.msra.mxu0 0.0
      %5043 = vmatprep.subr.mxu0 0.0
      %5044 = vmatpush1.msra.mxu0 0.0
      %5045 = vmatprep.subr.mxu0 0.0
      %5046 = vmatpush1.msra.mxu0 %v4137
      %5047 = vmatprep.subr.mxu0 0.0
      %5048 = vmatpush1.msra.mxu0 %v4136
      %5049 = vmatprep.subr.mxu0 0.0
      %5050 = vmatpush1.msra.mxu0 %v4135
      %5051 = vmatprep.subr.mxu0 0.0
      %5052 = vmatpush1.msra.mxu0 %v4134
      %5053 = vmatprep.subr.mxu0 0.0
      %5054 = vmatpush1.msra.mxu0 %v4133
      %5055 = vmatprep.subr.mxu0 0.0
      %5056 = vmatpush1.msra.mxu0 %v4132
      %5057 = vmatprep.subr.mxu0 0.0
      %5058 = vmatpush1.msra.mxu0 %v4131
      %5059 = vmatprep.subr.mxu0 0.0
      %5060 = vmatpush1.msra.mxu0 %v4130
      %5061 = vmatprep.subr.mxu0 0.0
      %5062 = vmatpush2.msra.mxu0 0.0
      %5063 = vmatprep.subr.mxu0 0.0
      %5064 = vmatpush2.msra.mxu0 0.0
      %5065 = vmatprep.subr.mxu0 0.0
      %5066 = vmatpush2.msra.mxu0 0.0
      %5067 = vmatprep.subr.mxu0 0.0
      %5068 = vmatpush2.msra.mxu0 0.0
      %5069 = vmatprep.subr.mxu0 0.0
      %5070 = vmatpush2.msra.mxu0 0.0
      %5071 = vmatprep.subr.mxu0 0.0
      %5072 = vmatpush2.msra.mxu0 0.0
      %5073 = vmatprep.subr.mxu0 0.0
      %5074 = vmatpush2.msra.mxu0 0.0
      %5075 = vmatprep.subr.mxu0 0.0
      %5076 = vmatpush2.msra.mxu0 0.0
      %5077 = vmatprep.subr.mxu0 0.0
      %5078 = vmatpush2.msra.mxu0 0.0
      %5079 = vmatprep.subr.mxu0 0.0
      %5080 = vmatpush2.msra.mxu0 0.0
      %5081 = vmatprep.subr.mxu0 0.0
      %5082 = vmatpush2.msra.mxu0 0.0
      %5083 = vmatprep.subr.mxu0 0.0
      %5084 = vmatpush2.msra.mxu0 0.0
      %5085 = vmatprep.subr.mxu0 0.0
      %5086 = vmatpush2.msra.mxu0 0.0
      %5087 = vmatprep.subr.mxu0 0.0
      %5088 = vmatpush2.msra.mxu0 0.0
      %5089 = vmatprep.subr.mxu0 0.0
      %5090 = vmatpush2.msra.mxu0 0.0
      %5091 = vmatprep.subr.mxu0 0.0
      %5092 = vmatpush2.msra.mxu0 0.0
      %5093 = vmatprep.mubr.f32.mxu0 0.0
      %5094 = vmatmul.mubr.f32.gmra.mxu0 %v4961
      %v5095 = vpop.f32.mrf.mxu0
      %v5096 = vadd.f32 0.0, %v5095
      %v5097 = vpop.f32.mrf.mxu0
      %5098 = vmatprep.mubr.f32.mxu0 0.0
      %5099 = vmatmul.mubr.f32.gmra.mxu0 %v4963
      %v5100 = vpop.f32.mrf.mxu0
      %v5101 = vadd.f32 0.0, %v5100
      %v5102 = vpop.f32.mrf.mxu0
      %5103 = vmatprep.mubr.f32.mxu0 0.0
      %5104 = vmatmul.mubr.f32.gmra.mxu0 %v4965
      %v5105 = vpop.f32.mrf.mxu0
      %v5106 = vadd.f32 0.0, %v5105
      %v5107 = vpop.f32.mrf.mxu0
      %5108 = vmatprep.mubr.f32.mxu0 0.0
      %5109 = vmatmul.mubr.f32.gmra.mxu0 %v4967
      %v5110 = vpop.f32.mrf.mxu0
      %v5111 = vadd.f32 0.0, %v5110
      %v5112 = vpop.f32.mrf.mxu0
      %5113 = vmatprep.mubr.f32.mxu0 0.0
      %5114 = vmatmul.mubr.f32.gmra.mxu0 %v4969
      %v5115 = vpop.f32.mrf.mxu0
      %v5116 = vadd.f32 0.0, %v5115
      %v5117 = vpop.f32.mrf.mxu0
      %5118 = vmatprep.mubr.f32.mxu0 0.0
      %5119 = vmatmul.mubr.f32.gmra.mxu0 %v4971
      %v5120 = vpop.f32.mrf.mxu0
      %v5121 = vadd.f32 0.0, %v5120
      %v5122 = vpop.f32.mrf.mxu0
      %5123 = vmatprep.mubr.f32.mxu0 0.0
      %5124 = vmatmul.mubr.f32.gmra.mxu0 %v4973
      %v5125 = vpop.f32.mrf.mxu0
      %v5126 = vadd.f32 0.0, %v5125
      %v5127 = vpop.f32.mrf.mxu0
      %5128 = vmatprep.mubr.f32.mxu0 0.0
      %5129 = vmatmul.mubr.f32.gmra.mxu0 %v4976
      %v5130 = vpop.f32.mrf.mxu0
      %v5131 = vadd.f32 0.0, %v5130
      %v5132 = vpop.f32.mrf.mxu0
      %5133 = vmatprep.mubr.f32.mxu0 0.0
      %5134 = vmatmul.mubr.f32.gmra.mxu0 %v4978
      %v5135 = vpop.f32.mrf.mxu0
      %v5136 = vadd.f32 0.0, %v5135
      %v5137 = vpop.f32.mrf.mxu0
      %5138 = vmatprep.mubr.f32.mxu0 0.0
      %5139 = vmatmul.mubr.f32.gmra.mxu0 %v4980
      %v5140 = vpop.f32.mrf.mxu0
      %v5141 = vadd.f32 0.0, %v5140
      %v5142 = vpop.f32.mrf.mxu0
      %5143 = vmatprep.mubr.f32.mxu0 0.0
      %5144 = vmatmul.mubr.f32.gmra.mxu0 %v4982
      %v5145 = vpop.f32.mrf.mxu0
      %v5146 = vadd.f32 0.0, %v5145
      %v5147 = vpop.f32.mrf.mxu0
      %5148 = vmatprep.mubr.f32.mxu0 0.0
      %5149 = vmatmul.mubr.f32.gmra.mxu0 %v4984
      %v5150 = vpop.f32.mrf.mxu0
      %v5151 = vadd.f32 0.0, %v5150
      %v5152 = vpop.f32.mrf.mxu0
      %5153 = vmatprep.mubr.f32.mxu0 0.0
      %5154 = vmatmul.mubr.f32.gmra.mxu0 %v4986
      %v5155 = vpop.f32.mrf.mxu0
      %v5156 = vadd.f32 0.0, %v5155
      %v5157 = vpop.f32.mrf.mxu0
      %5158 = vmatprep.mubr.f32.mxu0 0.0
      %5159 = vmatmul.mubr.f32.gmra.mxu0 %v4988
      %v5160 = vpop.f32.mrf.mxu0
      %v5161 = vadd.f32 0.0, %v5160
      %v5162 = vpop.f32.mrf.mxu0
      %5163 = vmatprep.mubr.f32.mxu0 0.0
      %5164 = vmatmul.mubr.f32.gmra.mxu0 %v4990
      %v5165 = vpop.f32.mrf.mxu0
      %v5166 = vadd.f32 0.0, %v5165
      %v5167 = vpop.f32.mrf.mxu0
      %5168 = vmatprep.mubr.f32.mxu0 0.0
      %5169 = vmatmul.mubr.f32.gmra.mxu0 %v4993
      %v5170 = vpop.f32.mrf.mxu0
      %v5171 = vadd.f32 0.0, %v5170
      %v5172 = vpop.f32.mrf.mxu0
      %5173 = vmatprep.mubr.f32.mxu0 0.0
      %5174 = vmatmul.mubr.f32.gmra.mxu0 %v4995
      %v5175 = vpop.f32.mrf.mxu0
      %v5176 = vadd.f32 0.0, %v5175
      %v5177 = vpop.f32.mrf.mxu0
      %5178 = vmatprep.mubr.f32.mxu0 0.0
      %5179 = vmatmul.mubr.f32.gmra.mxu0 %v4997
      %v5180 = vpop.f32.mrf.mxu0
      %v5181 = vadd.f32 0.0, %v5180
      %v5182 = vpop.f32.mrf.mxu0
      %5183 = vmatprep.mubr.f32.mxu0 0.0
      %5184 = vmatmul.mubr.f32.gmra.mxu0 %v4999
      %v5185 = vpop.f32.mrf.mxu0
      %v5186 = vadd.f32 0.0, %v5185
      %v5187 = vpop.f32.mrf.mxu0
      %5188 = vmatprep.mubr.f32.mxu0 0.0
      %5189 = vmatmul.mubr.f32.gmra.mxu0 %v5001
      %v5190 = vpop.f32.mrf.mxu0
      %v5191 = vadd.f32 0.0, %v5190
      %v5192 = vpop.f32.mrf.mxu0
      %5193 = vmatprep.mubr.f32.mxu0 0.0
      %5194 = vmatmul.mubr.f32.gmra.mxu0 %v5003
      %v5195 = vpop.f32.mrf.mxu0
      %v5196 = vadd.f32 0.0, %v5195
      %v5197 = vpop.f32.mrf.mxu0
      %5198 = vmatprep.mubr.f32.mxu0 0.0
      %5199 = vmatmul.mubr.f32.gmra.mxu0 %v5005
      %v5200 = vpop.f32.mrf.mxu0
      %v5201 = vadd.f32 0.0, %v5200
      %v5202 = vpop.f32.mrf.mxu0
      %5203 = vmatprep.mubr.f32.mxu0 0.0
      %5204 = vmatmul.mubr.f32.gmra.mxu0 %v5007
      %v5205 = vpop.f32.mrf.mxu0
      %v5206 = vadd.f32 0.0, %v5205
      %v5207 = vpop.f32.mrf.mxu0
      %5208 = vmatprep.mubr.f32.mxu0 0.0
      %5209 = vmatmul.mubr.f32.gmra.mxu0 %v5010
      %v5210 = vpop.f32.mrf.mxu0
      %v5211 = vadd.f32 0.0, %v5210
      %v5212 = vpop.f32.mrf.mxu0
      %5213 = vmatprep.mubr.f32.mxu0 0.0
      %5214 = vmatmul.mubr.f32.gmra.mxu0 %v5012
      %v5215 = vpop.f32.mrf.mxu0
      %v5216 = vadd.f32 0.0, %v5215
      %v5217 = vpop.f32.mrf.mxu0
      %5218 = vmatprep.mubr.f32.mxu0 0.0
      %5219 = vmatmul.mubr.f32.gmra.mxu0 %v5014
      %v5220 = vpop.f32.mrf.mxu0
      %v5221 = vadd.f32 0.0, %v5220
      %v5222 = vpop.f32.mrf.mxu0
      %5223 = vmatprep.mubr.f32.mxu0 0.0
      %5224 = vmatmul.mubr.f32.gmra.mxu0 %v5016
      %v5225 = vpop.f32.mrf.mxu0
      %v5226 = vadd.f32 0.0, %v5225
      %v5227 = vpop.f32.mrf.mxu0
      %5228 = vmatprep.mubr.f32.mxu0 0.0
      %5229 = vmatmul.mubr.f32.gmra.mxu0 %v5018
      %v5230 = vpop.f32.mrf.mxu0
      %v5231 = vadd.f32 0.0, %v5230
      %v5232 = vpop.f32.mrf.mxu0
      %5233 = vmatprep.mubr.f32.mxu0 0.0
      %5234 = vmatmul.mubr.f32.gmra.mxu0 %v5020
      %v5235 = vpop.f32.mrf.mxu0
      %v5236 = vadd.f32 0.0, %v5235
      %v5237 = vpop.f32.mrf.mxu0
      %5238 = vmatprep.mubr.f32.mxu0 0.0
      %5239 = vmatmul.mubr.f32.gmra.mxu0 %v5022
      %v5240 = vpop.f32.mrf.mxu0
      %v5241 = vadd.f32 0.0, %v5240
      %v5242 = vpop.f32.mrf.mxu0
      %5243 = vmatprep.mubr.f32.mxu0 0.0
      %5244 = vmatmul.mubr.f32.gmra.mxu0 %v5024
      %v5245 = vpop.f32.mrf.mxu0
      %v5246 = vadd.f32 0.0, %v5245
      %v5247 = vpop.f32.mrf.mxu0
      %5248 = vmatprep.mubr.f32.mxu0 0.0
      %5249 = vmatmul.mubr.f32.gmra.mxu0 %v5027
      %v5250 = vpop.f32.mrf.mxu0
      %v5251 = vadd.f32 0.0, %v5250
      %v5252 = vpop.f32.mrf.mxu0
      %5253 = vdwg.mxu0
      %v5254 = vadd.f32 %v4861, %v5096
      %v5255 = vadd.f32 %v4862, %v5101
      %v5256 = vadd.f32 %v4863, %v5106
      %v5257 = vadd.f32 %v4864, %v5111
      %v5258 = vadd.f32 %v4865, %v5116
      %v5259 = vadd.f32 %v4866, %v5121
      %v5260 = vadd.f32 %v4867, %v5126
      %v5261 = vadd.f32 %v4868, %v5131
      %v5262 = vadd.f32 %v4869, %v5136
      %v5263 = vadd.f32 %v4870, %v5141
      %v5264 = vadd.f32 %v4871, %v5146
      %v5265 = vadd.f32 %v4872, %v5151
      %v5266 = vadd.f32 %v4873, %v5156
      %v5267 = vadd.f32 %v4874, %v5161
      %v5268 = vadd.f32 %v4875, %v5166
      %v5269 = vadd.f32 %v4876, %v5171
      %v5270 = vadd.f32 %v4877, %v5176
      %v5271 = vadd.f32 %v4878, %v5181
      %v5272 = vadd.f32 %v4879, %v5186
      %v5273 = vadd.f32 %v4880, %v5191
      %v5274 = vadd.f32 %v4881, %v5196
      %v5275 = vadd.f32 %v4882, %v5201
      %v5276 = vadd.f32 %v4883, %v5206
      %v5277 = vadd.f32 %v4884, %v5211
      %v5278 = vadd.f32 %v4885, %v5216
      %v5279 = vadd.f32 %v4886, %v5221
      %v5280 = vadd.f32 %v4887, %v5226
      %v5281 = vadd.f32 %v4888, %v5231
      %v5282 = vadd.f32 %v4889, %v5236
      %v5283 = vadd.f32 %v4890, %v5241
      %v5284 = vadd.f32 %v4891, %v5246
      %v5285 = vadd.f32 %v4892, %v5251
      %v5286 = vmul.f32 %v5254, %v5254
      %v5287 = vmul.f32 %v5255, %v5255
      %v5288 = vmul.f32 %v5256, %v5256
      %v5289 = vmul.f32 %v5257, %v5257
      %v5290 = vmul.f32 %v5258, %v5258
      %v5291 = vmul.f32 %v5259, %v5259
      %v5292 = vmul.f32 %v5260, %v5260
      %v5293 = vmul.f32 %v5261, %v5261
      %v5294 = vmul.f32 %v5262, %v5262
      %v5295 = vmul.f32 %v5263, %v5263
      %v5296 = vmul.f32 %v5264, %v5264
      %v5297 = vmul.f32 %v5265, %v5265
      %v5298 = vmul.f32 %v5266, %v5266
      %v5299 = vmul.f32 %v5267, %v5267
      %v5300 = vmul.f32 %v5268, %v5268
      %v5301 = vmul.f32 %v5269, %v5269
      %v5302 = vmul.f32 %v5270, %v5270
      %v5303 = vmul.f32 %v5271, %v5271
      %v5304 = vmul.f32 %v5272, %v5272
      %v5305 = vmul.f32 %v5273, %v5273
      %v5306 = vmul.f32 %v5274, %v5274
      %v5307 = vmul.f32 %v5275, %v5275
      %v5308 = vmul.f32 %v5276, %v5276
      %v5309 = vmul.f32 %v5277, %v5277
      %v5310 = vmul.f32 %v5278, %v5278
      %v5311 = vmul.f32 %v5279, %v5279
      %v5312 = vmul.f32 %v5280, %v5280
      %v5313 = vmul.f32 %v5281, %v5281
      %v5314 = vmul.f32 %v5282, %v5282
      %v5315 = vmul.f32 %v5283, %v5283
      %v5316 = vmul.f32 %v5284, %v5284
      %v5317 = vmul.f32 %v5285, %v5285
      %vm5318 = vcmask 15360
      %v5319 = vsel %vm5318, %v5286, 0.0
      %5320 = vadd.xlane.f32.xlu0 %v5319
      %v5321 = vpop.xlane.xlu0 %5320
      %v5322 = vsel %vm5318, %v5287, 0.0
      %5323 = vadd.xlane.f32.xlu0 %v5322
      %v5324 = vpop.xlane.xlu0 %5323
      %v5325 = vsel %vm5318, %v5288, 0.0
      %5326 = vadd.xlane.f32.xlu0 %v5325
      %v5327 = vpop.xlane.xlu0 %5326
      %v5328 = vsel %vm5318, %v5289, 0.0
      %5329 = vadd.xlane.f32.xlu0 %v5328
      %v5330 = vpop.xlane.xlu0 %5329
      %v5331 = vsel %vm5318, %v5290, 0.0
      %5332 = vadd.xlane.f32.xlu0 %v5331
      %v5333 = vpop.xlane.xlu0 %5332
      %v5334 = vsel %vm5318, %v5291, 0.0
      %5335 = vadd.xlane.f32.xlu0 %v5334
      %v5336 = vpop.xlane.xlu0 %5335
      %v5337 = vsel %vm5318, %v5292, 0.0
      %5338 = vadd.xlane.f32.xlu0 %v5337
      %v5339 = vpop.xlane.xlu0 %5338
      %v5340 = vsel %vm5318, %v5293, 0.0
      %5341 = vadd.xlane.f32.xlu0 %v5340
      %v5342 = vpop.xlane.xlu0 %5341
      %v5343 = vsel %vm5318, %v5294, 0.0
      %5344 = vadd.xlane.f32.xlu0 %v5343
      %v5345 = vpop.xlane.xlu0 %5344
      %v5346 = vsel %vm5318, %v5295, 0.0
      %5347 = vadd.xlane.f32.xlu0 %v5346
      %v5348 = vpop.xlane.xlu0 %5347
      %v5349 = vsel %vm5318, %v5296, 0.0
      %5350 = vadd.xlane.f32.xlu0 %v5349
      %v5351 = vpop.xlane.xlu0 %5350
      %v5352 = vsel %vm5318, %v5297, 0.0
      %5353 = vadd.xlane.f32.xlu0 %v5352
      %v5354 = vpop.xlane.xlu0 %5353
      %v5355 = vsel %vm5318, %v5298, 0.0
      %5356 = vadd.xlane.f32.xlu0 %v5355
      %v5357 = vpop.xlane.xlu0 %5356
      %v5358 = vsel %vm5318, %v5299, 0.0
      %5359 = vadd.xlane.f32.xlu0 %v5358
      %v5360 = vpop.xlane.xlu0 %5359
      %v5361 = vsel %vm5318, %v5300, 0.0
      %5362 = vadd.xlane.f32.xlu0 %v5361
      %v5363 = vpop.xlane.xlu0 %5362
      %v5364 = vsel %vm5318, %v5301, 0.0
      %5365 = vadd.xlane.f32.xlu0 %v5364
      %v5366 = vpop.xlane.xlu0 %5365
      %v5367 = vsel %vm5318, %v5302, 0.0
      %5368 = vadd.xlane.f32.xlu0 %v5367
      %v5369 = vpop.xlane.xlu0 %5368
      %v5370 = vsel %vm5318, %v5303, 0.0
      %5371 = vadd.xlane.f32.xlu0 %v5370
      %v5372 = vpop.xlane.xlu0 %5371
      %v5373 = vsel %vm5318, %v5304, 0.0
      %5374 = vadd.xlane.f32.xlu0 %v5373
      %v5375 = vpop.xlane.xlu0 %5374
      %v5376 = vsel %vm5318, %v5305, 0.0
      %5377 = vadd.xlane.f32.xlu0 %v5376
      %v5378 = vpop.xlane.xlu0 %5377
      %v5379 = vsel %vm5318, %v5306, 0.0
      %5380 = vadd.xlane.f32.xlu0 %v5379
      %v5381 = vpop.xlane.xlu0 %5380
      %v5382 = vsel %vm5318, %v5307, 0.0
      %5383 = vadd.xlane.f32.xlu0 %v5382
      %v5384 = vpop.xlane.xlu0 %5383
      %v5385 = vsel %vm5318, %v5308, 0.0
      %5386 = vadd.xlane.f32.xlu0 %v5385
      %v5387 = vpop.xlane.xlu0 %5386
      %v5388 = vsel %vm5318, %v5309, 0.0
      %5389 = vadd.xlane.f32.xlu0 %v5388
      %v5390 = vpop.xlane.xlu0 %5389
      %v5391 = vsel %vm5318, %v5310, 0.0
      %5392 = vadd.xlane.f32.xlu0 %v5391
      %v5393 = vpop.xlane.xlu0 %5392
      %v5394 = vsel %vm5318, %v5311, 0.0
      %5395 = vadd.xlane.f32.xlu0 %v5394
      %v5396 = vpop.xlane.xlu0 %5395
      %v5397 = vsel %vm5318, %v5312, 0.0
      %5398 = vadd.xlane.f32.xlu0 %v5397
      %v5399 = vpop.xlane.xlu0 %5398
      %v5400 = vsel %vm5318, %v5313, 0.0
      %5401 = vadd.xlane.f32.xlu0 %v5400
      %v5402 = vpop.xlane.xlu0 %5401
      %v5403 = vsel %vm5318, %v5314, 0.0
      %5404 = vadd.xlane.f32.xlu0 %v5403
      %v5405 = vpop.xlane.xlu0 %5404
      %v5406 = vsel %vm5318, %v5315, 0.0
      %5407 = vadd.xlane.f32.xlu0 %v5406
      %v5408 = vpop.xlane.xlu0 %5407
      %v5409 = vsel %vm5318, %v5316, 0.0
      %5410 = vadd.xlane.f32.xlu0 %v5409
      %v5411 = vpop.xlane.xlu0 %5410
      %v5412 = vsel %vm5318, %v5317, 0.0
      %5413 = vadd.xlane.f32.xlu0 %v5412
      %v5414 = vpop.xlane.xlu0 %5413
      %v5415 = vmax.f32 %v5321, 1e-24
      %v5416 = vmax.f32 %v5324, 1e-24
      %v5417 = vmax.f32 %v5327, 1e-24
      %v5418 = vmax.f32 %v5330, 1e-24
      %v5419 = vmax.f32 %v5333, 1e-24
      %v5420 = vmax.f32 %v5336, 1e-24
      %v5421 = vmax.f32 %v5339, 1e-24
      %v5422 = vmax.f32 %v5342, 1e-24
      %v5423 = vmax.f32 %v5345, 1e-24
      %v5424 = vmax.f32 %v5348, 1e-24
      %v5425 = vmax.f32 %v5351, 1e-24
      %v5426 = vmax.f32 %v5354, 1e-24
      %v5427 = vmax.f32 %v5357, 1e-24
      %v5428 = vmax.f32 %v5360, 1e-24
      %v5429 = vmax.f32 %v5363, 1e-24
      %v5430 = vmax.f32 %v5366, 1e-24
      %v5431 = vmax.f32 %v5369, 1e-24
      %v5432 = vmax.f32 %v5372, 1e-24
      %v5433 = vmax.f32 %v5375, 1e-24
      %v5434 = vmax.f32 %v5378, 1e-24
      %v5435 = vmax.f32 %v5381, 1e-24
      %v5436 = vmax.f32 %v5384, 1e-24
      %v5437 = vmax.f32 %v5387, 1e-24
      %v5438 = vmax.f32 %v5390, 1e-24
      %v5439 = vmax.f32 %v5393, 1e-24
      %v5440 = vmax.f32 %v5396, 1e-24
      %v5441 = vmax.f32 %v5399, 1e-24
      %v5442 = vmax.f32 %v5402, 1e-24
      %v5443 = vmax.f32 %v5405, 1e-24
      %v5444 = vmax.f32 %v5408, 1e-24
      %v5445 = vmax.f32 %v5411, 1e-24
      %v5446 = vmax.f32 %v5414, 1e-24
      %v5447 = vrsqrt.pop %v5415
      %v5448 = vrsqrt.pop %v5416
      %v5449 = vrsqrt.pop %v5417
      %v5450 = vrsqrt.pop %v5418
      %v5451 = vrsqrt.pop %v5419
      %v5452 = vrsqrt.pop %v5420
      %v5453 = vrsqrt.pop %v5421
      %v5454 = vrsqrt.pop %v5422
      %v5455 = vrsqrt.pop %v5423
      %v5456 = vrsqrt.pop %v5424
      %v5457 = vrsqrt.pop %v5425
      %v5458 = vrsqrt.pop %v5426
      %v5459 = vrsqrt.pop %v5427
      %v5460 = vrsqrt.pop %v5428
      %v5461 = vrsqrt.pop %v5429
      %v5462 = vrsqrt.pop %v5430
      %v5463 = vrsqrt.pop %v5431
      %v5464 = vrsqrt.pop %v5432
      %v5465 = vrsqrt.pop %v5433
      %v5466 = vrsqrt.pop %v5434
      %v5467 = vrsqrt.pop %v5435
      %v5468 = vrsqrt.pop %v5436
      %v5469 = vrsqrt.pop %v5437
      %v5470 = vrsqrt.pop %v5438
      %v5471 = vrsqrt.pop %v5439
      %v5472 = vrsqrt.pop %v5440
      %v5473 = vrsqrt.pop %v5441
      %v5474 = vrsqrt.pop %v5442
      %v5475 = vrsqrt.pop %v5443
      %v5476 = vrsqrt.pop %v5444
      %v5477 = vrsqrt.pop %v5445
      %v5478 = vrsqrt.pop %v5446
      %v5479 = vmul.f32 %v5447, 5.656854
      %v5480 = vmul.f32 %v5448, 5.656854
      %v5481 = vmul.f32 %v5449, 5.656854
      %v5482 = vmul.f32 %v5450, 5.656854
      %v5483 = vmul.f32 %v5451, 5.656854
      %v5484 = vmul.f32 %v5452, 5.656854
      %v5485 = vmul.f32 %v5453, 5.656854
      %v5486 = vmul.f32 %v5454, 5.656854
      %v5487 = vmul.f32 %v5455, 5.656854
      %v5488 = vmul.f32 %v5456, 5.656854
      %v5489 = vmul.f32 %v5457, 5.656854
      %v5490 = vmul.f32 %v5458, 5.656854
      %v5491 = vmul.f32 %v5459, 5.656854
      %v5492 = vmul.f32 %v5460, 5.656854
      %v5493 = vmul.f32 %v5461, 5.656854
      %v5494 = vmul.f32 %v5462, 5.656854
      %v5495 = vmul.f32 %v5463, 5.656854
      %v5496 = vmul.f32 %v5464, 5.656854
      %v5497 = vmul.f32 %v5465, 5.656854
      %v5498 = vmul.f32 %v5466, 5.656854
      %v5499 = vmul.f32 %v5467, 5.656854
      %v5500 = vmul.f32 %v5468, 5.656854
      %v5501 = vmul.f32 %v5469, 5.656854
      %v5502 = vmul.f32 %v5470, 5.656854
      %v5503 = vmul.f32 %v5471, 5.656854
      %v5504 = vmul.f32 %v5472, 5.656854
      %v5505 = vmul.f32 %v5473, 5.656854
      %v5506 = vmul.f32 %v5474, 5.656854
      %v5507 = vmul.f32 %v5475, 5.656854
      %v5508 = vmul.f32 %v5476, 5.656854
      %v5509 = vmul.f32 %v5477, 5.656854
      %v5510 = vmul.f32 %v5478, 5.656854
      %v5511 = vmul.f32 %v5479, %v5254
      %v5512 = vmul.f32 %v5480, %v5255
      %v5513 = vmul.f32 %v5481, %v5256
      %v5514 = vmul.f32 %v5482, %v5257
      %v5515 = vmul.f32 %v5483, %v5258
      %v5516 = vmul.f32 %v5484, %v5259
      %v5517 = vmul.f32 %v5485, %v5260
      %v5518 = vmul.f32 %v5486, %v5261
      %v5519 = vmul.f32 %v5487, %v5262
      %v5520 = vmul.f32 %v5488, %v5263
      %v5521 = vmul.f32 %v5489, %v5264
      %v5522 = vmul.f32 %v5490, %v5265
      %v5523 = vmul.f32 %v5491, %v5266
      %v5524 = vmul.f32 %v5492, %v5267
      %v5525 = vmul.f32 %v5493, %v5268
      %v5526 = vmul.f32 %v5494, %v5269
      %v5527 = vmul.f32 %v5495, %v5270
      %v5528 = vmul.f32 %v5496, %v5271
      %v5529 = vmul.f32 %v5497, %v5272
      %v5530 = vmul.f32 %v5498, %v5273
      %v5531 = vmul.f32 %v5499, %v5274
      %v5532 = vmul.f32 %v5500, %v5275
      %v5533 = vmul.f32 %v5501, %v5276
      %v5534 = vmul.f32 %v5502, %v5277
      %v5535 = vmul.f32 %v5503, %v5278
      %v5536 = vmul.f32 %v5504, %v5279
      %v5537 = vmul.f32 %v5505, %v5280
      %v5538 = vmul.f32 %v5506, %v5281
      %v5539 = vmul.f32 %v5507, %v5282
      %v5540 = vmul.f32 %v5508, %v5283
      %v5541 = vmul.f32 %v5509, %v5284
      %v5542 = vmul.f32 %v5510, %v5285
      %5543 = vst.msk [vmem:[%s339] sm:$0xff] %vm5318, %v5511
      %5544 = vst.msk [vmem:[%s339 + $0x8] sm:$0xff] %vm5318, %v5512
      %5545 = vst.msk [vmem:[%s339 + $0x10] sm:$0xff] %vm5318, %v5513
      %5546 = vst.msk [vmem:[%s339 + $0x18] sm:$0xff] %vm5318, %v5514
      %5547 = vst.msk [vmem:[%s339 + $0x20] sm:$0xff] %vm5318, %v5515
      %5548 = vst.msk [vmem:[%s339 + $0x28] sm:$0xff] %vm5318, %v5516
      %5549 = vst.msk [vmem:[%s339 + $0x30] sm:$0xff] %vm5318, %v5517
      %5550 = vst.msk [vmem:[%s339 + $0x38] sm:$0xff] %vm5318, %v5518
      %5551 = vst.msk [vmem:[%s339 + $0x40] sm:$0xff] %vm5318, %v5519
      %5552 = vst.msk [vmem:[%s339 + $0x48] sm:$0xff] %vm5318, %v5520
      %5553 = vst.msk [vmem:[%s339 + $0x50] sm:$0xff] %vm5318, %v5521
      %5554 = vst.msk [vmem:[%s339 + $0x58] sm:$0xff] %vm5318, %v5522
      %5555 = vst.msk [vmem:[%s339 + $0x60] sm:$0xff] %vm5318, %v5523
      %5556 = vst.msk [vmem:[%s339 + $0x68] sm:$0xff] %vm5318, %v5524
      %5557 = vst.msk [vmem:[%s339 + $0x70] sm:$0xff] %vm5318, %v5525
      %5558 = vst.msk [vmem:[%s339 + $0x78] sm:$0xff] %vm5318, %v5526
      %5559 = vst.msk [vmem:[%s339 + $0x80] sm:$0xff] %vm5318, %v5527
      %5560 = vst.msk [vmem:[%s339 + $0x88] sm:$0xff] %vm5318, %v5528
      %5561 = vst.msk [vmem:[%s339 + $0x90] sm:$0xff] %vm5318, %v5529
      %5562 = vst.msk [vmem:[%s339 + $0x98] sm:$0xff] %vm5318, %v5530
      %5563 = vst.msk [vmem:[%s339 + $0xa0] sm:$0xff] %vm5318, %v5531
      %5564 = vst.msk [vmem:[%s339 + $0xa8] sm:$0xff] %vm5318, %v5532
      %5565 = vst.msk [vmem:[%s339 + $0xb0] sm:$0xff] %vm5318, %v5533
      %5566 = vst.msk [vmem:[%s339 + $0xb8] sm:$0xff] %vm5318, %v5534
      %5567 = vst.msk [vmem:[%s339 + $0xc0] sm:$0xff] %vm5318, %v5535
      %5568 = vst.msk [vmem:[%s339 + $0xc8] sm:$0xff] %vm5318, %v5536
      %5569 = vst.msk [vmem:[%s339 + $0xd0] sm:$0xff] %vm5318, %v5537
      %5570 = vst.msk [vmem:[%s339 + $0xd8] sm:$0xff] %vm5318, %v5538
      %5571 = vst.msk [vmem:[%s339 + $0xe0] sm:$0xff] %vm5318, %v5539
      %5572 = vst.msk [vmem:[%s339 + $0xe8] sm:$0xff] %vm5318, %v5540
      %5573 = vst.msk [vmem:[%s339 + $0xf0] sm:$0xff] %vm5318, %v5541
      %5574 = vst.msk [vmem:[%s339 + $0xf8] sm:$0xff] %vm5318, %v5542
      %s5575 = smul.u32 4, %s20
      %p5576 = scmp.lt.s32.totalorder %s5575, 7
      %s5577 = scalar_select %p5576, %s5575, 7
      %s5578 = smul.addr %s5577, 8
      %s5579 = smul.addr %s5578, 8
      %s5580 = scalar_lea.vmem %s9, %s5579
      // Predicated region
      $region57: #{tpu_custom_call.1} parent=55 // pred_check
        %p5581 = pneg %p232
      $region58: #{tpu_custom_call.1} parent=55 // pred_check_branch
        %5583 = sbr.rel (%p5581) target = $region60
      $region59: #{tpu_custom_call.1} parent=55 // pred_region
        %s5584 = smul.u32 4, %s20
      $region60: #{tpu_custom_call.1} parent=55 // pred_fallthru
        _
    $region56: #{tpu_custom_call.1} parent=5 // pred_fallthru
      _
    %p5585 = scmp.le.s32.totalorder 2, %s15
    // Predicated region
    $region61: #{tpu_custom_call.1} parent=5 // pred_check
      %p5586 = pneg %p5585
    $region62: #{tpu_custom_call.1} parent=5 // pred_check_branch
      %5588 = sbr.rel (%p5586) target = $region64
    $region63: #{tpu_custom_call.1} parent=5 // pred_region
      %s5589 = ssub.s32 %s15, 2
      // Predicated region
      $region65: #{tpu_custom_call.1} parent=63 // pred_check
        %p5590 = pneg %p238
      $region66: #{tpu_custom_call.1} parent=63 // pred_check_branch
        %5592 = sbr.rel (%p5590) target = $region68
      $region67: #{tpu_custom_call.1} parent=63 // pred_region
        %s5593 = smul.u32 4, %s21
        %p5594 = scmp.lt.s32.totalorder %s5593, 7
        %s5595 = scalar_select %p5594, %s5593, 7
        %s5596 = smul.addr %s5595, 8
        %s5597 = smul.addr %s5596, 8
        %s5598 = scalar_lea.vmem %s9, %s5597
      $region68: #{tpu_custom_call.1} parent=63 // pred_fallthru
        _
    $region64: #{tpu_custom_call.1} parent=5 // pred_fallthru
      _
  $region6: #{tpu_custom_call.1} parent=0 // loop_footer
    %s19 = sadd.s32 1, %s15
  $region7: #{tpu_custom_call.1} parent=0 // loop_footer_branch
    %14 = sbr.rel target = $region3
  $region8: #{tpu_custom_call.1} parent=0 // loop_exit
    _

</llo_original>
